<compile_context>
chip_gen: v5e
topology: v5e:2x2
jax: 0.10.0
libtpu: 0.0.40
codegen_flags: <defaults>
</compile_context>

<pallas_src>
import math

import jax
import jax.numpy as jnp
from jax.experimental import pallas as pl
from jax.experimental.pallas import tpu as pltpu

# ----------------------------- configuration --------------------------------
B = 2                # batch
T = 16               # sequence length
C = 32               # hidden_channels
F = 64               # filter_channels
H = 2                # n_heads
DK = C // H          # k_channels per head
N_LAYERS = 2
WINDOW = 4           # window_size for relative attention
R = 2 * WINDOW + 1   # number of relative offsets in the window
KERNEL_SIZE = 1      # FFN conv kernel size (pointwise)
EPS = 1e-5           # LayerNorm eps
NEG = -1e4           # additive mask value (matches masked_fill(-1e4))

assert KERNEL_SIZE == 1  # TODO(synk): kernel_size > 1 FFN convs not implemented
# NOTE: p_dropout = 0.0 -> all Dropout layers are identity.


# ------------------------------- kernel -------------------------------------
def _layer_norm(h, gamma, beta):
    mu = jnp.mean(h, axis=-1, keepdims=True)
    var = jnp.mean(jnp.square(h - mu), axis=-1, keepdims=True)
    return (h - mu) * jax.lax.rsqrt(var + EPS) * gamma + beta


def encoder_kernel(x_ref, mcol_ref, bias_ref, sel_ref, dflat_ref, dflatT_ref,
                   wq_ref, bq_ref, wk_ref, bk_ref, wv_ref, bv_ref,
                   wo_ref, bo_ref, ekw_ref, evt_ref,
                   g1_ref, be1_ref, w1_ref, bf1_ref, w2_ref, bf2_ref,
                   g2_ref, be2_ref,
                   o_ref):
    # One grid step == one batch element (parallel across TCs on v7x).
    x = x_ref[...]                      # (T, C)
    mcol = mcol_ref[...]                # (T, 1) per-row validity

    x = x * mcol
    for l in range(N_LAYERS):           # static layer loop (unrolled)
        # ---- multi-head self attention with relative positions ----
        attn = jnp.zeros((T, C), jnp.float32)      # running accumulator (no list+sum)
        for h in range(H):               # static head loop; weights pre-split per head
            lh = l * H + h
            q = jnp.dot(x, wq_ref[lh], preferred_element_type=jnp.float32) + bq_ref[lh]
            k = jnp.dot(x, wk_ref[lh], preferred_element_type=jnp.float32) + bk_ref[lh]
            v = jnp.dot(x, wv_ref[lh], preferred_element_type=jnp.float32) + bv_ref[lh]
            # content logits (1/sqrt(DK) already folded into wq/bq)
            s = jax.lax.dot_general(q, k, (((1,), (1,)), ((), ())),
                                    preferred_element_type=jnp.float32)        # (T, T)
            # relative-key logits entirely on the MXU:
            #   rl_all[i, i'*R+r] = q[i] . emb_k[r];  masking with Sel keeps only
            #   the i'==i block; Dflat scatters offset r of row i onto column i+r-W.
            rl_all = jnp.dot(q, ekw_ref[l], preferred_element_type=jnp.float32)  # (T, T*R)
            s = s + jnp.dot(rl_all * sel_ref[...], dflat_ref[...],
                            preferred_element_type=jnp.float32)
            # additive mask bias (0 where attendable, -1e4 where masked).
            # Fully-padded query rows get a uniform softmax but are zeroed by
            # mcol at the output, matching the reference.
            s = s + bias_ref[...]
            e = jnp.exp(s - jnp.max(s, axis=-1, keepdims=True))
            p = e * pl.reciprocal(jnp.sum(e, axis=-1, keepdims=True), approx=True)
            # relative-value term on the MXU:
            #   p_all[i, i'*R+r] = sum_j p[i,j] D_r[i',j]; Sel keeps i'==i,
            #   EV_tall contracts the windowed weights with the compact emb_v.
            p_all = jnp.dot(p, dflatT_ref[...], preferred_element_type=jnp.float32)  # (T, T*R)
            out_h = (jnp.dot(p, v, preferred_element_type=jnp.float32)
                     + jnp.dot(p_all * sel_ref[...], evt_ref[l],
                               preferred_element_type=jnp.float32))             # (T, DK)
            attn = attn + jnp.dot(out_h, wo_ref[lh],
                                  preferred_element_type=jnp.float32)
        attn = attn + bo_ref[l]
        x = _layer_norm(x + attn, g1_ref[l], be1_ref[l])

        # ---- FFN (pointwise convs, relu, masked) ----
        y = x * mcol
        y = jnp.dot(y, w1_ref[l], preferred_element_type=jnp.float32) + bf1_ref[l]
        y = jnp.maximum(y, 0.0) * mcol
        y = jnp.dot(y, w2_ref[l], preferred_element_type=jnp.float32) + bf2_ref[l]
        y = y * mcol
        x = _layer_norm(x + y, g2_ref[l], be2_ref[l])

    o_ref[...] = x * mcol


# ------------------------------- wrapper -------------------------------------
def encoder_forward(x_nct, x_mask, params):
    """x_nct: (B, C, T) float32, x_mask: (B, 1, T) float32 -> (B, C, T)."""
    scale = 1.0 / math.sqrt(DK)

    # activations / masks (all layout plumbing done XLA-side)
    x_btc = jnp.transpose(x_nct, (0, 2, 1)).astype(jnp.float32)        # (B, T, C)
    mcol = jnp.transpose(x_mask, (0, 2, 1)).astype(jnp.float32)        # (B, T, 1)
    amask = mcol * x_mask.astype(jnp.float32)                          # (B, T, T)
    bias = jnp.where(amask > 0.0, 0.0, NEG).astype(jnp.float32)        # additive mask

    # relative-position selector / scatter matrices (shared by layers/heads/batch)
    rel = jnp.arange(T)[None, :] - jnp.arange(T)[:, None]              # j - i
    d_stack = jnp.stack(
        [(rel == (r - WINDOW)).astype(jnp.float32) for r in range(R)], axis=1)  # (T, R, T)
    dflat = d_stack.reshape(T * R, T)                                  # [(i*R+r), j]
    dflatT = jnp.transpose(dflat)                                      # (T, T*R)
    sel = jnp.repeat(jnp.eye(T, dtype=jnp.float32), R, axis=1)         # (T, T*R)

    # per-head projection weights (head split + 1/sqrt(DK) folded in; XLA-side, free)
    def split_out(w):    # (L, C, H*DK) -> (L*H, C, DK)
        return jnp.transpose(w.reshape(N_LAYERS, C, H, DK),
                             (0, 2, 1, 3)).reshape(N_LAYERS * H, C, DK)

    def split_out_b(b):  # (L, 1, H*DK) -> (L*H, 1, DK)
        return jnp.transpose(b.reshape(N_LAYERS, 1, H, DK),
                             (0, 2, 1, 3)).reshape(N_LAYERS * H, 1, DK)

    wq = split_out(params["wqT"]) * scale
    bq = split_out_b(params["bq"]) * scale
    wk = split_out(params["wkT"])
    bk = split_out_b(params["bk"])
    wv = split_out(params["wvT"])
    bv = split_out_b(params["bv"])
    wo = params["woT"].reshape(N_LAYERS, H, DK, C).reshape(N_LAYERS * H, DK, C)
    bo = params["bo"]                                                  # (L, 1, C)

    # tiled compact relative embeddings for the masked-matmul scatter/gather
    ekT = jnp.transpose(params["emb_k"], (0, 2, 1))                    # (L, DK, R)
    ekwide = jnp.tile(ekT, (1, 1, T))                                  # (L, DK, T*R)
    evtall = jnp.tile(params["emb_v"], (1, T, 1))                      # (L, T*R, DK)

    args = [x_btc, mcol, bias, sel, dflat, dflatT,
            wq, bq, wk, bk, wv, bv, wo, bo, ekwide, evtall,
            params["g1"], params["be1"], params["w1T"], params["bf1"],
            params["w2T"], params["bf2"], params["g2"], params["be2"]]

    def batched_spec(shape):            # (B, ...) arrays: one batch block per step
        rest = tuple(int(s) for s in shape[1:])
        return pl.BlockSpec((None,) + rest,
                            lambda b, _n=len(rest): (b,) + (0,) * _n)

    def full_spec(shape):               # weights / constants: whole array, VMEM-resident
        shp = tuple(int(s) for s in shape)
        return pl.BlockSpec(shp, lambda b, _n=len(shp): (0,) * _n)

    in_specs = ([batched_spec(x_btc.shape), batched_spec(mcol.shape),
                 batched_spec(bias.shape)]
                + [full_spec(a.shape) for a in args[3:]])

    out_btc = pl.pallas_call(
        encoder_kernel,
        out_shape=jax.ShapeDtypeStruct((B, T, C), jnp.float32),
        grid_spec=pltpu.PrefetchScalarGridSpec(
            num_scalar_prefetch=0,
            grid=(B,),                  # independent per-batch blocks -> both TCs on v7x
            in_specs=in_specs,
            out_specs=pl.BlockSpec((None, T, C), lambda b: (b, 0, 0)),
        ),
        compiler_params=pltpu.CompilerParams(
            dimension_semantics=("parallel",)),
    )(*args)
    return jnp.transpose(out_btc, (0, 2, 1))                           # back to (B, C, T)


# --------------------------- parameter setup ---------------------------------
def init_params(key):
    ks = jax.random.split(key, 14)

    def w(k, fan_in, fan_out):  # pointwise Conv1d weight, stored pre-transposed (in, out)
        return jax.random.normal(k, (N_LAYERS, fan_in, fan_out), jnp.float32) / math.sqrt(fan_in)

    def b(k, dim):
        return 0.01 * jax.random.normal(k, (N_LAYERS, 1, dim), jnp.float32)

    rel_std = DK ** -0.5
    return {
        "wqT": w(ks[0], C, C), "wkT": w(ks[1], C, C), "wvT": w(ks[2], C, C),
        "woT": w(ks[3], C, C),
        "bq": b(ks[4], C), "bk": b(ks[5], C), "bv": b(ks[6], C), "bo": b(ks[7], C),
        "w1T": w(ks[8], C, F), "bf1": b(ks[9], F),
        "w2T": w(ks[10], F, C), "bf2": b(ks[11], C),
        "g1": jnp.ones((N_LAYERS, 1, C), jnp.float32),
        "be1": jnp.zeros((N_LAYERS, 1, C), jnp.float32),
        "g2": jnp.ones((N_LAYERS, 1, C), jnp.float32),
        "be2": jnp.zeros((N_LAYERS, 1, C), jnp.float32),
        # compact relative-position embeddings (shared across heads), window +/-W
        "emb_k": rel_std * jax.random.normal(ks[12], (N_LAYERS, R, DK), jnp.float32),
        "emb_v": rel_std * jax.random.normal(ks[13], (N_LAYERS, R, DK), jnp.float32),
    }


# --------------------------- pure-JAX reference -------------------------------
def _expand_rel(emb):
    """emb: (L, 2W+1, DK) -> (L, T, T, DK) with [l, i, j] = emb[j - i] (0 if |j-i|>W)."""
    rel = jnp.arange(T)[None, :] - jnp.arange(T)[:, None]          # j - i
    idx = jnp.clip(rel + WINDOW, 0, 2 * WINDOW)
    valid = (jnp.abs(rel) <= WINDOW)[None, :, :, None]
    return jnp.where(valid, emb[:, idx, :], 0.0)


def _ln_ref(h, gamma, beta):
    mu = jnp.mean(h, axis=-1, keepdims=True)
    var = jnp.mean(jnp.square(h - mu), axis=-1, keepdims=True)
    return (h - mu) * jax.lax.rsqrt(var + EPS) * gamma + beta


def encoder_ref(x_nct, x_mask, params):
    ek_full = _expand_rel(params["emb_k"])                                   # (L, T, T, DK)
    evt_full = jnp.transpose(_expand_rel(params["emb_v"]), (0, 1, 3, 2))     # (L, T, DK, T)
    x = jnp.transpose(x_nct, (0, 2, 1))          # (B, T, C)
    mcol = jnp.transpose(x_mask, (0, 2, 1))      # (B, T, 1)
    attn_mask = mcol * x_mask                    # (B, T, T)
    scale = 1.0 / math.sqrt(DK)
    x = x * mcol
    for l in range(N_LAYERS):
        q = x @ params["wqT"][l] + params["bq"][l]
        k = x @ params["wkT"][l] + params["bk"][l]
        v = x @ params["wvT"][l] + params["bv"][l]
        qh = q.reshape(B, T, H, DK).transpose(0, 2, 1, 3) * scale
        kh = k.reshape(B, T, H, DK).transpose(0, 2, 1, 3)
        vh = v.reshape(B, T, H, DK).transpose(0, 2, 1, 3)
        scores = jnp.einsum("bhid,bhjd->bhij", qh, kh)
        scores = scores + jnp.einsum("bhid,ijd->bhij", qh, ek_full[l])
        scores = jnp.where(attn_mask[:, None] > 0.0, scores, -1e4)
        p = jax.nn.softmax(scores, axis=-1)
        out = jnp.einsum("bhij,bhjd->bhid", p, vh)
        out = out + jnp.einsum("bhij,idj->bhid", p, evt_full[l])
        out = out.transpose(0, 2, 1, 3).reshape(B, T, C)
        attn = out @ params["woT"][l] + params["bo"][l]
        x = _ln_ref(x + attn, params["g1"][l], params["be1"][l])
        y = x * mcol
        y = jnp.maximum(y @ params["w1T"][l] + params["bf1"][l], 0.0)
        y = (y * mcol) @ params["w2T"][l] + params["bf2"][l]
        y = y * mcol
        x = _ln_ref(x + y, params["g2"][l], params["be2"][l])
    return jnp.transpose(x * mcol, (0, 2, 1))


# --------------------------------- main ---------------------------------------
if __name__ == "__main__":
    key = jax.random.PRNGKey(0)
    kx, kp = jax.random.split(key, 2)
    params = init_params(kp)

    x = jax.random.normal(kx, (B, C, T), jnp.float32)                 # PyTorch NCT layout
    lengths = jnp.array([T, T - 4])
    x_mask = (jnp.arange(T)[None, :] < lengths[:, None]
              ).astype(jnp.float32)[:, None, :]                       # (B, 1, T)

    out = encoder_forward(x, x_mask, params)
    out = jax.block_until_ready(out)
    assert out.shape == (B, C, T)

    ref = encoder_ref(x, x_mask, params)
    if not bool(jnp.allclose(out, ref, rtol=2e-2, atol=2e-2)):
        raise AssertionError(
            f"kernel/reference mismatch, max abs err = {float(jnp.max(jnp.abs(out - ref)))}")
    print("KERNEL_OK")
</pallas_src>

<mosaic_0001>
module attributes {stable_mosaic.version = 11 : i64} {
  func.func @encoder_kernel(%arg0: i32, %arg1: memref<1x16x32xf32, #tpu.memory_space<vmem>>, %arg2: memref<1x16x1xf32, #tpu.memory_space<vmem>>, %arg3: memref<1x16x16xf32, #tpu.memory_space<vmem>>, %arg4: memref<16x144xf32, #tpu.memory_space<vmem>>, %arg5: memref<144x16xf32, #tpu.memory_space<vmem>>, %arg6: memref<16x144xf32, #tpu.memory_space<vmem>>, %arg7: memref<4x32x16xf32, #tpu.memory_space<vmem>>, %arg8: memref<4x1x16xf32, #tpu.memory_space<vmem>>, %arg9: memref<4x32x16xf32, #tpu.memory_space<vmem>>, %arg10: memref<4x1x16xf32, #tpu.memory_space<vmem>>, %arg11: memref<4x32x16xf32, #tpu.memory_space<vmem>>, %arg12: memref<4x1x16xf32, #tpu.memory_space<vmem>>, %arg13: memref<4x16x32xf32, #tpu.memory_space<vmem>>, %arg14: memref<2x1x32xf32, #tpu.memory_space<vmem>>, %arg15: memref<2x16x144xf32, #tpu.memory_space<vmem>>, %arg16: memref<2x144x16xf32, #tpu.memory_space<vmem>>, %arg17: memref<2x1x32xf32, #tpu.memory_space<vmem>>, %arg18: memref<2x1x32xf32, #tpu.memory_space<vmem>>, %arg19: memref<2x32x64xf32, #tpu.memory_space<vmem>>, %arg20: memref<2x1x64xf32, #tpu.memory_space<vmem>>, %arg21: memref<2x64x32xf32, #tpu.memory_space<vmem>>, %arg22: memref<2x1x32xf32, #tpu.memory_space<vmem>>, %arg23: memref<2x1x32xf32, #tpu.memory_space<vmem>>, %arg24: memref<2x1x32xf32, #tpu.memory_space<vmem>>, %arg25: memref<1x16x32xf32, #tpu.memory_space<vmem>>) attributes {dimension_semantics = [#tpu.dimension_semantics<parallel>], iteration_bounds = array<i64: 2>, scalar_prefetch = 0 : i64, scratch_operands = 0 : i64, tpu.core_type = #tpu.core_type<tc>, window_params = [{transform_indices = @transform_0, window_bounds = array<i64: 1, 16, 32>}, {transform_indices = @transform_1, window_bounds = array<i64: 1, 16, 1>}, {transform_indices = @transform_2, window_bounds = array<i64: 1, 16, 16>}, {pipeline_mode = #tpu.pipeline_mode<synchronous>, transform_indices = @transform_3, window_bounds = array<i64: 16, 144>}, {pipeline_mode = #tpu.pipeline_mode<synchronous>, transform_indices = @transform_4, window_bounds = array<i64: 144, 16>}, {pipeline_mode = #tpu.pipeline_mode<synchronous>, transform_indices = @transform_5, window_bounds = array<i64: 16, 144>}, {pipeline_mode = #tpu.pipeline_mode<synchronous>, transform_indices = @transform_6, window_bounds = array<i64: 4, 32, 16>}, {pipeline_mode = #tpu.pipeline_mode<synchronous>, transform_indices = @transform_7, window_bounds = array<i64: 4, 1, 16>}, {pipeline_mode = #tpu.pipeline_mode<synchronous>, transform_indices = @transform_8, window_bounds = array<i64: 4, 32, 16>}, {pipeline_mode = #tpu.pipeline_mode<synchronous>, transform_indices = @transform_9, window_bounds = array<i64: 4, 1, 16>}, {pipeline_mode = #tpu.pipeline_mode<synchronous>, transform_indices = @transform_10, window_bounds = array<i64: 4, 32, 16>}, {pipeline_mode = #tpu.pipeline_mode<synchronous>, transform_indices = @transform_11, window_bounds = array<i64: 4, 1, 16>}, {pipeline_mode = #tpu.pipeline_mode<synchronous>, transform_indices = @transform_12, window_bounds = array<i64: 4, 16, 32>}, {pipeline_mode = #tpu.pipeline_mode<synchronous>, transform_indices = @transform_13, window_bounds = array<i64: 2, 1, 32>}, {pipeline_mode = #tpu.pipeline_mode<synchronous>, transform_indices = @transform_14, window_bounds = array<i64: 2, 16, 144>}, {pipeline_mode = #tpu.pipeline_mode<synchronous>, transform_indices = @transform_15, window_bounds = array<i64: 2, 144, 16>}, {pipeline_mode = #tpu.pipeline_mode<synchronous>, transform_indices = @transform_16, window_bounds = array<i64: 2, 1, 32>}, {pipeline_mode = #tpu.pipeline_mode<synchronous>, transform_indices = @transform_17, window_bounds = array<i64: 2, 1, 32>}, {pipeline_mode = #tpu.pipeline_mode<synchronous>, transform_indices = @transform_18, window_bounds = array<i64: 2, 32, 64>}, {pipeline_mode = #tpu.pipeline_mode<synchronous>, transform_indices = @transform_19, window_bounds = array<i64: 2, 1, 64>}, {pipeline_mode = #tpu.pipeline_mode<synchronous>, transform_indices = @transform_20, window_bounds = array<i64: 2, 64, 32>}, {pipeline_mode = #tpu.pipeline_mode<synchronous>, transform_indices = @transform_21, window_bounds = array<i64: 2, 1, 32>}, {pipeline_mode = #tpu.pipeline_mode<synchronous>, transform_indices = @transform_22, window_bounds = array<i64: 2, 1, 32>}, {pipeline_mode = #tpu.pipeline_mode<synchronous>, transform_indices = @transform_23, window_bounds = array<i64: 2, 1, 32>}, {transform_indices = @transform_24, window_bounds = array<i64: 1, 16, 32>}]} {
    %c0 = arith.constant 0 : index
    %c0_0 = arith.constant 0 : index
    %c0_1 = arith.constant 0 : index
    %0 = vector.load %arg1[%c0, %c0_0, %c0_1] : memref<1x16x32xf32, #tpu.memory_space<vmem>>, vector<1x16x32xf32>
    %1 = vector.shape_cast %0 : vector<1x16x32xf32> to vector<16x32xf32>
    %c0_2 = arith.constant 0 : index
    %c0_3 = arith.constant 0 : index
    %c0_4 = arith.constant 0 : index
    %2 = vector.load %arg2[%c0_2, %c0_3, %c0_4] : memref<1x16x1xf32, #tpu.memory_space<vmem>>, vector<1x16x1xf32>
    %3 = vector.shape_cast %2 : vector<1x16x1xf32> to vector<16x1xf32>
    %4 = vector.broadcast %3 : vector<16x1xf32> to vector<16x32xf32>
    %5 = arith.mulf %1, %4 : vector<16x32xf32>
    %cst = arith.constant 0.000000e+00 : f32
    %6 = vector.broadcast %cst : f32 to vector<16x32xf32>
    %c0_5 = arith.constant 0 : index
    %c0_6 = arith.constant 0 : index
    %c0_7 = arith.constant 0 : index
    %7 = vector.load %arg7[%c0_5, %c0_6, %c0_7] : memref<4x32x16xf32, #tpu.memory_space<vmem>>, vector<1x32x16xf32>
    %8 = vector.shape_cast %7 : vector<1x32x16xf32> to vector<32x16xf32>
    %cst_8 = arith.constant dense<0.000000e+00> : vector<16x16xf32>
    %9 = tpu.matmul %5, %8, %cst_8 {dimension_numbers = #tpu.dot_dimension_numbers<[1], [0], [0], [1], [0, 0, 1, 1], [], []>} : vector<16x32xf32>, vector<32x16xf32>, vector<16x16xf32> -> vector<16x16xf32>
    %c0_9 = arith.constant 0 : index
    %c0_10 = arith.constant 0 : index
    %c0_11 = arith.constant 0 : index
    %10 = vector.load %arg8[%c0_9, %c0_10, %c0_11] : memref<4x1x16xf32, #tpu.memory_space<vmem>>, vector<1x1x16xf32>
    %11 = vector.shape_cast %10 : vector<1x1x16xf32> to vector<1x16xf32>
    %12 = vector.broadcast %11 : vector<1x16xf32> to vector<16x16xf32>
    %13 = arith.addf %9, %12 : vector<16x16xf32>
    %c0_12 = arith.constant 0 : index
    %c0_13 = arith.constant 0 : index
    %c0_14 = arith.constant 0 : index
    %14 = vector.load %arg9[%c0_12, %c0_13, %c0_14] : memref<4x32x16xf32, #tpu.memory_space<vmem>>, vector<1x32x16xf32>
    %15 = vector.shape_cast %14 : vector<1x32x16xf32> to vector<32x16xf32>
    %cst_15 = arith.constant dense<0.000000e+00> : vector<16x16xf32>
    %16 = tpu.matmul %5, %15, %cst_15 {dimension_numbers = #tpu.dot_dimension_numbers<[1], [0], [0], [1], [0, 0, 1, 1], [], []>} : vector<16x32xf32>, vector<32x16xf32>, vector<16x16xf32> -> vector<16x16xf32>
    %c0_16 = arith.constant 0 : index
    %c0_17 = arith.constant 0 : index
    %c0_18 = arith.constant 0 : index
    %17 = vector.load %arg10[%c0_16, %c0_17, %c0_18] : memref<4x1x16xf32, #tpu.memory_space<vmem>>, vector<1x1x16xf32>
    %18 = vector.shape_cast %17 : vector<1x1x16xf32> to vector<1x16xf32>
    %19 = vector.broadcast %18 : vector<1x16xf32> to vector<16x16xf32>
    %20 = arith.addf %16, %19 : vector<16x16xf32>
    %c0_19 = arith.constant 0 : index
    %c0_20 = arith.constant 0 : index
    %c0_21 = arith.constant 0 : index
    %21 = vector.load %arg11[%c0_19, %c0_20, %c0_21] : memref<4x32x16xf32, #tpu.memory_space<vmem>>, vector<1x32x16xf32>
    %22 = vector.shape_cast %21 : vector<1x32x16xf32> to vector<32x16xf32>
    %cst_22 = arith.constant dense<0.000000e+00> : vector<16x16xf32>
    %23 = tpu.matmul %5, %22, %cst_22 {dimension_numbers = #tpu.dot_dimension_numbers<[1], [0], [0], [1], [0, 0, 1, 1], [], []>} : vector<16x32xf32>, vector<32x16xf32>, vector<16x16xf32> -> vector<16x16xf32>
    %c0_23 = arith.constant 0 : index
    %c0_24 = arith.constant 0 : index
    %c0_25 = arith.constant 0 : index
    %24 = vector.load %arg12[%c0_23, %c0_24, %c0_25] : memref<4x1x16xf32, #tpu.memory_space<vmem>>, vector<1x1x16xf32>
    %25 = vector.shape_cast %24 : vector<1x1x16xf32> to vector<1x16xf32>
    %26 = vector.broadcast %25 : vector<1x16xf32> to vector<16x16xf32>
    %27 = arith.addf %23, %26 : vector<16x16xf32>
    %cst_26 = arith.constant dense<0.000000e+00> : vector<16x16xf32>
    %28 = tpu.matmul %13, %20, %cst_26 {dimension_numbers = #tpu.dot_dimension_numbers<[1], [1], [0], [0], [0, 0, 1, 0], [], []>} : vector<16x16xf32>, vector<16x16xf32>, vector<16x16xf32> -> vector<16x16xf32>
    %c0_27 = arith.constant 0 : index
    %c0_28 = arith.constant 0 : index
    %c0_29 = arith.constant 0 : index
    %29 = vector.load %arg15[%c0_27, %c0_28, %c0_29] : memref<2x16x144xf32, #tpu.memory_space<vmem>>, vector<1x16x144xf32>
    %30 = vector.shape_cast %29 : vector<1x16x144xf32> to vector<16x144xf32>
    %cst_30 = arith.constant dense<0.000000e+00> : vector<16x144xf32>
    %31 = tpu.matmul %13, %30, %cst_30 {dimension_numbers = #tpu.dot_dimension_numbers<[1], [0], [0], [1], [0, 0, 1, 1], [], []>} : vector<16x16xf32>, vector<16x144xf32>, vector<16x144xf32> -> vector<16x144xf32>
    %c0_31 = arith.constant 0 : index
    %c0_32 = arith.constant 0 : index
    %32 = vector.load %arg4[%c0_31, %c0_32] : memref<16x144xf32, #tpu.memory_space<vmem>>, vector<16x144xf32>
    %33 = arith.mulf %31, %32 : vector<16x144xf32>
    %c0_33 = arith.constant 0 : index
    %c0_34 = arith.constant 0 : index
    %34 = vector.load %arg5[%c0_33, %c0_34] : memref<144x16xf32, #tpu.memory_space<vmem>>, vector<144x16xf32>
    %cst_35 = arith.constant dense<0.000000e+00> : vector<16x16xf32>
    %35 = tpu.matmul %33, %34, %cst_35 {dimension_numbers = #tpu.dot_dimension_numbers<[1], [0], [0], [1], [0, 0, 1, 1], [], []>} : vector<16x144xf32>, vector<144x16xf32>, vector<16x16xf32> -> vector<16x16xf32>
    %36 = arith.addf %28, %35 : vector<16x16xf32>
    %c0_36 = arith.constant 0 : index
    %c0_37 = arith.constant 0 : index
    %c0_38 = arith.constant 0 : index
    %37 = vector.load %arg3[%c0_36, %c0_37, %c0_38] : memref<1x16x16xf32, #tpu.memory_space<vmem>>, vector<1x16x16xf32>
    %38 = vector.shape_cast %37 : vector<1x16x16xf32> to vector<16x16xf32>
    %39 = arith.addf %36, %38 : vector<16x16xf32>
    %cst_39 = arith.constant dense<0xFF800000> : vector<16xf32>
    %40 = vector.multi_reduction <maximumf>, %39, %cst_39 [1] : vector<16x16xf32> to vector<16xf32>
    %41 = vector.shape_cast %40 : vector<16xf32> to vector<16x1xf32>
    %42 = vector.broadcast %41 : vector<16x1xf32> to vector<16x16xf32>
    %43 = arith.subf %39, %42 : vector<16x16xf32>
    %44 = math.exp %43 : vector<16x16xf32>
    %cst_40 = arith.constant dense<0.000000e+00> : vector<16xf32>
    %45 = vector.multi_reduction <add>, %44, %cst_40 [1] : vector<16x16xf32> to vector<16xf32>
    %46 = vector.shape_cast %45 : vector<16xf32> to vector<16x1xf32>
    %47 = tpu.reciprocal %46 {approx = true} : vector<16x1xf32> -> vector<16x1xf32>
    %48 = vector.broadcast %47 : vector<16x1xf32> to vector<16x16xf32>
    %49 = arith.mulf %44, %48 : vector<16x16xf32>
    %c0_41 = arith.constant 0 : index
    %c0_42 = arith.constant 0 : index
    %50 = vector.load %arg6[%c0_41, %c0_42] : memref<16x144xf32, #tpu.memory_space<vmem>>, vector<16x144xf32>
    %cst_43 = arith.constant dense<0.000000e+00> : vector<16x144xf32>
    %51 = tpu.matmul %49, %50, %cst_43 {dimension_numbers = #tpu.dot_dimension_numbers<[1], [0], [0], [1], [0, 0, 1, 1], [], []>} : vector<16x16xf32>, vector<16x144xf32>, vector<16x144xf32> -> vector<16x144xf32>
    %cst_44 = arith.constant dense<0.000000e+00> : vector<16x16xf32>
    %52 = tpu.matmul %49, %27, %cst_44 {dimension_numbers = #tpu.dot_dimension_numbers<[1], [0], [0], [1], [0, 0, 1, 1], [], []>} : vector<16x16xf32>, vector<16x16xf32>, vector<16x16xf32> -> vector<16x16xf32>
    %c0_45 = arith.constant 0 : index
    %c0_46 = arith.constant 0 : index
    %53 = vector.load %arg4[%c0_45, %c0_46] : memref<16x144xf32, #tpu.memory_space<vmem>>, vector<16x144xf32>
    %54 = arith.mulf %51, %53 : vector<16x144xf32>
    %c0_47 = arith.constant 0 : index
    %c0_48 = arith.constant 0 : index
    %c0_49 = arith.constant 0 : index
    %55 = vector.load %arg16[%c0_47, %c0_48, %c0_49] : memref<2x144x16xf32, #tpu.memory_space<vmem>>, vector<1x144x16xf32>
    %56 = vector.shape_cast %55 : vector<1x144x16xf32> to vector<144x16xf32>
    %cst_50 = arith.constant dense<0.000000e+00> : vector<16x16xf32>
    %57 = tpu.matmul %54, %56, %cst_50 {dimension_numbers = #tpu.dot_dimension_numbers<[1], [0], [0], [1], [0, 0, 1, 1], [], []>} : vector<16x144xf32>, vector<144x16xf32>, vector<16x16xf32> -> vector<16x16xf32>
    %58 = arith.addf %52, %57 : vector<16x16xf32>
    %c0_51 = arith.constant 0 : index
    %c0_52 = arith.constant 0 : index
    %c0_53 = arith.constant 0 : index
    %59 = vector.load %arg13[%c0_51, %c0_52, %c0_53] : memref<4x16x32xf32, #tpu.memory_space<vmem>>, vector<1x16x32xf32>
    %60 = vector.shape_cast %59 : vector<1x16x32xf32> to vector<16x32xf32>
    %cst_54 = arith.constant dense<0.000000e+00> : vector<16x32xf32>
    %61 = tpu.matmul %58, %60, %cst_54 {dimension_numbers = #tpu.dot_dimension_numbers<[1], [0], [0], [1], [0, 0, 1, 1], [], []>} : vector<16x16xf32>, vector<16x32xf32>, vector<16x32xf32> -> vector<16x32xf32>
    %62 = arith.addf %6, %61 : vector<16x32xf32>
    %c1 = arith.constant 1 : index
    %c0_55 = arith.constant 0 : index
    %c0_56 = arith.constant 0 : index
    %63 = vector.load %arg7[%c1, %c0_55, %c0_56] : memref<4x32x16xf32, #tpu.memory_space<vmem>>, vector<1x32x16xf32>
    %64 = vector.shape_cast %63 : vector<1x32x16xf32> to vector<32x16xf32>
    %cst_57 = arith.constant dense<0.000000e+00> : vector<16x16xf32>
    %65 = tpu.matmul %5, %64, %cst_57 {dimension_numbers = #tpu.dot_dimension_numbers<[1], [0], [0], [1], [0, 0, 1, 1], [], []>} : vector<16x32xf32>, vector<32x16xf32>, vector<16x16xf32> -> vector<16x16xf32>
    %c1_58 = arith.constant 1 : index
    %c0_59 = arith.constant 0 : index
    %c0_60 = arith.constant 0 : index
    %66 = vector.load %arg8[%c1_58, %c0_59, %c0_60] : memref<4x1x16xf32, #tpu.memory_space<vmem>>, vector<1x1x16xf32>
    %67 = vector.shape_cast %66 : vector<1x1x16xf32> to vector<1x16xf32>
    %68 = vector.broadcast %67 : vector<1x16xf32> to vector<16x16xf32>
    %69 = arith.addf %65, %68 : vector<16x16xf32>
    %c1_61 = arith.constant 1 : index
    %c0_62 = arith.constant 0 : index
    %c0_63 = arith.constant 0 : index
    %70 = vector.load %arg9[%c1_61, %c0_62, %c0_63] : memref<4x32x16xf32, #tpu.memory_space<vmem>>, vector<1x32x16xf32>
    %71 = vector.shape_cast %70 : vector<1x32x16xf32> to vector<32x16xf32>
    %cst_64 = arith.constant dense<0.000000e+00> : vector<16x16xf32>
    %72 = tpu.matmul %5, %71, %cst_64 {dimension_numbers = #tpu.dot_dimension_numbers<[1], [0], [0], [1], [0, 0, 1, 1], [], []>} : vector<16x32xf32>, vector<32x16xf32>, vector<16x16xf32> -> vector<16x16xf32>
    %c1_65 = arith.constant 1 : index
    %c0_66 = arith.constant 0 : index
    %c0_67 = arith.constant 0 : index
    %73 = vector.load %arg10[%c1_65, %c0_66, %c0_67] : memref<4x1x16xf32, #tpu.memory_space<vmem>>, vector<1x1x16xf32>
    %74 = vector.shape_cast %73 : vector<1x1x16xf32> to vector<1x16xf32>
    %75 = vector.broadcast %74 : vector<1x16xf32> to vector<16x16xf32>
    %76 = arith.addf %72, %75 : vector<16x16xf32>
    %c1_68 = arith.constant 1 : index
    %c0_69 = arith.constant 0 : index
    %c0_70 = arith.constant 0 : index
    %77 = vector.load %arg11[%c1_68, %c0_69, %c0_70] : memref<4x32x16xf32, #tpu.memory_space<vmem>>, vector<1x32x16xf32>
    %78 = vector.shape_cast %77 : vector<1x32x16xf32> to vector<32x16xf32>
    %cst_71 = arith.constant dense<0.000000e+00> : vector<16x16xf32>
    %79 = tpu.matmul %5, %78, %cst_71 {dimension_numbers = #tpu.dot_dimension_numbers<[1], [0], [0], [1], [0, 0, 1, 1], [], []>} : vector<16x32xf32>, vector<32x16xf32>, vector<16x16xf32> -> vector<16x16xf32>
    %c1_72 = arith.constant 1 : index
    %c0_73 = arith.constant 0 : index
    %c0_74 = arith.constant 0 : index
    %80 = vector.load %arg12[%c1_72, %c0_73, %c0_74] : memref<4x1x16xf32, #tpu.memory_space<vmem>>, vector<1x1x16xf32>
    %81 = vector.shape_cast %80 : vector<1x1x16xf32> to vector<1x16xf32>
    %82 = vector.broadcast %81 : vector<1x16xf32> to vector<16x16xf32>
    %83 = arith.addf %79, %82 : vector<16x16xf32>
    %cst_75 = arith.constant dense<0.000000e+00> : vector<16x16xf32>
    %84 = tpu.matmul %69, %76, %cst_75 {dimension_numbers = #tpu.dot_dimension_numbers<[1], [1], [0], [0], [0, 0, 1, 0], [], []>} : vector<16x16xf32>, vector<16x16xf32>, vector<16x16xf32> -> vector<16x16xf32>
    %c0_76 = arith.constant 0 : index
    %c0_77 = arith.constant 0 : index
    %c0_78 = arith.constant 0 : index
    %85 = vector.load %arg15[%c0_76, %c0_77, %c0_78] : memref<2x16x144xf32, #tpu.memory_space<vmem>>, vector<1x16x144xf32>
    %86 = vector.shape_cast %85 : vector<1x16x144xf32> to vector<16x144xf32>
    %cst_79 = arith.constant dense<0.000000e+00> : vector<16x144xf32>
    %87 = tpu.matmul %69, %86, %cst_79 {dimension_numbers = #tpu.dot_dimension_numbers<[1], [0], [0], [1], [0, 0, 1, 1], [], []>} : vector<16x16xf32>, vector<16x144xf32>, vector<16x144xf32> -> vector<16x144xf32>
    %c0_80 = arith.constant 0 : index
    %c0_81 = arith.constant 0 : index
    %88 = vector.load %arg4[%c0_80, %c0_81] : memref<16x144xf32, #tpu.memory_space<vmem>>, vector<16x144xf32>
    %89 = arith.mulf %87, %88 : vector<16x144xf32>
    %c0_82 = arith.constant 0 : index
    %c0_83 = arith.constant 0 : index
    %90 = vector.load %arg5[%c0_82, %c0_83] : memref<144x16xf32, #tpu.memory_space<vmem>>, vector<144x16xf32>
    %cst_84 = arith.constant dense<0.000000e+00> : vector<16x16xf32>
    %91 = tpu.matmul %89, %90, %cst_84 {dimension_numbers = #tpu.dot_dimension_numbers<[1], [0], [0], [1], [0, 0, 1, 1], [], []>} : vector<16x144xf32>, vector<144x16xf32>, vector<16x16xf32> -> vector<16x16xf32>
    %92 = arith.addf %84, %91 : vector<16x16xf32>
    %c0_85 = arith.constant 0 : index
    %c0_86 = arith.constant 0 : index
    %c0_87 = arith.constant 0 : index
    %93 = vector.load %arg3[%c0_85, %c0_86, %c0_87] : memref<1x16x16xf32, #tpu.memory_space<vmem>>, vector<1x16x16xf32>
    %94 = vector.shape_cast %93 : vector<1x16x16xf32> to vector<16x16xf32>
    %95 = arith.addf %92, %94 : vector<16x16xf32>
    %cst_88 = arith.constant dense<0xFF800000> : vector<16xf32>
    %96 = vector.multi_reduction <maximumf>, %95, %cst_88 [1] : vector<16x16xf32> to vector<16xf32>
    %97 = vector.shape_cast %96 : vector<16xf32> to vector<16x1xf32>
    %98 = vector.broadcast %97 : vector<16x1xf32> to vector<16x16xf32>
    %99 = arith.subf %95, %98 : vector<16x16xf32>
    %100 = math.exp %99 : vector<16x16xf32>
    %cst_89 = arith.constant dense<0.000000e+00> : vector<16xf32>
    %101 = vector.multi_reduction <add>, %100, %cst_89 [1] : vector<16x16xf32> to vector<16xf32>
    %102 = vector.shape_cast %101 : vector<16xf32> to vector<16x1xf32>
    %103 = tpu.reciprocal %102 {approx = true} : vector<16x1xf32> -> vector<16x1xf32>
    %104 = vector.broadcast %103 : vector<16x1xf32> to vector<16x16xf32>
    %105 = arith.mulf %100, %104 : vector<16x16xf32>
    %c0_90 = arith.constant 0 : index
    %c0_91 = arith.constant 0 : index
    %106 = vector.load %arg6[%c0_90, %c0_91] : memref<16x144xf32, #tpu.memory_space<vmem>>, vector<16x144xf32>
    %cst_92 = arith.constant dense<0.000000e+00> : vector<16x144xf32>
    %107 = tpu.matmul %105, %106, %cst_92 {dimension_numbers = #tpu.dot_dimension_numbers<[1], [0], [0], [1], [0, 0, 1, 1], [], []>} : vector<16x16xf32>, vector<16x144xf32>, vector<16x144xf32> -> vector<16x144xf32>
    %cst_93 = arith.constant dense<0.000000e+00> : vector<16x16xf32>
    %108 = tpu.matmul %105, %83, %cst_93 {dimension_numbers = #tpu.dot_dimension_numbers<[1], [0], [0], [1], [0, 0, 1, 1], [], []>} : vector<16x16xf32>, vector<16x16xf32>, vector<16x16xf32> -> vector<16x16xf32>
    %c0_94 = arith.constant 0 : index
    %c0_95 = arith.constant 0 : index
    %109 = vector.load %arg4[%c0_94, %c0_95] : memref<16x144xf32, #tpu.memory_space<vmem>>, vector<16x144xf32>
    %110 = arith.mulf %107, %109 : vector<16x144xf32>
    %c0_96 = arith.constant 0 : index
    %c0_97 = arith.constant 0 : index
    %c0_98 = arith.constant 0 : index
    %111 = vector.load %arg16[%c0_96, %c0_97, %c0_98] : memref<2x144x16xf32, #tpu.memory_space<vmem>>, vector<1x144x16xf32>
    %112 = vector.shape_cast %111 : vector<1x144x16xf32> to vector<144x16xf32>
    %cst_99 = arith.constant dense<0.000000e+00> : vector<16x16xf32>
    %113 = tpu.matmul %110, %112, %cst_99 {dimension_numbers = #tpu.dot_dimension_numbers<[1], [0], [0], [1], [0, 0, 1, 1], [], []>} : vector<16x144xf32>, vector<144x16xf32>, vector<16x16xf32> -> vector<16x16xf32>
    %114 = arith.addf %108, %113 : vector<16x16xf32>
    %c1_100 = arith.constant 1 : index
    %c0_101 = arith.constant 0 : index
    %c0_102 = arith.constant 0 : index
    %115 = vector.load %arg13[%c1_100, %c0_101, %c0_102] : memref<4x16x32xf32, #tpu.memory_space<vmem>>, vector<1x16x32xf32>
    %116 = vector.shape_cast %115 : vector<1x16x32xf32> to vector<16x32xf32>
    %cst_103 = arith.constant dense<0.000000e+00> : vector<16x32xf32>
    %117 = tpu.matmul %114, %116, %cst_103 {dimension_numbers = #tpu.dot_dimension_numbers<[1], [0], [0], [1], [0, 0, 1, 1], [], []>} : vector<16x16xf32>, vector<16x32xf32>, vector<16x32xf32> -> vector<16x32xf32>
    %118 = arith.addf %62, %117 : vector<16x32xf32>
    %c0_104 = arith.constant 0 : index
    %c0_105 = arith.constant 0 : index
    %c0_106 = arith.constant 0 : index
    %119 = vector.load %arg14[%c0_104, %c0_105, %c0_106] : memref<2x1x32xf32, #tpu.memory_space<vmem>>, vector<1x1x32xf32>
    %120 = vector.shape_cast %119 : vector<1x1x32xf32> to vector<1x32xf32>
    %121 = vector.broadcast %120 : vector<1x32xf32> to vector<16x32xf32>
    %122 = arith.addf %118, %121 : vector<16x32xf32>
    %123 = arith.addf %5, %122 : vector<16x32xf32>
    %c0_107 = arith.constant 0 : index
    %c0_108 = arith.constant 0 : index
    %c0_109 = arith.constant 0 : index
    %124 = vector.load %arg17[%c0_107, %c0_108, %c0_109] : memref<2x1x32xf32, #tpu.memory_space<vmem>>, vector<1x1x32xf32>
    %125 = vector.shape_cast %124 : vector<1x1x32xf32> to vector<1x32xf32>
    %c0_110 = arith.constant 0 : index
    %c0_111 = arith.constant 0 : index
    %c0_112 = arith.constant 0 : index
    %126 = vector.load %arg18[%c0_110, %c0_111, %c0_112] : memref<2x1x32xf32, #tpu.memory_space<vmem>>, vector<1x1x32xf32>
    %127 = vector.shape_cast %126 : vector<1x1x32xf32> to vector<1x32xf32>
    %cst_113 = arith.constant dense<0.000000e+00> : vector<16xf32>
    %128 = vector.multi_reduction <add>, %123, %cst_113 [1] : vector<16x32xf32> to vector<16xf32>
    %129 = vector.shape_cast %128 : vector<16xf32> to vector<16x1xf32>
    %cst_114 = arith.constant 3.200000e+01 : f32
    %130 = vector.broadcast %cst_114 : f32 to vector<16x1xf32>
    %131 = arith.divf %129, %130 : vector<16x1xf32>
    %132 = vector.broadcast %131 : vector<16x1xf32> to vector<16x32xf32>
    %133 = arith.subf %123, %132 : vector<16x32xf32>
    %134 = arith.mulf %133, %133 : vector<16x32xf32>
    %cst_115 = arith.constant dense<0.000000e+00> : vector<16xf32>
    %135 = vector.multi_reduction <add>, %134, %cst_115 [1] : vector<16x32xf32> to vector<16xf32>
    %136 = vector.shape_cast %135 : vector<16xf32> to vector<16x1xf32>
    %cst_116 = arith.constant 3.200000e+01 : f32
    %137 = vector.broadcast %cst_116 : f32 to vector<16x1xf32>
    %138 = arith.divf %136, %137 : vector<16x1xf32>
    %139 = vector.broadcast %131 : vector<16x1xf32> to vector<16x32xf32>
    %140 = arith.subf %123, %139 : vector<16x32xf32>
    %cst_117 = arith.constant 9.99999974E-6 : f32
    %141 = vector.broadcast %cst_117 : f32 to vector<16x1xf32>
    %142 = arith.addf %138, %141 : vector<16x1xf32>
    %143 = math.rsqrt %142 : vector<16x1xf32>
    %144 = vector.broadcast %143 : vector<16x1xf32> to vector<16x32xf32>
    %145 = arith.mulf %140, %144 : vector<16x32xf32>
    %146 = vector.broadcast %125 : vector<1x32xf32> to vector<16x32xf32>
    %147 = arith.mulf %145, %146 : vector<16x32xf32>
    %148 = vector.broadcast %127 : vector<1x32xf32> to vector<16x32xf32>
    %149 = arith.addf %147, %148 : vector<16x32xf32>
    %150 = vector.broadcast %3 : vector<16x1xf32> to vector<16x32xf32>
    %151 = arith.mulf %149, %150 : vector<16x32xf32>
    %c0_118 = arith.constant 0 : index
    %c0_119 = arith.constant 0 : index
    %c0_120 = arith.constant 0 : index
    %152 = vector.load %arg19[%c0_118, %c0_119, %c0_120] : memref<2x32x64xf32, #tpu.memory_space<vmem>>, vector<1x32x64xf32>
    %153 = vector.shape_cast %152 : vector<1x32x64xf32> to vector<32x64xf32>
    %cst_121 = arith.constant dense<0.000000e+00> : vector<16x64xf32>
    %154 = tpu.matmul %151, %153, %cst_121 {dimension_numbers = #tpu.dot_dimension_numbers<[1], [0], [0], [1], [0, 0, 1, 1], [], []>} : vector<16x32xf32>, vector<32x64xf32>, vector<16x64xf32> -> vector<16x64xf32>
    %c0_122 = arith.constant 0 : index
    %c0_123 = arith.constant 0 : index
    %c0_124 = arith.constant 0 : index
    %155 = vector.load %arg20[%c0_122, %c0_123, %c0_124] : memref<2x1x64xf32, #tpu.memory_space<vmem>>, vector<1x1x64xf32>
    %156 = vector.shape_cast %155 : vector<1x1x64xf32> to vector<1x64xf32>
    %157 = vector.broadcast %156 : vector<1x64xf32> to vector<16x64xf32>
    %158 = arith.addf %154, %157 : vector<16x64xf32>
    %cst_125 = arith.constant 0.000000e+00 : f32
    %159 = vector.broadcast %cst_125 : f32 to vector<16x64xf32>
    %160 = arith.maximumf %158, %159 : vector<16x64xf32>
    %161 = vector.broadcast %3 : vector<16x1xf32> to vector<16x64xf32>
    %162 = arith.mulf %160, %161 : vector<16x64xf32>
    %c0_126 = arith.constant 0 : index
    %c0_127 = arith.constant 0 : index
    %c0_128 = arith.constant 0 : index
    %163 = vector.load %arg21[%c0_126, %c0_127, %c0_128] : memref<2x64x32xf32, #tpu.memory_space<vmem>>, vector<1x64x32xf32>
    %164 = vector.shape_cast %163 : vector<1x64x32xf32> to vector<64x32xf32>
    %cst_129 = arith.constant dense<0.000000e+00> : vector<16x32xf32>
    %165 = tpu.matmul %162, %164, %cst_129 {dimension_numbers = #tpu.dot_dimension_numbers<[1], [0], [0], [1], [0, 0, 1, 1], [], []>} : vector<16x64xf32>, vector<64x32xf32>, vector<16x32xf32> -> vector<16x32xf32>
    %c0_130 = arith.constant 0 : index
    %c0_131 = arith.constant 0 : index
    %c0_132 = arith.constant 0 : index
    %166 = vector.load %arg22[%c0_130, %c0_131, %c0_132] : memref<2x1x32xf32, #tpu.memory_space<vmem>>, vector<1x1x32xf32>
    %167 = vector.shape_cast %166 : vector<1x1x32xf32> to vector<1x32xf32>
    %168 = vector.broadcast %167 : vector<1x32xf32> to vector<16x32xf32>
    %169 = arith.addf %165, %168 : vector<16x32xf32>
    %170 = vector.broadcast %3 : vector<16x1xf32> to vector<16x32xf32>
    %171 = arith.mulf %169, %170 : vector<16x32xf32>
    %172 = arith.addf %149, %171 : vector<16x32xf32>
    %c0_133 = arith.constant 0 : index
    %c0_134 = arith.constant 0 : index
    %c0_135 = arith.constant 0 : index
    %173 = vector.load %arg23[%c0_133, %c0_134, %c0_135] : memref<2x1x32xf32, #tpu.memory_space<vmem>>, vector<1x1x32xf32>
    %174 = vector.shape_cast %173 : vector<1x1x32xf32> to vector<1x32xf32>
    %c0_136 = arith.constant 0 : index
    %c0_137 = arith.constant 0 : index
    %c0_138 = arith.constant 0 : index
    %175 = vector.load %arg24[%c0_136, %c0_137, %c0_138] : memref<2x1x32xf32, #tpu.memory_space<vmem>>, vector<1x1x32xf32>
    %176 = vector.shape_cast %175 : vector<1x1x32xf32> to vector<1x32xf32>
    %cst_139 = arith.constant dense<0.000000e+00> : vector<16xf32>
    %177 = vector.multi_reduction <add>, %172, %cst_139 [1] : vector<16x32xf32> to vector<16xf32>
    %178 = vector.shape_cast %177 : vector<16xf32> to vector<16x1xf32>
    %cst_140 = arith.constant 3.200000e+01 : f32
    %179 = vector.broadcast %cst_140 : f32 to vector<16x1xf32>
    %180 = arith.divf %178, %179 : vector<16x1xf32>
    %181 = vector.broadcast %180 : vector<16x1xf32> to vector<16x32xf32>
    %182 = arith.subf %172, %181 : vector<16x32xf32>
    %183 = arith.mulf %182, %182 : vector<16x32xf32>
    %cst_141 = arith.constant dense<0.000000e+00> : vector<16xf32>
    %184 = vector.multi_reduction <add>, %183, %cst_141 [1] : vector<16x32xf32> to vector<16xf32>
    %185 = vector.shape_cast %184 : vector<16xf32> to vector<16x1xf32>
    %cst_142 = arith.constant 3.200000e+01 : f32
    %186 = vector.broadcast %cst_142 : f32 to vector<16x1xf32>
    %187 = arith.divf %185, %186 : vector<16x1xf32>
    %188 = vector.broadcast %180 : vector<16x1xf32> to vector<16x32xf32>
    %189 = arith.subf %172, %188 : vector<16x32xf32>
    %cst_143 = arith.constant 9.99999974E-6 : f32
    %190 = vector.broadcast %cst_143 : f32 to vector<16x1xf32>
    %191 = arith.addf %187, %190 : vector<16x1xf32>
    %192 = math.rsqrt %191 : vector<16x1xf32>
    %193 = vector.broadcast %192 : vector<16x1xf32> to vector<16x32xf32>
    %194 = arith.mulf %189, %193 : vector<16x32xf32>
    %195 = vector.broadcast %174 : vector<1x32xf32> to vector<16x32xf32>
    %196 = arith.mulf %194, %195 : vector<16x32xf32>
    %197 = vector.broadcast %176 : vector<1x32xf32> to vector<16x32xf32>
    %198 = arith.addf %196, %197 : vector<16x32xf32>
    %cst_144 = arith.constant 0.000000e+00 : f32
    %199 = vector.broadcast %cst_144 : f32 to vector<16x32xf32>
    %c2 = arith.constant 2 : index
    %c0_145 = arith.constant 0 : index
    %c0_146 = arith.constant 0 : index
    %200 = vector.load %arg7[%c2, %c0_145, %c0_146] : memref<4x32x16xf32, #tpu.memory_space<vmem>>, vector<1x32x16xf32>
    %201 = vector.shape_cast %200 : vector<1x32x16xf32> to vector<32x16xf32>
    %cst_147 = arith.constant dense<0.000000e+00> : vector<16x16xf32>
    %202 = tpu.matmul %198, %201, %cst_147 {dimension_numbers = #tpu.dot_dimension_numbers<[1], [0], [0], [1], [0, 0, 1, 1], [], []>} : vector<16x32xf32>, vector<32x16xf32>, vector<16x16xf32> -> vector<16x16xf32>
    %c2_148 = arith.constant 2 : index
    %c0_149 = arith.constant 0 : index
    %c0_150 = arith.constant 0 : index
    %203 = vector.load %arg8[%c2_148, %c0_149, %c0_150] : memref<4x1x16xf32, #tpu.memory_space<vmem>>, vector<1x1x16xf32>
    %204 = vector.shape_cast %203 : vector<1x1x16xf32> to vector<1x16xf32>
    %205 = vector.broadcast %204 : vector<1x16xf32> to vector<16x16xf32>
    %206 = arith.addf %202, %205 : vector<16x16xf32>
    %c2_151 = arith.constant 2 : index
    %c0_152 = arith.constant 0 : index
    %c0_153 = arith.constant 0 : index
    %207 = vector.load %arg9[%c2_151, %c0_152, %c0_153] : memref<4x32x16xf32, #tpu.memory_space<vmem>>, vector<1x32x16xf32>
    %208 = vector.shape_cast %207 : vector<1x32x16xf32> to vector<32x16xf32>
    %cst_154 = arith.constant dense<0.000000e+00> : vector<16x16xf32>
    %209 = tpu.matmul %198, %208, %cst_154 {dimension_numbers = #tpu.dot_dimension_numbers<[1], [0], [0], [1], [0, 0, 1, 1], [], []>} : vector<16x32xf32>, vector<32x16xf32>, vector<16x16xf32> -> vector<16x16xf32>
    %c2_155 = arith.constant 2 : index
    %c0_156 = arith.constant 0 : index
    %c0_157 = arith.constant 0 : index
    %210 = vector.load %arg10[%c2_155, %c0_156, %c0_157] : memref<4x1x16xf32, #tpu.memory_space<vmem>>, vector<1x1x16xf32>
    %211 = vector.shape_cast %210 : vector<1x1x16xf32> to vector<1x16xf32>
    %212 = vector.broadcast %211 : vector<1x16xf32> to vector<16x16xf32>
    %213 = arith.addf %209, %212 : vector<16x16xf32>
    %c2_158 = arith.constant 2 : index
    %c0_159 = arith.constant 0 : index
    %c0_160 = arith.constant 0 : index
    %214 = vector.load %arg11[%c2_158, %c0_159, %c0_160] : memref<4x32x16xf32, #tpu.memory_space<vmem>>, vector<1x32x16xf32>
    %215 = vector.shape_cast %214 : vector<1x32x16xf32> to vector<32x16xf32>
    %cst_161 = arith.constant dense<0.000000e+00> : vector<16x16xf32>
    %216 = tpu.matmul %198, %215, %cst_161 {dimension_numbers = #tpu.dot_dimension_numbers<[1], [0], [0], [1], [0, 0, 1, 1], [], []>} : vector<16x32xf32>, vector<32x16xf32>, vector<16x16xf32> -> vector<16x16xf32>
    %c2_162 = arith.constant 2 : index
    %c0_163 = arith.constant 0 : index
    %c0_164 = arith.constant 0 : index
    %217 = vector.load %arg12[%c2_162, %c0_163, %c0_164] : memref<4x1x16xf32, #tpu.memory_space<vmem>>, vector<1x1x16xf32>
    %218 = vector.shape_cast %217 : vector<1x1x16xf32> to vector<1x16xf32>
    %219 = vector.broadcast %218 : vector<1x16xf32> to vector<16x16xf32>
    %220 = arith.addf %216, %219 : vector<16x16xf32>
    %cst_165 = arith.constant dense<0.000000e+00> : vector<16x16xf32>
    %221 = tpu.matmul %206, %213, %cst_165 {dimension_numbers = #tpu.dot_dimension_numbers<[1], [1], [0], [0], [0, 0, 1, 0], [], []>} : vector<16x16xf32>, vector<16x16xf32>, vector<16x16xf32> -> vector<16x16xf32>
    %c1_166 = arith.constant 1 : index
    %c0_167 = arith.constant 0 : index
    %c0_168 = arith.constant 0 : index
    %222 = vector.load %arg15[%c1_166, %c0_167, %c0_168] : memref<2x16x144xf32, #tpu.memory_space<vmem>>, vector<1x16x144xf32>
    %223 = vector.shape_cast %222 : vector<1x16x144xf32> to vector<16x144xf32>
    %cst_169 = arith.constant dense<0.000000e+00> : vector<16x144xf32>
    %224 = tpu.matmul %206, %223, %cst_169 {dimension_numbers = #tpu.dot_dimension_numbers<[1], [0], [0], [1], [0, 0, 1, 1], [], []>} : vector<16x16xf32>, vector<16x144xf32>, vector<16x144xf32> -> vector<16x144xf32>
    %c0_170 = arith.constant 0 : index
    %c0_171 = arith.constant 0 : index
    %225 = vector.load %arg4[%c0_170, %c0_171] : memref<16x144xf32, #tpu.memory_space<vmem>>, vector<16x144xf32>
    %226 = arith.mulf %224, %225 : vector<16x144xf32>
    %c0_172 = arith.constant 0 : index
    %c0_173 = arith.constant 0 : index
    %227 = vector.load %arg5[%c0_172, %c0_173] : memref<144x16xf32, #tpu.memory_space<vmem>>, vector<144x16xf32>
    %cst_174 = arith.constant dense<0.000000e+00> : vector<16x16xf32>
    %228 = tpu.matmul %226, %227, %cst_174 {dimension_numbers = #tpu.dot_dimension_numbers<[1], [0], [0], [1], [0, 0, 1, 1], [], []>} : vector<16x144xf32>, vector<144x16xf32>, vector<16x16xf32> -> vector<16x16xf32>
    %229 = arith.addf %221, %228 : vector<16x16xf32>
    %c0_175 = arith.constant 0 : index
    %c0_176 = arith.constant 0 : index
    %c0_177 = arith.constant 0 : index
    %230 = vector.load %arg3[%c0_175, %c0_176, %c0_177] : memref<1x16x16xf32, #tpu.memory_space<vmem>>, vector<1x16x16xf32>
    %231 = vector.shape_cast %230 : vector<1x16x16xf32> to vector<16x16xf32>
    %232 = arith.addf %229, %231 : vector<16x16xf32>
    %cst_178 = arith.constant dense<0xFF800000> : vector<16xf32>
    %233 = vector.multi_reduction <maximumf>, %232, %cst_178 [1] : vector<16x16xf32> to vector<16xf32>
    %234 = vector.shape_cast %233 : vector<16xf32> to vector<16x1xf32>
    %235 = vector.broadcast %234 : vector<16x1xf32> to vector<16x16xf32>
    %236 = arith.subf %232, %235 : vector<16x16xf32>
    %237 = math.exp %236 : vector<16x16xf32>
    %cst_179 = arith.constant dense<0.000000e+00> : vector<16xf32>
    %238 = vector.multi_reduction <add>, %237, %cst_179 [1] : vector<16x16xf32> to vector<16xf32>
    %239 = vector.shape_cast %238 : vector<16xf32> to vector<16x1xf32>
    %240 = tpu.reciprocal %239 {approx = true} : vector<16x1xf32> -> vector<16x1xf32>
    %241 = vector.broadcast %240 : vector<16x1xf32> to vector<16x16xf32>
    %242 = arith.mulf %237, %241 : vector<16x16xf32>
    %c0_180 = arith.constant 0 : index
    %c0_181 = arith.constant 0 : index
    %243 = vector.load %arg6[%c0_180, %c0_181] : memref<16x144xf32, #tpu.memory_space<vmem>>, vector<16x144xf32>
    %cst_182 = arith.constant dense<0.000000e+00> : vector<16x144xf32>
    %244 = tpu.matmul %242, %243, %cst_182 {dimension_numbers = #tpu.dot_dimension_numbers<[1], [0], [0], [1], [0, 0, 1, 1], [], []>} : vector<16x16xf32>, vector<16x144xf32>, vector<16x144xf32> -> vector<16x144xf32>
    %cst_183 = arith.constant dense<0.000000e+00> : vector<16x16xf32>
    %245 = tpu.matmul %242, %220, %cst_183 {dimension_numbers = #tpu.dot_dimension_numbers<[1], [0], [0], [1], [0, 0, 1, 1], [], []>} : vector<16x16xf32>, vector<16x16xf32>, vector<16x16xf32> -> vector<16x16xf32>
    %c0_184 = arith.constant 0 : index
    %c0_185 = arith.constant 0 : index
    %246 = vector.load %arg4[%c0_184, %c0_185] : memref<16x144xf32, #tpu.memory_space<vmem>>, vector<16x144xf32>
    %247 = arith.mulf %244, %246 : vector<16x144xf32>
    %c1_186 = arith.constant 1 : index
    %c0_187 = arith.constant 0 : index
    %c0_188 = arith.constant 0 : index
    %248 = vector.load %arg16[%c1_186, %c0_187, %c0_188] : memref<2x144x16xf32, #tpu.memory_space<vmem>>, vector<1x144x16xf32>
    %249 = vector.shape_cast %248 : vector<1x144x16xf32> to vector<144x16xf32>
    %cst_189 = arith.constant dense<0.000000e+00> : vector<16x16xf32>
    %250 = tpu.matmul %247, %249, %cst_189 {dimension_numbers = #tpu.dot_dimension_numbers<[1], [0], [0], [1], [0, 0, 1, 1], [], []>} : vector<16x144xf32>, vector<144x16xf32>, vector<16x16xf32> -> vector<16x16xf32>
    %251 = arith.addf %245, %250 : vector<16x16xf32>
    %c2_190 = arith.constant 2 : index
    %c0_191 = arith.constant 0 : index
    %c0_192 = arith.constant 0 : index
    %252 = vector.load %arg13[%c2_190, %c0_191, %c0_192] : memref<4x16x32xf32, #tpu.memory_space<vmem>>, vector<1x16x32xf32>
    %253 = vector.shape_cast %252 : vector<1x16x32xf32> to vector<16x32xf32>
    %cst_193 = arith.constant dense<0.000000e+00> : vector<16x32xf32>
    %254 = tpu.matmul %251, %253, %cst_193 {dimension_numbers = #tpu.dot_dimension_numbers<[1], [0], [0], [1], [0, 0, 1, 1], [], []>} : vector<16x16xf32>, vector<16x32xf32>, vector<16x32xf32> -> vector<16x32xf32>
    %255 = arith.addf %199, %254 : vector<16x32xf32>
    %c3 = arith.constant 3 : index
    %c0_194 = arith.constant 0 : index
    %c0_195 = arith.constant 0 : index
    %256 = vector.load %arg7[%c3, %c0_194, %c0_195] : memref<4x32x16xf32, #tpu.memory_space<vmem>>, vector<1x32x16xf32>
    %257 = vector.shape_cast %256 : vector<1x32x16xf32> to vector<32x16xf32>
    %cst_196 = arith.constant dense<0.000000e+00> : vector<16x16xf32>
    %258 = tpu.matmul %198, %257, %cst_196 {dimension_numbers = #tpu.dot_dimension_numbers<[1], [0], [0], [1], [0, 0, 1, 1], [], []>} : vector<16x32xf32>, vector<32x16xf32>, vector<16x16xf32> -> vector<16x16xf32>
    %c3_197 = arith.constant 3 : index
    %c0_198 = arith.constant 0 : index
    %c0_199 = arith.constant 0 : index
    %259 = vector.load %arg8[%c3_197, %c0_198, %c0_199] : memref<4x1x16xf32, #tpu.memory_space<vmem>>, vector<1x1x16xf32>
    %260 = vector.shape_cast %259 : vector<1x1x16xf32> to vector<1x16xf32>
    %261 = vector.broadcast %260 : vector<1x16xf32> to vector<16x16xf32>
    %262 = arith.addf %258, %261 : vector<16x16xf32>
    %c3_200 = arith.constant 3 : index
    %c0_201 = arith.constant 0 : index
    %c0_202 = arith.constant 0 : index
    %263 = vector.load %arg9[%c3_200, %c0_201, %c0_202] : memref<4x32x16xf32, #tpu.memory_space<vmem>>, vector<1x32x16xf32>
    %264 = vector.shape_cast %263 : vector<1x32x16xf32> to vector<32x16xf32>
    %cst_203 = arith.constant dense<0.000000e+00> : vector<16x16xf32>
    %265 = tpu.matmul %198, %264, %cst_203 {dimension_numbers = #tpu.dot_dimension_numbers<[1], [0], [0], [1], [0, 0, 1, 1], [], []>} : vector<16x32xf32>, vector<32x16xf32>, vector<16x16xf32> -> vector<16x16xf32>
    %c3_204 = arith.constant 3 : index
    %c0_205 = arith.constant 0 : index
    %c0_206 = arith.constant 0 : index
    %266 = vector.load %arg10[%c3_204, %c0_205, %c0_206] : memref<4x1x16xf32, #tpu.memory_space<vmem>>, vector<1x1x16xf32>
    %267 = vector.shape_cast %266 : vector<1x1x16xf32> to vector<1x16xf32>
    %268 = vector.broadcast %267 : vector<1x16xf32> to vector<16x16xf32>
    %269 = arith.addf %265, %268 : vector<16x16xf32>
    %c3_207 = arith.constant 3 : index
    %c0_208 = arith.constant 0 : index
    %c0_209 = arith.constant 0 : index
    %270 = vector.load %arg11[%c3_207, %c0_208, %c0_209] : memref<4x32x16xf32, #tpu.memory_space<vmem>>, vector<1x32x16xf32>
    %271 = vector.shape_cast %270 : vector<1x32x16xf32> to vector<32x16xf32>
    %cst_210 = arith.constant dense<0.000000e+00> : vector<16x16xf32>
    %272 = tpu.matmul %198, %271, %cst_210 {dimension_numbers = #tpu.dot_dimension_numbers<[1], [0], [0], [1], [0, 0, 1, 1], [], []>} : vector<16x32xf32>, vector<32x16xf32>, vector<16x16xf32> -> vector<16x16xf32>
    %c3_211 = arith.constant 3 : index
    %c0_212 = arith.constant 0 : index
    %c0_213 = arith.constant 0 : index
    %273 = vector.load %arg12[%c3_211, %c0_212, %c0_213] : memref<4x1x16xf32, #tpu.memory_space<vmem>>, vector<1x1x16xf32>
    %274 = vector.shape_cast %273 : vector<1x1x16xf32> to vector<1x16xf32>
    %275 = vector.broadcast %274 : vector<1x16xf32> to vector<16x16xf32>
    %276 = arith.addf %272, %275 : vector<16x16xf32>
    %cst_214 = arith.constant dense<0.000000e+00> : vector<16x16xf32>
    %277 = tpu.matmul %262, %269, %cst_214 {dimension_numbers = #tpu.dot_dimension_numbers<[1], [1], [0], [0], [0, 0, 1, 0], [], []>} : vector<16x16xf32>, vector<16x16xf32>, vector<16x16xf32> -> vector<16x16xf32>
    %c1_215 = arith.constant 1 : index
    %c0_216 = arith.constant 0 : index
    %c0_217 = arith.constant 0 : index
    %278 = vector.load %arg15[%c1_215, %c0_216, %c0_217] : memref<2x16x144xf32, #tpu.memory_space<vmem>>, vector<1x16x144xf32>
    %279 = vector.shape_cast %278 : vector<1x16x144xf32> to vector<16x144xf32>
    %cst_218 = arith.constant dense<0.000000e+00> : vector<16x144xf32>
    %280 = tpu.matmul %262, %279, %cst_218 {dimension_numbers = #tpu.dot_dimension_numbers<[1], [0], [0], [1], [0, 0, 1, 1], [], []>} : vector<16x16xf32>, vector<16x144xf32>, vector<16x144xf32> -> vector<16x144xf32>
    %c0_219 = arith.constant 0 : index
    %c0_220 = arith.constant 0 : index
    %281 = vector.load %arg4[%c0_219, %c0_220] : memref<16x144xf32, #tpu.memory_space<vmem>>, vector<16x144xf32>
    %282 = arith.mulf %280, %281 : vector<16x144xf32>
    %c0_221 = arith.constant 0 : index
    %c0_222 = arith.constant 0 : index
    %283 = vector.load %arg5[%c0_221, %c0_222] : memref<144x16xf32, #tpu.memory_space<vmem>>, vector<144x16xf32>
    %cst_223 = arith.constant dense<0.000000e+00> : vector<16x16xf32>
    %284 = tpu.matmul %282, %283, %cst_223 {dimension_numbers = #tpu.dot_dimension_numbers<[1], [0], [0], [1], [0, 0, 1, 1], [], []>} : vector<16x144xf32>, vector<144x16xf32>, vector<16x16xf32> -> vector<16x16xf32>
    %285 = arith.addf %277, %284 : vector<16x16xf32>
    %c0_224 = arith.constant 0 : index
    %c0_225 = arith.constant 0 : index
    %c0_226 = arith.constant 0 : index
    %286 = vector.load %arg3[%c0_224, %c0_225, %c0_226] : memref<1x16x16xf32, #tpu.memory_space<vmem>>, vector<1x16x16xf32>
    %287 = vector.shape_cast %286 : vector<1x16x16xf32> to vector<16x16xf32>
    %288 = arith.addf %285, %287 : vector<16x16xf32>
    %cst_227 = arith.constant dense<0xFF800000> : vector<16xf32>
    %289 = vector.multi_reduction <maximumf>, %288, %cst_227 [1] : vector<16x16xf32> to vector<16xf32>
    %290 = vector.shape_cast %289 : vector<16xf32> to vector<16x1xf32>
    %291 = vector.broadcast %290 : vector<16x1xf32> to vector<16x16xf32>
    %292 = arith.subf %288, %291 : vector<16x16xf32>
    %293 = math.exp %292 : vector<16x16xf32>
    %cst_228 = arith.constant dense<0.000000e+00> : vector<16xf32>
    %294 = vector.multi_reduction <add>, %293, %cst_228 [1] : vector<16x16xf32> to vector<16xf32>
    %295 = vector.shape_cast %294 : vector<16xf32> to vector<16x1xf32>
    %296 = tpu.reciprocal %295 {approx = true} : vector<16x1xf32> -> vector<16x1xf32>
    %297 = vector.broadcast %296 : vector<16x1xf32> to vector<16x16xf32>
    %298 = arith.mulf %293, %297 : vector<16x16xf32>
    %c0_229 = arith.constant 0 : index
    %c0_230 = arith.constant 0 : index
    %299 = vector.load %arg6[%c0_229, %c0_230] : memref<16x144xf32, #tpu.memory_space<vmem>>, vector<16x144xf32>
    %cst_231 = arith.constant dense<0.000000e+00> : vector<16x144xf32>
    %300 = tpu.matmul %298, %299, %cst_231 {dimension_numbers = #tpu.dot_dimension_numbers<[1], [0], [0], [1], [0, 0, 1, 1], [], []>} : vector<16x16xf32>, vector<16x144xf32>, vector<16x144xf32> -> vector<16x144xf32>
    %cst_232 = arith.constant dense<0.000000e+00> : vector<16x16xf32>
    %301 = tpu.matmul %298, %276, %cst_232 {dimension_numbers = #tpu.dot_dimension_numbers<[1], [0], [0], [1], [0, 0, 1, 1], [], []>} : vector<16x16xf32>, vector<16x16xf32>, vector<16x16xf32> -> vector<16x16xf32>
    %c0_233 = arith.constant 0 : index
    %c0_234 = arith.constant 0 : index
    %302 = vector.load %arg4[%c0_233, %c0_234] : memref<16x144xf32, #tpu.memory_space<vmem>>, vector<16x144xf32>
    %303 = arith.mulf %300, %302 : vector<16x144xf32>
    %c1_235 = arith.constant 1 : index
    %c0_236 = arith.constant 0 : index
    %c0_237 = arith.constant 0 : index
    %304 = vector.load %arg16[%c1_235, %c0_236, %c0_237] : memref<2x144x16xf32, #tpu.memory_space<vmem>>, vector<1x144x16xf32>
    %305 = vector.shape_cast %304 : vector<1x144x16xf32> to vector<144x16xf32>
    %cst_238 = arith.constant dense<0.000000e+00> : vector<16x16xf32>
    %306 = tpu.matmul %303, %305, %cst_238 {dimension_numbers = #tpu.dot_dimension_numbers<[1], [0], [0], [1], [0, 0, 1, 1], [], []>} : vector<16x144xf32>, vector<144x16xf32>, vector<16x16xf32> -> vector<16x16xf32>
    %307 = arith.addf %301, %306 : vector<16x16xf32>
    %c3_239 = arith.constant 3 : index
    %c0_240 = arith.constant 0 : index
    %c0_241 = arith.constant 0 : index
    %308 = vector.load %arg13[%c3_239, %c0_240, %c0_241] : memref<4x16x32xf32, #tpu.memory_space<vmem>>, vector<1x16x32xf32>
    %309 = vector.shape_cast %308 : vector<1x16x32xf32> to vector<16x32xf32>
    %cst_242 = arith.constant dense<0.000000e+00> : vector<16x32xf32>
    %310 = tpu.matmul %307, %309, %cst_242 {dimension_numbers = #tpu.dot_dimension_numbers<[1], [0], [0], [1], [0, 0, 1, 1], [], []>} : vector<16x16xf32>, vector<16x32xf32>, vector<16x32xf32> -> vector<16x32xf32>
    %311 = arith.addf %255, %310 : vector<16x32xf32>
    %c1_243 = arith.constant 1 : index
    %c0_244 = arith.constant 0 : index
    %c0_245 = arith.constant 0 : index
    %312 = vector.load %arg14[%c1_243, %c0_244, %c0_245] : memref<2x1x32xf32, #tpu.memory_space<vmem>>, vector<1x1x32xf32>
    %313 = vector.shape_cast %312 : vector<1x1x32xf32> to vector<1x32xf32>
    %314 = vector.broadcast %313 : vector<1x32xf32> to vector<16x32xf32>
    %315 = arith.addf %311, %314 : vector<16x32xf32>
    %316 = arith.addf %198, %315 : vector<16x32xf32>
    %c1_246 = arith.constant 1 : index
    %c0_247 = arith.constant 0 : index
    %c0_248 = arith.constant 0 : index
    %317 = vector.load %arg17[%c1_246, %c0_247, %c0_248] : memref<2x1x32xf32, #tpu.memory_space<vmem>>, vector<1x1x32xf32>
    %318 = vector.shape_cast %317 : vector<1x1x32xf32> to vector<1x32xf32>
    %c1_249 = arith.constant 1 : index
    %c0_250 = arith.constant 0 : index
    %c0_251 = arith.constant 0 : index
    %319 = vector.load %arg18[%c1_249, %c0_250, %c0_251] : memref<2x1x32xf32, #tpu.memory_space<vmem>>, vector<1x1x32xf32>
    %320 = vector.shape_cast %319 : vector<1x1x32xf32> to vector<1x32xf32>
    %cst_252 = arith.constant dense<0.000000e+00> : vector<16xf32>
    %321 = vector.multi_reduction <add>, %316, %cst_252 [1] : vector<16x32xf32> to vector<16xf32>
    %322 = vector.shape_cast %321 : vector<16xf32> to vector<16x1xf32>
    %cst_253 = arith.constant 3.200000e+01 : f32
    %323 = vector.broadcast %cst_253 : f32 to vector<16x1xf32>
    %324 = arith.divf %322, %323 : vector<16x1xf32>
    %325 = vector.broadcast %324 : vector<16x1xf32> to vector<16x32xf32>
    %326 = arith.subf %316, %325 : vector<16x32xf32>
    %327 = arith.mulf %326, %326 : vector<16x32xf32>
    %cst_254 = arith.constant dense<0.000000e+00> : vector<16xf32>
    %328 = vector.multi_reduction <add>, %327, %cst_254 [1] : vector<16x32xf32> to vector<16xf32>
    %329 = vector.shape_cast %328 : vector<16xf32> to vector<16x1xf32>
    %cst_255 = arith.constant 3.200000e+01 : f32
    %330 = vector.broadcast %cst_255 : f32 to vector<16x1xf32>
    %331 = arith.divf %329, %330 : vector<16x1xf32>
    %332 = vector.broadcast %324 : vector<16x1xf32> to vector<16x32xf32>
    %333 = arith.subf %316, %332 : vector<16x32xf32>
    %cst_256 = arith.constant 9.99999974E-6 : f32
    %334 = vector.broadcast %cst_256 : f32 to vector<16x1xf32>
    %335 = arith.addf %331, %334 : vector<16x1xf32>
    %336 = math.rsqrt %335 : vector<16x1xf32>
    %337 = vector.broadcast %336 : vector<16x1xf32> to vector<16x32xf32>
    %338 = arith.mulf %333, %337 : vector<16x32xf32>
    %339 = vector.broadcast %318 : vector<1x32xf32> to vector<16x32xf32>
    %340 = arith.mulf %338, %339 : vector<16x32xf32>
    %341 = vector.broadcast %320 : vector<1x32xf32> to vector<16x32xf32>
    %342 = arith.addf %340, %341 : vector<16x32xf32>
    %343 = vector.broadcast %3 : vector<16x1xf32> to vector<16x32xf32>
    %344 = arith.mulf %342, %343 : vector<16x32xf32>
    %c1_257 = arith.constant 1 : index
    %c0_258 = arith.constant 0 : index
    %c0_259 = arith.constant 0 : index
    %345 = vector.load %arg19[%c1_257, %c0_258, %c0_259] : memref<2x32x64xf32, #tpu.memory_space<vmem>>, vector<1x32x64xf32>
    %346 = vector.shape_cast %345 : vector<1x32x64xf32> to vector<32x64xf32>
    %cst_260 = arith.constant dense<0.000000e+00> : vector<16x64xf32>
    %347 = tpu.matmul %344, %346, %cst_260 {dimension_numbers = #tpu.dot_dimension_numbers<[1], [0], [0], [1], [0, 0, 1, 1], [], []>} : vector<16x32xf32>, vector<32x64xf32>, vector<16x64xf32> -> vector<16x64xf32>
    %c1_261 = arith.constant 1 : index
    %c0_262 = arith.constant 0 : index
    %c0_263 = arith.constant 0 : index
    %348 = vector.load %arg20[%c1_261, %c0_262, %c0_263] : memref<2x1x64xf32, #tpu.memory_space<vmem>>, vector<1x1x64xf32>
    %349 = vector.shape_cast %348 : vector<1x1x64xf32> to vector<1x64xf32>
    %350 = vector.broadcast %349 : vector<1x64xf32> to vector<16x64xf32>
    %351 = arith.addf %347, %350 : vector<16x64xf32>
    %cst_264 = arith.constant 0.000000e+00 : f32
    %352 = vector.broadcast %cst_264 : f32 to vector<16x64xf32>
    %353 = arith.maximumf %351, %352 : vector<16x64xf32>
    %354 = vector.broadcast %3 : vector<16x1xf32> to vector<16x64xf32>
    %355 = arith.mulf %353, %354 : vector<16x64xf32>
    %c1_265 = arith.constant 1 : index
    %c0_266 = arith.constant 0 : index
    %c0_267 = arith.constant 0 : index
    %356 = vector.load %arg21[%c1_265, %c0_266, %c0_267] : memref<2x64x32xf32, #tpu.memory_space<vmem>>, vector<1x64x32xf32>
    %357 = vector.shape_cast %356 : vector<1x64x32xf32> to vector<64x32xf32>
    %cst_268 = arith.constant dense<0.000000e+00> : vector<16x32xf32>
    %358 = tpu.matmul %355, %357, %cst_268 {dimension_numbers = #tpu.dot_dimension_numbers<[1], [0], [0], [1], [0, 0, 1, 1], [], []>} : vector<16x64xf32>, vector<64x32xf32>, vector<16x32xf32> -> vector<16x32xf32>
    %c1_269 = arith.constant 1 : index
    %c0_270 = arith.constant 0 : index
    %c0_271 = arith.constant 0 : index
    %359 = vector.load %arg22[%c1_269, %c0_270, %c0_271] : memref<2x1x32xf32, #tpu.memory_space<vmem>>, vector<1x1x32xf32>
    %360 = vector.shape_cast %359 : vector<1x1x32xf32> to vector<1x32xf32>
    %361 = vector.broadcast %360 : vector<1x32xf32> to vector<16x32xf32>
    %362 = arith.addf %358, %361 : vector<16x32xf32>
    %363 = vector.broadcast %3 : vector<16x1xf32> to vector<16x32xf32>
    %364 = arith.mulf %362, %363 : vector<16x32xf32>
    %365 = arith.addf %342, %364 : vector<16x32xf32>
    %c1_272 = arith.constant 1 : index
    %c0_273 = arith.constant 0 : index
    %c0_274 = arith.constant 0 : index
    %366 = vector.load %arg23[%c1_272, %c0_273, %c0_274] : memref<2x1x32xf32, #tpu.memory_space<vmem>>, vector<1x1x32xf32>
    %367 = vector.shape_cast %366 : vector<1x1x32xf32> to vector<1x32xf32>
    %c1_275 = arith.constant 1 : index
    %c0_276 = arith.constant 0 : index
    %c0_277 = arith.constant 0 : index
    %368 = vector.load %arg24[%c1_275, %c0_276, %c0_277] : memref<2x1x32xf32, #tpu.memory_space<vmem>>, vector<1x1x32xf32>
    %369 = vector.shape_cast %368 : vector<1x1x32xf32> to vector<1x32xf32>
    %cst_278 = arith.constant dense<0.000000e+00> : vector<16xf32>
    %370 = vector.multi_reduction <add>, %365, %cst_278 [1] : vector<16x32xf32> to vector<16xf32>
    %371 = vector.shape_cast %370 : vector<16xf32> to vector<16x1xf32>
    %cst_279 = arith.constant 3.200000e+01 : f32
    %372 = vector.broadcast %cst_279 : f32 to vector<16x1xf32>
    %373 = arith.divf %371, %372 : vector<16x1xf32>
    %374 = vector.broadcast %373 : vector<16x1xf32> to vector<16x32xf32>
    %375 = arith.subf %365, %374 : vector<16x32xf32>
    %376 = arith.mulf %375, %375 : vector<16x32xf32>
    %cst_280 = arith.constant dense<0.000000e+00> : vector<16xf32>
    %377 = vector.multi_reduction <add>, %376, %cst_280 [1] : vector<16x32xf32> to vector<16xf32>
    %378 = vector.shape_cast %377 : vector<16xf32> to vector<16x1xf32>
    %cst_281 = arith.constant 3.200000e+01 : f32
    %379 = vector.broadcast %cst_281 : f32 to vector<16x1xf32>
    %380 = arith.divf %378, %379 : vector<16x1xf32>
    %381 = vector.broadcast %373 : vector<16x1xf32> to vector<16x32xf32>
    %382 = arith.subf %365, %381 : vector<16x32xf32>
    %cst_282 = arith.constant 9.99999974E-6 : f32
    %383 = vector.broadcast %cst_282 : f32 to vector<16x1xf32>
    %384 = arith.addf %380, %383 : vector<16x1xf32>
    %385 = math.rsqrt %384 : vector<16x1xf32>
    %386 = vector.broadcast %385 : vector<16x1xf32> to vector<16x32xf32>
    %387 = arith.mulf %382, %386 : vector<16x32xf32>
    %388 = vector.broadcast %367 : vector<1x32xf32> to vector<16x32xf32>
    %389 = arith.mulf %387, %388 : vector<16x32xf32>
    %390 = vector.broadcast %369 : vector<1x32xf32> to vector<16x32xf32>
    %391 = arith.addf %389, %390 : vector<16x32xf32>
    %392 = vector.broadcast %3 : vector<16x1xf32> to vector<16x32xf32>
    %393 = arith.mulf %391, %392 : vector<16x32xf32>
    %c0_283 = arith.constant 0 : index
    %c0_284 = arith.constant 0 : index
    %c0_285 = arith.constant 0 : index
    %394 = vector.load %arg25[%c0_283, %c0_284, %c0_285] : memref<1x16x32xf32, #tpu.memory_space<vmem>>, vector<1x16x32xf32>
    %395 = vector.shape_cast %394 : vector<1x16x32xf32> to vector<16x32xf32>
    %396 = vector.shape_cast %393 : vector<16x32xf32> to vector<1x16x32xf32>
    tpu.vector_store %arg25[%c0_283, %c0_284, %c0_285], %396 {strides = array<i32>} : memref<1x16x32xf32, #tpu.memory_space<vmem>>, vector<1x16x32xf32>,
    return
  }
  func.func @transform_0(%arg0: i32) -> (i32, i32, i32) {
    %c0_i32 = arith.constant 0 : i32
    %c0_i32_0 = arith.constant 0 : i32
    %c0_i32_1 = arith.constant 0 : i32
    return %arg0, %c0_i32, %c0_i32_0 : i32, i32, i32
  }
  func.func @transform_1(%arg0: i32) -> (i32, i32, i32) {
    %c0_i32 = arith.constant 0 : i32
    %c0_i32_0 = arith.constant 0 : i32
    %c0_i32_1 = arith.constant 0 : i32
    return %arg0, %c0_i32, %c0_i32_0 : i32, i32, i32
  }
  func.func @transform_2(%arg0: i32) -> (i32, i32, i32) {
    %c0_i32 = arith.constant 0 : i32
    %c0_i32_0 = arith.constant 0 : i32
    %c0_i32_1 = arith.constant 0 : i32
    return %arg0, %c0_i32, %c0_i32_0 : i32, i32, i32
  }
  func.func @transform_3(%arg0: i32) -> (i32, i32) {
    %c0_i32 = arith.constant 0 : i32
    %c0_i32_0 = arith.constant 0 : i32
    %c0_i32_1 = arith.constant 0 : i32
    return %c0_i32, %c0_i32_0 : i32, i32
  }
  func.func @transform_4(%arg0: i32) -> (i32, i32) {
    %c0_i32 = arith.constant 0 : i32
    %c0_i32_0 = arith.constant 0 : i32
    %c0_i32_1 = arith.constant 0 : i32
    return %c0_i32, %c0_i32_0 : i32, i32
  }
  func.func @transform_5(%arg0: i32) -> (i32, i32) {
    %c0_i32 = arith.constant 0 : i32
    %c0_i32_0 = arith.constant 0 : i32
    %c0_i32_1 = arith.constant 0 : i32
    return %c0_i32, %c0_i32_0 : i32, i32
  }
  func.func @transform_6(%arg0: i32) -> (i32, i32, i32) {
    %c0_i32 = arith.constant 0 : i32
    %c0_i32_0 = arith.constant 0 : i32
    %c0_i32_1 = arith.constant 0 : i32
    %c0_i32_2 = arith.constant 0 : i32
    return %c0_i32, %c0_i32_0, %c0_i32_1 : i32, i32, i32
  }
  func.func @transform_7(%arg0: i32) -> (i32, i32, i32) {
    %c0_i32 = arith.constant 0 : i32
    %c0_i32_0 = arith.constant 0 : i32
    %c0_i32_1 = arith.constant 0 : i32
    %c0_i32_2 = arith.constant 0 : i32
    return %c0_i32, %c0_i32_0, %c0_i32_1 : i32, i32, i32
  }
  func.func @transform_8(%arg0: i32) -> (i32, i32, i32) {
    %c0_i32 = arith.constant 0 : i32
    %c0_i32_0 = arith.constant 0 : i32
    %c0_i32_1 = arith.constant 0 : i32
    %c0_i32_2 = arith.constant 0 : i32
    return %c0_i32, %c0_i32_0, %c0_i32_1 : i32, i32, i32
  }
  func.func @transform_9(%arg0: i32) -> (i32, i32, i32) {
    %c0_i32 = arith.constant 0 : i32
    %c0_i32_0 = arith.constant 0 : i32
    %c0_i32_1 = arith.constant 0 : i32
    %c0_i32_2 = arith.constant 0 : i32
    return %c0_i32, %c0_i32_0, %c0_i32_1 : i32, i32, i32
  }
  func.func @transform_10(%arg0: i32) -> (i32, i32, i32) {
    %c0_i32 = arith.constant 0 : i32
    %c0_i32_0 = arith.constant 0 : i32
    %c0_i32_1 = arith.constant 0 : i32
    %c0_i32_2 = arith.constant 0 : i32
    return %c0_i32, %c0_i32_0, %c0_i32_1 : i32, i32, i32
  }
  func.func @transform_11(%arg0: i32) -> (i32, i32, i32) {
    %c0_i32 = arith.constant 0 : i32
    %c0_i32_0 = arith.constant 0 : i32
    %c0_i32_1 = arith.constant 0 : i32
    %c0_i32_2 = arith.constant 0 : i32
    return %c0_i32, %c0_i32_0, %c0_i32_1 : i32, i32, i32
  }
  func.func @transform_12(%arg0: i32) -> (i32, i32, i32) {
    %c0_i32 = arith.constant 0 : i32
    %c0_i32_0 = arith.constant 0 : i32
    %c0_i32_1 = arith.constant 0 : i32
    %c0_i32_2 = arith.constant 0 : i32
    return %c0_i32, %c0_i32_0, %c0_i32_1 : i32, i32, i32
  }
  func.func @transform_13(%arg0: i32) -> (i32, i32, i32) {
    %c0_i32 = arith.constant 0 : i32
    %c0_i32_0 = arith.constant 0 : i32
    %c0_i32_1 = arith.constant 0 : i32
    %c0_i32_2 = arith.constant 0 : i32
    return %c0_i32, %c0_i32_0, %c0_i32_1 : i32, i32, i32
  }
  func.func @transform_14(%arg0: i32) -> (i32, i32, i32) {
    %c0_i32 = arith.constant 0 : i32
    %c0_i32_0 = arith.constant 0 : i32
    %c0_i32_1 = arith.constant 0 : i32
    %c0_i32_2 = arith.constant 0 : i32
    return %c0_i32, %c0_i32_0, %c0_i32_1 : i32, i32, i32
  }
  func.func @transform_15(%arg0: i32) -> (i32, i32, i32) {
    %c0_i32 = arith.constant 0 : i32
    %c0_i32_0 = arith.constant 0 : i32
    %c0_i32_1 = arith.constant 0 : i32
    %c0_i32_2 = arith.constant 0 : i32
    return %c0_i32, %c0_i32_0, %c0_i32_1 : i32, i32, i32
  }
  func.func @transform_16(%arg0: i32) -> (i32, i32, i32) {
    %c0_i32 = arith.constant 0 : i32
    %c0_i32_0 = arith.constant 0 : i32
    %c0_i32_1 = arith.constant 0 : i32
    %c0_i32_2 = arith.constant 0 : i32
    return %c0_i32, %c0_i32_0, %c0_i32_1 : i32, i32, i32
  }
  func.func @transform_17(%arg0: i32) -> (i32, i32, i32) {
    %c0_i32 = arith.constant 0 : i32
    %c0_i32_0 = arith.constant 0 : i32
    %c0_i32_1 = arith.constant 0 : i32
    %c0_i32_2 = arith.constant 0 : i32
    return %c0_i32, %c0_i32_0, %c0_i32_1 : i32, i32, i32
  }
  func.func @transform_18(%arg0: i32) -> (i32, i32, i32) {
    %c0_i32 = arith.constant 0 : i32
    %c0_i32_0 = arith.constant 0 : i32
    %c0_i32_1 = arith.constant 0 : i32
    %c0_i32_2 = arith.constant 0 : i32
    return %c0_i32, %c0_i32_0, %c0_i32_1 : i32, i32, i32
  }
  func.func @transform_19(%arg0: i32) -> (i32, i32, i32) {
    %c0_i32 = arith.constant 0 : i32
    %c0_i32_0 = arith.constant 0 : i32
    %c0_i32_1 = arith.constant 0 : i32
    %c0_i32_2 = arith.constant 0 : i32
    return %c0_i32, %c0_i32_0, %c0_i32_1 : i32, i32, i32
  }
  func.func @transform_20(%arg0: i32) -> (i32, i32, i32) {
    %c0_i32 = arith.constant 0 : i32
    %c0_i32_0 = arith.constant 0 : i32
    %c0_i32_1 = arith.constant 0 : i32
    %c0_i32_2 = arith.constant 0 : i32
    return %c0_i32, %c0_i32_0, %c0_i32_1 : i32, i32, i32
  }
  func.func @transform_21(%arg0: i32) -> (i32, i32, i32) {
    %c0_i32 = arith.constant 0 : i32
    %c0_i32_0 = arith.constant 0 : i32
    %c0_i32_1 = arith.constant 0 : i32
    %c0_i32_2 = arith.constant 0 : i32
    return %c0_i32, %c0_i32_0, %c0_i32_1 : i32, i32, i32
  }
  func.func @transform_22(%arg0: i32) -> (i32, i32, i32) {
    %c0_i32 = arith.constant 0 : i32
    %c0_i32_0 = arith.constant 0 : i32
    %c0_i32_1 = arith.constant 0 : i32
    %c0_i32_2 = arith.constant 0 : i32
    return %c0_i32, %c0_i32_0, %c0_i32_1 : i32, i32, i32
  }
  func.func @transform_23(%arg0: i32) -> (i32, i32, i32) {
    %c0_i32 = arith.constant 0 : i32
    %c0_i32_0 = arith.constant 0 : i32
    %c0_i32_1 = arith.constant 0 : i32
    %c0_i32_2 = arith.constant 0 : i32
    return %c0_i32, %c0_i32_0, %c0_i32_1 : i32, i32, i32
  }
  func.func @transform_24(%arg0: i32) -> (i32, i32, i32) {
    %c0_i32 = arith.constant 0 : i32
    %c0_i32_0 = arith.constant 0 : i32
    %c0_i32_1 = arith.constant 0 : i32
    return %arg0, %c0_i32, %c0_i32_0 : i32, i32, i32
  }
}

</mosaic_0001>

<llo_original>
// kernel: tpu_custom_call.1
$region0: #{tpu_custom_call.1}
  #allocation0 [shape = 'u32[]', space=smem, size = 0x4, offset = 0x4, fixed_abs, tag = 'smem constant byte address 0x4 - core index']
  #allocation1 [shape = 'u32[72,128]{1,0:T(1,128)}', space=vmem, size = 0x9000, scoped, tag = 'internal scratch']
  %s0 = inlined_call_operand.vmem [shape: f32[2,16,32], index: 0, kind: input, shape index: {}]
  %s1 = inlined_call_operand.vmem [shape: f32[2,16,1], index: 1, kind: input, shape index: {}]
  %s2 = inlined_call_operand.vmem [shape: f32[2,16,16], index: 2, kind: input, shape index: {}]
  %s3 = inlined_call_operand.vmem [shape: f32[16,144], index: 3, kind: input, shape index: {}]
  %s4 = inlined_call_operand.vmem [shape: f32[144,16], index: 4, kind: input, shape index: {}]
  %s5 = inlined_call_operand.vmem [shape: f32[16,144], index: 5, kind: input, shape index: {}]
  %s6 = inlined_call_operand.vmem [shape: f32[4,32,16], index: 6, kind: input, shape index: {}]
  %s7 = inlined_call_operand.vmem [shape: f32[4,1,16], index: 7, kind: input, shape index: {}]
  %s8 = inlined_call_operand.vmem [shape: f32[4,32,16], index: 8, kind: input, shape index: {}]
  %s9 = inlined_call_operand.vmem [shape: f32[4,1,16], index: 9, kind: input, shape index: {}]
  %s10 = inlined_call_operand.vmem [shape: f32[4,32,16], index: 10, kind: input, shape index: {}]
  %s11 = inlined_call_operand.vmem [shape: f32[4,1,16], index: 11, kind: input, shape index: {}]
  %s12 = inlined_call_operand.vmem [shape: f32[4,16,32], index: 12, kind: input, shape index: {}]
  %s13 = inlined_call_operand.vmem [shape: f32[2,1,32], index: 13, kind: input, shape index: {}]
  %s14 = inlined_call_operand.vmem [shape: f32[2,16,144], index: 14, kind: input, shape index: {}]
  %s15 = inlined_call_operand.vmem [shape: f32[2,144,16], index: 15, kind: input, shape index: {}]
  %s16 = inlined_call_operand.vmem [shape: f32[2,1,32], index: 16, kind: input, shape index: {}]
  %s17 = inlined_call_operand.vmem [shape: f32[2,1,32], index: 17, kind: input, shape index: {}]
  %s18 = inlined_call_operand.vmem [shape: f32[2,32,64], index: 18, kind: input, shape index: {}]
  %s19 = inlined_call_operand.vmem [shape: f32[2,1,64], index: 19, kind: input, shape index: {}]
  %s20 = inlined_call_operand.vmem [shape: f32[2,64,32], index: 20, kind: input, shape index: {}]
  %s21 = inlined_call_operand.vmem [shape: f32[2,1,32], index: 21, kind: input, shape index: {}]
  %s22 = inlined_call_operand.vmem [shape: f32[2,1,32], index: 22, kind: input, shape index: {}]
  %s23 = inlined_call_operand.vmem [shape: f32[2,1,32], index: 23, kind: input, shape index: {}]
  %s24 = inlined_call_operand.hbm [shape: f32[2,16,32], index: 24, kind: output, shape index: {}]
  %s25 = sld [smem:[#allocation0]]
  $region129: #{tpu_custom_call.1} parent=0
    _
  %s27 = ssub.s32 1, %s25
  %s28 = scalar_select 0, %s27, %s25
  $region1: #{tpu_custom_call.1} parent=0
    #allocation2 [shape = 'u8[16384]{0}', space=vmem, size = 0x4000, scoped, tag = 'output window, operand 0']
    #allocation3 [shape = 's32[2]{0}', space=sflag, size = 0x8, scoped, tag = 'scoped memory for tpu_custom_call.1']
    %29 = vsyncpa [#allocation3], 0
    %s30 = scalar_lea.sflag [#allocation3], 1
    %31 = vsyncpa %s30, 0
    loop: start=0, step=1, limit=4
    $region2: #{tpu_custom_call.1} parent=1 // loop_pre_header
      _
    $region3: #{tpu_custom_call.1} parent=1 // loop_header
      %s33 = sphi 0, %s37
      %p34 = scmp.ge.s32.totalorder %s33, 4
      %s43 = sphi 0, %s45
      %s46 = sphi 0, %s43
      %s47 = sphi 0, %s46
      %s63 = sphi 0, %s47
      %s69 = sphi 0, %s71
      %s72 = sphi 0, %s69
      %s73 = sphi 0, %s72
      %s89 = sphi 0, %s73
      %s95 = sphi 0, %s97
      %s98 = sphi 0, %s95
      %s99 = sphi 0, %s98
      %s115 = sphi 0, %s99
      %s119 = sphi 0, %s119
      %s121 = sphi 0, %s119
      %s122 = sphi 0, %s121
      %s136 = sphi 0, %s122
      %s140 = sphi 0, %s140
      %s142 = sphi 0, %s140
      %s143 = sphi 0, %s142
      %s157 = sphi 0, %s143
      %s161 = sphi 0, %s161
      %s163 = sphi 0, %s161
      %s164 = sphi 0, %s163
      %s178 = sphi 0, %s164
      %s182 = sphi 0, %s182
      %s184 = sphi 0, %s182
      %s185 = sphi 0, %s184
      %s199 = sphi 0, %s185
      %s203 = sphi 0, %s203
      %s205 = sphi 0, %s203
      %s206 = sphi 0, %s205
      %s220 = sphi 0, %s206
      %s224 = sphi 0, %s224
      %s226 = sphi 0, %s224
      %s227 = sphi 0, %s226
      %s241 = sphi 0, %s227
      %s245 = sphi 0, %s245
      %s247 = sphi 0, %s245
      %s248 = sphi 0, %s247
      %s262 = sphi 0, %s248
      %s266 = sphi 0, %s266
      %s268 = sphi 0, %s266
      %s269 = sphi 0, %s268
      %s283 = sphi 0, %s269
      %s287 = sphi 0, %s287
      %s289 = sphi 0, %s287
      %s290 = sphi 0, %s289
      %s304 = sphi 0, %s290
      %s308 = sphi 0, %s308
      %s310 = sphi 0, %s308
      %s311 = sphi 0, %s310
      %s325 = sphi 0, %s311
      %s329 = sphi 0, %s329
      %s331 = sphi 0, %s329
      %s332 = sphi 0, %s331
      %s346 = sphi 0, %s332
      %s350 = sphi 0, %s350
      %s352 = sphi 0, %s350
      %s353 = sphi 0, %s352
      %s367 = sphi 0, %s353
      %s371 = sphi 0, %s371
      %s373 = sphi 0, %s371
      %s374 = sphi 0, %s373
      %s388 = sphi 0, %s374
      %s392 = sphi 0, %s392
      %s394 = sphi 0, %s392
      %s395 = sphi 0, %s394
      %s409 = sphi 0, %s395
      %s413 = sphi 0, %s413
      %s415 = sphi 0, %s413
      %s416 = sphi 0, %s415
      %s430 = sphi 0, %s416
      %s434 = sphi 0, %s434
      %s436 = sphi 0, %s434
      %s437 = sphi 0, %s436
      %s451 = sphi 0, %s437
      %s455 = sphi 0, %s455
      %s457 = sphi 0, %s455
      %s458 = sphi 0, %s457
      %s472 = sphi 0, %s458
      %s476 = sphi 0, %s476
      %s478 = sphi 0, %s476
      %s479 = sphi 0, %s478
      %s493 = sphi 0, %s479
      %s497 = sphi 0, %s497
      %s499 = sphi 0, %s497
      %s500 = sphi 0, %s499
      %s514 = sphi 0, %s500
      %s518 = sphi 0, %s518
      %s520 = sphi 0, %s518
      %s521 = sphi 0, %s520
      %s535 = sphi 0, %s521
      %s539 = sphi 0, %s539
      %s541 = sphi 0, %s539
      %s542 = sphi 0, %s541
      %s556 = sphi 0, %s542
      %s562 = sphi 0, %s564
      %s565 = sphi 0, %s562
      %s566 = sphi 0, %s565
      %s582 = sphi 0, %s566
    $region4: #{tpu_custom_call.1} parent=1 // loop_header_branch
      %36 = sbr.rel (%p34) target = $region8
    $region5: #{tpu_custom_call.1} parent=1 // loop_body
      %s38 = ssub.s32 %s33, 1
      %s39 = ssub.s32 %s33, 2
      %s40 = sadd.s32 %s33, 1
      %s41 = ssub.s32 %s33, %s40
      %p42 = scmp.eq.s32.totalorder %s41, 0
      %s44 = sadd.s32 %s43, 1
      %s45 = scalar_select %p42, %s43, %s44
      %p48 = pneg %p42
      %p49 = scmp.eq.s32.totalorder %s33, 1
      %p50 = por %p48, %p49
      %p51 = scmp.ne.s32.totalorder %s43, %s46
      %p52 = scmp.eq.s32.totalorder %s33, 0
      %p53 = por %p51, %p52
      %p54 = scmp.ne.s32.totalorder %s43, %s46
      %p55 = scmp.eq.s32.totalorder %s38, 1
      %p56 = por %p54, %p55
      %p57 = scmp.ne.s32.totalorder %s46, %s47
      %p58 = scmp.eq.s32.totalorder %s38, 0
      %p59 = por %p57, %p58
      %p60 = scmp.ne.s32.totalorder %s46, %s47
      %p61 = scmp.eq.s32.totalorder %s39, 1
      %p62 = por %p60, %p61
      %p64 = scmp.ne.s32.totalorder %s47, %s63
      %p65 = scmp.eq.s32.totalorder %s39, 0
      %p66 = por %p64, %p65
      %s67 = ssub.s32 %s33, %s40
      %p68 = scmp.eq.s32.totalorder %s67, 0
      %s70 = sadd.s32 %s69, 1
      %s71 = scalar_select %p68, %s69, %s70
      %p74 = pneg %p68
      %p75 = scmp.eq.s32.totalorder %s33, 1
      %p76 = por %p74, %p75
      %p77 = scmp.ne.s32.totalorder %s69, %s72
      %p78 = scmp.eq.s32.totalorder %s33, 0
      %p79 = por %p77, %p78
      %p80 = scmp.ne.s32.totalorder %s69, %s72
      %p81 = scmp.eq.s32.totalorder %s38, 1
      %p82 = por %p80, %p81
      %p83 = scmp.ne.s32.totalorder %s72, %s73
      %p84 = scmp.eq.s32.totalorder %s38, 0
      %p85 = por %p83, %p84
      %p86 = scmp.ne.s32.totalorder %s72, %s73
      %p87 = scmp.eq.s32.totalorder %s39, 1
      %p88 = por %p86, %p87
      %p90 = scmp.ne.s32.totalorder %s73, %s89
      %p91 = scmp.eq.s32.totalorder %s39, 0
      %p92 = por %p90, %p91
      %s93 = ssub.s32 %s33, %s40
      %p94 = scmp.eq.s32.totalorder %s93, 0
      %s96 = sadd.s32 %s95, 1
      %s97 = scalar_select %p94, %s95, %s96
      %p100 = pneg %p94
      %p101 = scmp.eq.s32.totalorder %s33, 1
      %p102 = por %p100, %p101
      %p103 = scmp.ne.s32.totalorder %s95, %s98
      %p104 = scmp.eq.s32.totalorder %s33, 0
      %p105 = por %p103, %p104
      %p106 = scmp.ne.s32.totalorder %s95, %s98
      %p107 = scmp.eq.s32.totalorder %s38, 1
      %p108 = por %p106, %p107
      %p109 = scmp.ne.s32.totalorder %s98, %s99
      %p110 = scmp.eq.s32.totalorder %s38, 0
      %p111 = por %p109, %p110
      %p112 = scmp.ne.s32.totalorder %s98, %s99
      %p113 = scmp.eq.s32.totalorder %s39, 1
      %p114 = por %p112, %p113
      %p116 = scmp.ne.s32.totalorder %s99, %s115
      %p117 = scmp.eq.s32.totalorder %s39, 0
      %p118 = por %p116, %p117
      %s120 = sadd.s32 %s119, 1
      %p123 = scmp.eq.s32.totalorder %s33, 1
      %p124 = scmp.ne.s32.totalorder %s119, %s121
      %p125 = scmp.eq.s32.totalorder %s33, 0
      %p126 = por %p124, %p125
      %p127 = scmp.ne.s32.totalorder %s119, %s121
      %p128 = scmp.eq.s32.totalorder %s38, 1
      %p129 = por %p127, %p128
      %p130 = scmp.ne.s32.totalorder %s121, %s122
      %p131 = scmp.eq.s32.totalorder %s38, 0
      %p132 = por %p130, %p131
      %p133 = scmp.ne.s32.totalorder %s121, %s122
      %p134 = scmp.eq.s32.totalorder %s39, 1
      %p135 = por %p133, %p134
      %p137 = scmp.ne.s32.totalorder %s122, %s136
      %p138 = scmp.eq.s32.totalorder %s39, 0
      %p139 = por %p137, %p138
      %s141 = sadd.s32 %s140, 1
      %p144 = scmp.eq.s32.totalorder %s33, 1
      %p145 = scmp.ne.s32.totalorder %s140, %s142
      %p146 = scmp.eq.s32.totalorder %s33, 0
      %p147 = por %p145, %p146
      %p148 = scmp.ne.s32.totalorder %s140, %s142
      %p149 = scmp.eq.s32.totalorder %s38, 1
      %p150 = por %p148, %p149
      %p151 = scmp.ne.s32.totalorder %s142, %s143
      %p152 = scmp.eq.s32.totalorder %s38, 0
      %p153 = por %p151, %p152
      %p154 = scmp.ne.s32.totalorder %s142, %s143
      %p155 = scmp.eq.s32.totalorder %s39, 1
      %p156 = por %p154, %p155
      %p158 = scmp.ne.s32.totalorder %s143, %s157
      %p159 = scmp.eq.s32.totalorder %s39, 0
      %p160 = por %p158, %p159
      %s162 = sadd.s32 %s161, 1
      %p165 = scmp.eq.s32.totalorder %s33, 1
      %p166 = scmp.ne.s32.totalorder %s161, %s163
      %p167 = scmp.eq.s32.totalorder %s33, 0
      %p168 = por %p166, %p167
      %p169 = scmp.ne.s32.totalorder %s161, %s163
      %p170 = scmp.eq.s32.totalorder %s38, 1
      %p171 = por %p169, %p170
      %p172 = scmp.ne.s32.totalorder %s163, %s164
      %p173 = scmp.eq.s32.totalorder %s38, 0
      %p174 = por %p172, %p173
      %p175 = scmp.ne.s32.totalorder %s163, %s164
      %p176 = scmp.eq.s32.totalorder %s39, 1
      %p177 = por %p175, %p176
      %p179 = scmp.ne.s32.totalorder %s164, %s178
      %p180 = scmp.eq.s32.totalorder %s39, 0
      %p181 = por %p179, %p180
      %s183 = sadd.s32 %s182, 1
      %p186 = scmp.eq.s32.totalorder %s33, 1
      %p187 = scmp.ne.s32.totalorder %s182, %s184
      %p188 = scmp.eq.s32.totalorder %s33, 0
      %p189 = por %p187, %p188
      %p190 = scmp.ne.s32.totalorder %s182, %s184
      %p191 = scmp.eq.s32.totalorder %s38, 1
      %p192 = por %p190, %p191
      %p193 = scmp.ne.s32.totalorder %s184, %s185
      %p194 = scmp.eq.s32.totalorder %s38, 0
      %p195 = por %p193, %p194
      %p196 = scmp.ne.s32.totalorder %s184, %s185
      %p197 = scmp.eq.s32.totalorder %s39, 1
      %p198 = por %p196, %p197
      %p200 = scmp.ne.s32.totalorder %s185, %s199
      %p201 = scmp.eq.s32.totalorder %s39, 0
      %p202 = por %p200, %p201
      %s204 = sadd.s32 %s203, 1
      %p207 = scmp.eq.s32.totalorder %s33, 1
      %p208 = scmp.ne.s32.totalorder %s203, %s205
      %p209 = scmp.eq.s32.totalorder %s33, 0
      %p210 = por %p208, %p209
      %p211 = scmp.ne.s32.totalorder %s203, %s205
      %p212 = scmp.eq.s32.totalorder %s38, 1
      %p213 = por %p211, %p212
      %p214 = scmp.ne.s32.totalorder %s205, %s206
      %p215 = scmp.eq.s32.totalorder %s38, 0
      %p216 = por %p214, %p215
      %p217 = scmp.ne.s32.totalorder %s205, %s206
      %p218 = scmp.eq.s32.totalorder %s39, 1
      %p219 = por %p217, %p218
      %p221 = scmp.ne.s32.totalorder %s206, %s220
      %p222 = scmp.eq.s32.totalorder %s39, 0
      %p223 = por %p221, %p222
      %s225 = sadd.s32 %s224, 1
      %p228 = scmp.eq.s32.totalorder %s33, 1
      %p229 = scmp.ne.s32.totalorder %s224, %s226
      %p230 = scmp.eq.s32.totalorder %s33, 0
      %p231 = por %p229, %p230
      %p232 = scmp.ne.s32.totalorder %s224, %s226
      %p233 = scmp.eq.s32.totalorder %s38, 1
      %p234 = por %p232, %p233
      %p235 = scmp.ne.s32.totalorder %s226, %s227
      %p236 = scmp.eq.s32.totalorder %s38, 0
      %p237 = por %p235, %p236
      %p238 = scmp.ne.s32.totalorder %s226, %s227
      %p239 = scmp.eq.s32.totalorder %s39, 1
      %p240 = por %p238, %p239
      %p242 = scmp.ne.s32.totalorder %s227, %s241
      %p243 = scmp.eq.s32.totalorder %s39, 0
      %p244 = por %p242, %p243
      %s246 = sadd.s32 %s245, 1
      %p249 = scmp.eq.s32.totalorder %s33, 1
      %p250 = scmp.ne.s32.totalorder %s245, %s247
      %p251 = scmp.eq.s32.totalorder %s33, 0
      %p252 = por %p250, %p251
      %p253 = scmp.ne.s32.totalorder %s245, %s247
      %p254 = scmp.eq.s32.totalorder %s38, 1
      %p255 = por %p253, %p254
      %p256 = scmp.ne.s32.totalorder %s247, %s248
      %p257 = scmp.eq.s32.totalorder %s38, 0
      %p258 = por %p256, %p257
      %p259 = scmp.ne.s32.totalorder %s247, %s248
      %p260 = scmp.eq.s32.totalorder %s39, 1
      %p261 = por %p259, %p260
      %p263 = scmp.ne.s32.totalorder %s248, %s262
      %p264 = scmp.eq.s32.totalorder %s39, 0
      %p265 = por %p263, %p264
      %s267 = sadd.s32 %s266, 1
      %p270 = scmp.eq.s32.totalorder %s33, 1
      %p271 = scmp.ne.s32.totalorder %s266, %s268
      %p272 = scmp.eq.s32.totalorder %s33, 0
      %p273 = por %p271, %p272
      %p274 = scmp.ne.s32.totalorder %s266, %s268
      %p275 = scmp.eq.s32.totalorder %s38, 1
      %p276 = por %p274, %p275
      %p277 = scmp.ne.s32.totalorder %s268, %s269
      %p278 = scmp.eq.s32.totalorder %s38, 0
      %p279 = por %p277, %p278
      %p280 = scmp.ne.s32.totalorder %s268, %s269
      %p281 = scmp.eq.s32.totalorder %s39, 1
      %p282 = por %p280, %p281
      %p284 = scmp.ne.s32.totalorder %s269, %s283
      %p285 = scmp.eq.s32.totalorder %s39, 0
      %p286 = por %p284, %p285
      %s288 = sadd.s32 %s287, 1
      %p291 = scmp.eq.s32.totalorder %s33, 1
      %p292 = scmp.ne.s32.totalorder %s287, %s289
      %p293 = scmp.eq.s32.totalorder %s33, 0
      %p294 = por %p292, %p293
      %p295 = scmp.ne.s32.totalorder %s287, %s289
      %p296 = scmp.eq.s32.totalorder %s38, 1
      %p297 = por %p295, %p296
      %p298 = scmp.ne.s32.totalorder %s289, %s290
      %p299 = scmp.eq.s32.totalorder %s38, 0
      %p300 = por %p298, %p299
      %p301 = scmp.ne.s32.totalorder %s289, %s290
      %p302 = scmp.eq.s32.totalorder %s39, 1
      %p303 = por %p301, %p302
      %p305 = scmp.ne.s32.totalorder %s290, %s304
      %p306 = scmp.eq.s32.totalorder %s39, 0
      %p307 = por %p305, %p306
      %s309 = sadd.s32 %s308, 1
      %p312 = scmp.eq.s32.totalorder %s33, 1
      %p313 = scmp.ne.s32.totalorder %s308, %s310
      %p314 = scmp.eq.s32.totalorder %s33, 0
      %p315 = por %p313, %p314
      %p316 = scmp.ne.s32.totalorder %s308, %s310
      %p317 = scmp.eq.s32.totalorder %s38, 1
      %p318 = por %p316, %p317
      %p319 = scmp.ne.s32.totalorder %s310, %s311
      %p320 = scmp.eq.s32.totalorder %s38, 0
      %p321 = por %p319, %p320
      %p322 = scmp.ne.s32.totalorder %s310, %s311
      %p323 = scmp.eq.s32.totalorder %s39, 1
      %p324 = por %p322, %p323
      %p326 = scmp.ne.s32.totalorder %s311, %s325
      %p327 = scmp.eq.s32.totalorder %s39, 0
      %p328 = por %p326, %p327
      %s330 = sadd.s32 %s329, 1
      %p333 = scmp.eq.s32.totalorder %s33, 1
      %p334 = scmp.ne.s32.totalorder %s329, %s331
      %p335 = scmp.eq.s32.totalorder %s33, 0
      %p336 = por %p334, %p335
      %p337 = scmp.ne.s32.totalorder %s329, %s331
      %p338 = scmp.eq.s32.totalorder %s38, 1
      %p339 = por %p337, %p338
      %p340 = scmp.ne.s32.totalorder %s331, %s332
      %p341 = scmp.eq.s32.totalorder %s38, 0
      %p342 = por %p340, %p341
      %p343 = scmp.ne.s32.totalorder %s331, %s332
      %p344 = scmp.eq.s32.totalorder %s39, 1
      %p345 = por %p343, %p344
      %p347 = scmp.ne.s32.totalorder %s332, %s346
      %p348 = scmp.eq.s32.totalorder %s39, 0
      %p349 = por %p347, %p348
      %s351 = sadd.s32 %s350, 1
      %p354 = scmp.eq.s32.totalorder %s33, 1
      %p355 = scmp.ne.s32.totalorder %s350, %s352
      %p356 = scmp.eq.s32.totalorder %s33, 0
      %p357 = por %p355, %p356
      %p358 = scmp.ne.s32.totalorder %s350, %s352
      %p359 = scmp.eq.s32.totalorder %s38, 1
      %p360 = por %p358, %p359
      %p361 = scmp.ne.s32.totalorder %s352, %s353
      %p362 = scmp.eq.s32.totalorder %s38, 0
      %p363 = por %p361, %p362
      %p364 = scmp.ne.s32.totalorder %s352, %s353
      %p365 = scmp.eq.s32.totalorder %s39, 1
      %p366 = por %p364, %p365
      %p368 = scmp.ne.s32.totalorder %s353, %s367
      %p369 = scmp.eq.s32.totalorder %s39, 0
      %p370 = por %p368, %p369
      %s372 = sadd.s32 %s371, 1
      %p375 = scmp.eq.s32.totalorder %s33, 1
      %p376 = scmp.ne.s32.totalorder %s371, %s373
      %p377 = scmp.eq.s32.totalorder %s33, 0
      %p378 = por %p376, %p377
      %p379 = scmp.ne.s32.totalorder %s371, %s373
      %p380 = scmp.eq.s32.totalorder %s38, 1
      %p381 = por %p379, %p380
      %p382 = scmp.ne.s32.totalorder %s373, %s374
      %p383 = scmp.eq.s32.totalorder %s38, 0
      %p384 = por %p382, %p383
      %p385 = scmp.ne.s32.totalorder %s373, %s374
      %p386 = scmp.eq.s32.totalorder %s39, 1
      %p387 = por %p385, %p386
      %p389 = scmp.ne.s32.totalorder %s374, %s388
      %p390 = scmp.eq.s32.totalorder %s39, 0
      %p391 = por %p389, %p390
      %s393 = sadd.s32 %s392, 1
      %p396 = scmp.eq.s32.totalorder %s33, 1
      %p397 = scmp.ne.s32.totalorder %s392, %s394
      %p398 = scmp.eq.s32.totalorder %s33, 0
      %p399 = por %p397, %p398
      %p400 = scmp.ne.s32.totalorder %s392, %s394
      %p401 = scmp.eq.s32.totalorder %s38, 1
      %p402 = por %p400, %p401
      %p403 = scmp.ne.s32.totalorder %s394, %s395
      %p404 = scmp.eq.s32.totalorder %s38, 0
      %p405 = por %p403, %p404
      %p406 = scmp.ne.s32.totalorder %s394, %s395
      %p407 = scmp.eq.s32.totalorder %s39, 1
      %p408 = por %p406, %p407
      %p410 = scmp.ne.s32.totalorder %s395, %s409
      %p411 = scmp.eq.s32.totalorder %s39, 0
      %p412 = por %p410, %p411
      %s414 = sadd.s32 %s413, 1
      %p417 = scmp.eq.s32.totalorder %s33, 1
      %p418 = scmp.ne.s32.totalorder %s413, %s415
      %p419 = scmp.eq.s32.totalorder %s33, 0
      %p420 = por %p418, %p419
      %p421 = scmp.ne.s32.totalorder %s413, %s415
      %p422 = scmp.eq.s32.totalorder %s38, 1
      %p423 = por %p421, %p422
      %p424 = scmp.ne.s32.totalorder %s415, %s416
      %p425 = scmp.eq.s32.totalorder %s38, 0
      %p426 = por %p424, %p425
      %p427 = scmp.ne.s32.totalorder %s415, %s416
      %p428 = scmp.eq.s32.totalorder %s39, 1
      %p429 = por %p427, %p428
      %p431 = scmp.ne.s32.totalorder %s416, %s430
      %p432 = scmp.eq.s32.totalorder %s39, 0
      %p433 = por %p431, %p432
      %s435 = sadd.s32 %s434, 1
      %p438 = scmp.eq.s32.totalorder %s33, 1
      %p439 = scmp.ne.s32.totalorder %s434, %s436
      %p440 = scmp.eq.s32.totalorder %s33, 0
      %p441 = por %p439, %p440
      %p442 = scmp.ne.s32.totalorder %s434, %s436
      %p443 = scmp.eq.s32.totalorder %s38, 1
      %p444 = por %p442, %p443
      %p445 = scmp.ne.s32.totalorder %s436, %s437
      %p446 = scmp.eq.s32.totalorder %s38, 0
      %p447 = por %p445, %p446
      %p448 = scmp.ne.s32.totalorder %s436, %s437
      %p449 = scmp.eq.s32.totalorder %s39, 1
      %p450 = por %p448, %p449
      %p452 = scmp.ne.s32.totalorder %s437, %s451
      %p453 = scmp.eq.s32.totalorder %s39, 0
      %p454 = por %p452, %p453
      %s456 = sadd.s32 %s455, 1
      %p459 = scmp.eq.s32.totalorder %s33, 1
      %p460 = scmp.ne.s32.totalorder %s455, %s457
      %p461 = scmp.eq.s32.totalorder %s33, 0
      %p462 = por %p460, %p461
      %p463 = scmp.ne.s32.totalorder %s455, %s457
      %p464 = scmp.eq.s32.totalorder %s38, 1
      %p465 = por %p463, %p464
      %p466 = scmp.ne.s32.totalorder %s457, %s458
      %p467 = scmp.eq.s32.totalorder %s38, 0
      %p468 = por %p466, %p467
      %p469 = scmp.ne.s32.totalorder %s457, %s458
      %p470 = scmp.eq.s32.totalorder %s39, 1
      %p471 = por %p469, %p470
      %p473 = scmp.ne.s32.totalorder %s458, %s472
      %p474 = scmp.eq.s32.totalorder %s39, 0
      %p475 = por %p473, %p474
      %s477 = sadd.s32 %s476, 1
      %p480 = scmp.eq.s32.totalorder %s33, 1
      %p481 = scmp.ne.s32.totalorder %s476, %s478
      %p482 = scmp.eq.s32.totalorder %s33, 0
      %p483 = por %p481, %p482
      %p484 = scmp.ne.s32.totalorder %s476, %s478
      %p485 = scmp.eq.s32.totalorder %s38, 1
      %p486 = por %p484, %p485
      %p487 = scmp.ne.s32.totalorder %s478, %s479
      %p488 = scmp.eq.s32.totalorder %s38, 0
      %p489 = por %p487, %p488
      %p490 = scmp.ne.s32.totalorder %s478, %s479
      %p491 = scmp.eq.s32.totalorder %s39, 1
      %p492 = por %p490, %p491
      %p494 = scmp.ne.s32.totalorder %s479, %s493
      %p495 = scmp.eq.s32.totalorder %s39, 0
      %p496 = por %p494, %p495
      %s498 = sadd.s32 %s497, 1
      %p501 = scmp.eq.s32.totalorder %s33, 1
      %p502 = scmp.ne.s32.totalorder %s497, %s499
      %p503 = scmp.eq.s32.totalorder %s33, 0
      %p504 = por %p502, %p503
      %p505 = scmp.ne.s32.totalorder %s497, %s499
      %p506 = scmp.eq.s32.totalorder %s38, 1
      %p507 = por %p505, %p506
      %p508 = scmp.ne.s32.totalorder %s499, %s500
      %p509 = scmp.eq.s32.totalorder %s38, 0
      %p510 = por %p508, %p509
      %p511 = scmp.ne.s32.totalorder %s499, %s500
      %p512 = scmp.eq.s32.totalorder %s39, 1
      %p513 = por %p511, %p512
      %p515 = scmp.ne.s32.totalorder %s500, %s514
      %p516 = scmp.eq.s32.totalorder %s39, 0
      %p517 = por %p515, %p516
      %s519 = sadd.s32 %s518, 1
      %p522 = scmp.eq.s32.totalorder %s33, 1
      %p523 = scmp.ne.s32.totalorder %s518, %s520
      %p524 = scmp.eq.s32.totalorder %s33, 0
      %p525 = por %p523, %p524
      %p526 = scmp.ne.s32.totalorder %s518, %s520
      %p527 = scmp.eq.s32.totalorder %s38, 1
      %p528 = por %p526, %p527
      %p529 = scmp.ne.s32.totalorder %s520, %s521
      %p530 = scmp.eq.s32.totalorder %s38, 0
      %p531 = por %p529, %p530
      %p532 = scmp.ne.s32.totalorder %s520, %s521
      %p533 = scmp.eq.s32.totalorder %s39, 1
      %p534 = por %p532, %p533
      %p536 = scmp.ne.s32.totalorder %s521, %s535
      %p537 = scmp.eq.s32.totalorder %s39, 0
      %p538 = por %p536, %p537
      %s540 = sadd.s32 %s539, 1
      %p543 = scmp.eq.s32.totalorder %s33, 1
      %p544 = scmp.ne.s32.totalorder %s539, %s541
      %p545 = scmp.eq.s32.totalorder %s33, 0
      %p546 = por %p544, %p545
      %p547 = scmp.ne.s32.totalorder %s539, %s541
      %p548 = scmp.eq.s32.totalorder %s38, 1
      %p549 = por %p547, %p548
      %p550 = scmp.ne.s32.totalorder %s541, %s542
      %p551 = scmp.eq.s32.totalorder %s38, 0
      %p552 = por %p550, %p551
      %p553 = scmp.ne.s32.totalorder %s541, %s542
      %p554 = scmp.eq.s32.totalorder %s39, 1
      %p555 = por %p553, %p554
      %p557 = scmp.ne.s32.totalorder %s542, %s556
      %p558 = scmp.eq.s32.totalorder %s39, 0
      %p559 = por %p557, %p558
      %s560 = ssub.s32 %s33, %s40
      %p561 = scmp.eq.s32.totalorder %s560, 0
      %s563 = sadd.s32 %s562, 1
      %s564 = scalar_select %p561, %s562, %s563
      %p567 = pneg %p561
      %p568 = scmp.eq.s32.totalorder %s33, 1
      %p569 = por %p567, %p568
      %p570 = scmp.ne.s32.totalorder %s562, %s565
      %p571 = scmp.eq.s32.totalorder %s33, 0
      %p572 = por %p570, %p571
      %p573 = scmp.ne.s32.totalorder %s562, %s565
      %p574 = scmp.eq.s32.totalorder %s38, 1
      %p575 = por %p573, %p574
      %p576 = scmp.ne.s32.totalorder %s565, %s566
      %p577 = scmp.eq.s32.totalorder %s38, 0
      %p578 = por %p576, %p577
      %p579 = scmp.ne.s32.totalorder %s565, %s566
      %p580 = scmp.eq.s32.totalorder %s39, 1
      %p581 = por %p579, %p580
      %p583 = scmp.ne.s32.totalorder %s566, %s582
      %p584 = scmp.eq.s32.totalorder %s39, 0
      %p585 = por %p583, %p584
      %p586 = scmp.le.s32.totalorder 1, %s33
      %p587 = scmp.lt.s32.totalorder %s33, 3
      %p588 = pnand %p586, %p587
      %p589 = pneg %p588
      // Predicated region
      $region9: #{tpu_custom_call.1} parent=5 // pred_check
        _
      $region10: #{tpu_custom_call.1} parent=5 // pred_check_branch
        %591 = sbr.rel (%p588) target = $region12
      $region11: #{tpu_custom_call.1} parent=5 // pred_region
        %s592 = ssub.s32 %s33, 1
        // Predicated region
        $region13: #{tpu_custom_call.1} parent=11 // pred_check
          %p593 = pneg %p132
        $region14: #{tpu_custom_call.1} parent=11 // pred_check_branch
          %595 = sbr.rel (%p593) target = $region16
        $region15: #{tpu_custom_call.1} parent=11 // pred_region
          _
        $region16: #{tpu_custom_call.1} parent=11 // pred_fallthru
          _
        // Predicated region
        $region17: #{tpu_custom_call.1} parent=11 // pred_check
          %p596 = pneg %p153
        $region18: #{tpu_custom_call.1} parent=11 // pred_check_branch
          %598 = sbr.rel (%p596) target = $region20
        $region19: #{tpu_custom_call.1} parent=11 // pred_region
          _
        $region20: #{tpu_custom_call.1} parent=11 // pred_fallthru
          _
        // Predicated region
        $region21: #{tpu_custom_call.1} parent=11 // pred_check
          %p599 = pneg %p174
        $region22: #{tpu_custom_call.1} parent=11 // pred_check_branch
          %601 = sbr.rel (%p599) target = $region24
        $region23: #{tpu_custom_call.1} parent=11 // pred_region
          _
        $region24: #{tpu_custom_call.1} parent=11 // pred_fallthru
          _
        // Predicated region
        $region25: #{tpu_custom_call.1} parent=11 // pred_check
          %p602 = pneg %p195
        $region26: #{tpu_custom_call.1} parent=11 // pred_check_branch
          %604 = sbr.rel (%p602) target = $region28
        $region27: #{tpu_custom_call.1} parent=11 // pred_region
          _
        $region28: #{tpu_custom_call.1} parent=11 // pred_fallthru
          _
        // Predicated region
        $region29: #{tpu_custom_call.1} parent=11 // pred_check
          %p605 = pneg %p216
        $region30: #{tpu_custom_call.1} parent=11 // pred_check_branch
          %607 = sbr.rel (%p605) target = $region32
        $region31: #{tpu_custom_call.1} parent=11 // pred_region
          _
        $region32: #{tpu_custom_call.1} parent=11 // pred_fallthru
          _
        // Predicated region
        $region33: #{tpu_custom_call.1} parent=11 // pred_check
          %p608 = pneg %p237
        $region34: #{tpu_custom_call.1} parent=11 // pred_check_branch
          %610 = sbr.rel (%p608) target = $region36
        $region35: #{tpu_custom_call.1} parent=11 // pred_region
          _
        $region36: #{tpu_custom_call.1} parent=11 // pred_fallthru
          _
        // Predicated region
        $region37: #{tpu_custom_call.1} parent=11 // pred_check
          %p611 = pneg %p258
        $region38: #{tpu_custom_call.1} parent=11 // pred_check_branch
          %613 = sbr.rel (%p611) target = $region40
        $region39: #{tpu_custom_call.1} parent=11 // pred_region
          _
        $region40: #{tpu_custom_call.1} parent=11 // pred_fallthru
          _
        // Predicated region
        $region41: #{tpu_custom_call.1} parent=11 // pred_check
          %p614 = pneg %p279
        $region42: #{tpu_custom_call.1} parent=11 // pred_check_branch
          %616 = sbr.rel (%p614) target = $region44
        $region43: #{tpu_custom_call.1} parent=11 // pred_region
          _
        $region44: #{tpu_custom_call.1} parent=11 // pred_fallthru
          _
        // Predicated region
        $region45: #{tpu_custom_call.1} parent=11 // pred_check
          %p617 = pneg %p300
        $region46: #{tpu_custom_call.1} parent=11 // pred_check_branch
          %619 = sbr.rel (%p617) target = $region48
        $region47: #{tpu_custom_call.1} parent=11 // pred_region
          _
        $region48: #{tpu_custom_call.1} parent=11 // pred_fallthru
          _
        // Predicated region
        $region49: #{tpu_custom_call.1} parent=11 // pred_check
          %p620 = pneg %p321
        $region50: #{tpu_custom_call.1} parent=11 // pred_check_branch
          %622 = sbr.rel (%p620) target = $region52
        $region51: #{tpu_custom_call.1} parent=11 // pred_region
          _
        $region52: #{tpu_custom_call.1} parent=11 // pred_fallthru
          _
        // Predicated region
        $region53: #{tpu_custom_call.1} parent=11 // pred_check
          %p623 = pneg %p342
        $region54: #{tpu_custom_call.1} parent=11 // pred_check_branch
          %625 = sbr.rel (%p623) target = $region56
        $region55: #{tpu_custom_call.1} parent=11 // pred_region
          _
        $region56: #{tpu_custom_call.1} parent=11 // pred_fallthru
          _
        // Predicated region
        $region57: #{tpu_custom_call.1} parent=11 // pred_check
          %p626 = pneg %p363
        $region58: #{tpu_custom_call.1} parent=11 // pred_check_branch
          %628 = sbr.rel (%p626) target = $region60
        $region59: #{tpu_custom_call.1} parent=11 // pred_region
          _
        $region60: #{tpu_custom_call.1} parent=11 // pred_fallthru
          _
        // Predicated region
        $region61: #{tpu_custom_call.1} parent=11 // pred_check
          %p629 = pneg %p384
        $region62: #{tpu_custom_call.1} parent=11 // pred_check_branch
          %631 = sbr.rel (%p629) target = $region64
        $region63: #{tpu_custom_call.1} parent=11 // pred_region
          _
        $region64: #{tpu_custom_call.1} parent=11 // pred_fallthru
          _
        // Predicated region
        $region65: #{tpu_custom_call.1} parent=11 // pred_check
          %p632 = pneg %p405
        $region66: #{tpu_custom_call.1} parent=11 // pred_check_branch
          %634 = sbr.rel (%p632) target = $region68
        $region67: #{tpu_custom_call.1} parent=11 // pred_region
          _
        $region68: #{tpu_custom_call.1} parent=11 // pred_fallthru
          _
        // Predicated region
        $region69: #{tpu_custom_call.1} parent=11 // pred_check
          %p635 = pneg %p426
        $region70: #{tpu_custom_call.1} parent=11 // pred_check_branch
          %637 = sbr.rel (%p635) target = $region72
        $region71: #{tpu_custom_call.1} parent=11 // pred_region
          _
        $region72: #{tpu_custom_call.1} parent=11 // pred_fallthru
          _
        // Predicated region
        $region73: #{tpu_custom_call.1} parent=11 // pred_check
          %p638 = pneg %p447
        $region74: #{tpu_custom_call.1} parent=11 // pred_check_branch
          %640 = sbr.rel (%p638) target = $region76
        $region75: #{tpu_custom_call.1} parent=11 // pred_region
          _
        $region76: #{tpu_custom_call.1} parent=11 // pred_fallthru
          _
        // Predicated region
        $region77: #{tpu_custom_call.1} parent=11 // pred_check
          %p641 = pneg %p468
        $region78: #{tpu_custom_call.1} parent=11 // pred_check_branch
          %643 = sbr.rel (%p641) target = $region80
        $region79: #{tpu_custom_call.1} parent=11 // pred_region
          _
        $region80: #{tpu_custom_call.1} parent=11 // pred_fallthru
          _
        // Predicated region
        $region81: #{tpu_custom_call.1} parent=11 // pred_check
          %p644 = pneg %p489
        $region82: #{tpu_custom_call.1} parent=11 // pred_check_branch
          %646 = sbr.rel (%p644) target = $region84
        $region83: #{tpu_custom_call.1} parent=11 // pred_region
          _
        $region84: #{tpu_custom_call.1} parent=11 // pred_fallthru
          _
        // Predicated region
        $region85: #{tpu_custom_call.1} parent=11 // pred_check
          %p647 = pneg %p510
        $region86: #{tpu_custom_call.1} parent=11 // pred_check_branch
          %649 = sbr.rel (%p647) target = $region88
        $region87: #{tpu_custom_call.1} parent=11 // pred_region
          _
        $region88: #{tpu_custom_call.1} parent=11 // pred_fallthru
          _
        // Predicated region
        $region89: #{tpu_custom_call.1} parent=11 // pred_check
          %p650 = pneg %p531
        $region90: #{tpu_custom_call.1} parent=11 // pred_check_branch
          %652 = sbr.rel (%p650) target = $region92
        $region91: #{tpu_custom_call.1} parent=11 // pred_region
          _
        $region92: #{tpu_custom_call.1} parent=11 // pred_fallthru
          _
        // Predicated region
        $region93: #{tpu_custom_call.1} parent=11 // pred_check
          %p653 = pneg %p552
        $region94: #{tpu_custom_call.1} parent=11 // pred_check_branch
          %655 = sbr.rel (%p653) target = $region96
        $region95: #{tpu_custom_call.1} parent=11 // pred_region
          _
        $region96: #{tpu_custom_call.1} parent=11 // pred_fallthru
          _
      $region12: #{tpu_custom_call.1} parent=5 // pred_fallthru
        _
      %p656 = scmp.lt.s32.totalorder %s33, 2
      // Predicated region
      $region97: #{tpu_custom_call.1} parent=5 // pred_check
        %p657 = pneg %p656
      $region98: #{tpu_custom_call.1} parent=5 // pred_check_branch
        %659 = sbr.rel (%p657) target = $region100
      $region99: #{tpu_custom_call.1} parent=5 // pred_region
        // Predicated region
        $region101: #{tpu_custom_call.1} parent=99 // pred_check
          %p660 = pneg %p53
        $region102: #{tpu_custom_call.1} parent=99 // pred_check_branch
          %662 = sbr.rel (%p660) target = $region104
        $region103: #{tpu_custom_call.1} parent=99 // pred_region
          %p663 = scmp.lt.s32.totalorder %s33, 1
          %s664 = scalar_select %p663, %s33, 1
          %s665 = smul.addr %s664, 2
          %s666 = smul.addr %s665, 8
          %s667 = scalar_lea.vmem %s0, %s666
        $region104: #{tpu_custom_call.1} parent=99 // pred_fallthru
          _
        // Predicated region
        $region105: #{tpu_custom_call.1} parent=99 // pred_check
          %p668 = pneg %p79
        $region106: #{tpu_custom_call.1} parent=99 // pred_check_branch
          %670 = sbr.rel (%p668) target = $region108
        $region107: #{tpu_custom_call.1} parent=99 // pred_region
          %p671 = scmp.lt.s32.totalorder %s33, 1
          %s672 = scalar_select %p671, %s33, 1
          %s673 = smul.addr %s672, 2
          %s674 = smul.addr %s673, 8
          %s675 = scalar_lea.vmem %s1, %s674
        $region108: #{tpu_custom_call.1} parent=99 // pred_fallthru
          _
        // Predicated region
        $region109: #{tpu_custom_call.1} parent=99 // pred_check
          %p676 = pneg %p105
        $region110: #{tpu_custom_call.1} parent=99 // pred_check_branch
          %678 = sbr.rel (%p676) target = $region112
        $region111: #{tpu_custom_call.1} parent=99 // pred_region
          %p679 = scmp.lt.s32.totalorder %s33, 1
          %s680 = scalar_select %p679, %s33, 1
          %s681 = smul.addr %s680, 2
          %s682 = smul.addr %s681, 8
          %s683 = scalar_lea.vmem %s2, %s682
        $region112: #{tpu_custom_call.1} parent=99 // pred_fallthru
          _
      $region100: #{tpu_custom_call.1} parent=5 // pred_fallthru
        _
      %p684 = scmp.le.s32.totalorder 1, %s33
      %p685 = scmp.lt.s32.totalorder %s33, 3
      %p686 = pnand %p684, %p685
      %p687 = pneg %p686
      // Predicated region
      $region113: #{tpu_custom_call.1} parent=5 // pred_check
        _
      $region114: #{tpu_custom_call.1} parent=5 // pred_check_branch
        %689 = sbr.rel (%p686) target = $region116
      $region115: #{tpu_custom_call.1} parent=5 // pred_region
        %s690 = ssub.s32 %s33, 1
        %p691 = scmp.lt.s32.totalorder %s38, 1
        %s692 = scalar_select %p691, %s38, 1
        %s693 = smul.addr %s692, 2
        %s694 = smul.addr %s693, 8
        %s695 = scalar_lea.vmem %s0, %s694
        %p696 = pneg %p59
        %p697 = pneg %p56
        %p698 = scmp.lt.s32.totalorder %s38, 1
        %s699 = scalar_select %p698, %s38, 1
        %s700 = smul.addr %s699, 2
        %s701 = smul.addr %s700, 8
        %s702 = scalar_lea.vmem %s1, %s701
        %p703 = pneg %p85
        %p704 = pneg %p82
        %p705 = scmp.lt.s32.totalorder %s38, 1
        %s706 = scalar_select %p705, %s38, 1
        %s707 = smul.addr %s706, 2
        %s708 = smul.addr %s707, 8
        %s709 = scalar_lea.vmem %s2, %s708
        %p710 = pneg %p111
        %p711 = pneg %p108
        %p712 = pneg %p132
        %p713 = pneg %p129
        %p714 = pneg %p153
        %p715 = pneg %p150
        %p716 = pneg %p174
        %p717 = pneg %p171
        %p718 = pneg %p195
        %p719 = pneg %p192
        %p720 = pneg %p216
        %p721 = pneg %p213
        %p722 = pneg %p237
        %p723 = pneg %p234
        %p724 = pneg %p258
        %p725 = pneg %p255
        %p726 = pneg %p279
        %p727 = pneg %p276
        %p728 = pneg %p300
        %p729 = pneg %p297
        %p730 = pneg %p321
        %p731 = pneg %p318
        %p732 = pneg %p342
        %p733 = pneg %p339
        %p734 = pneg %p363
        %p735 = pneg %p360
        %p736 = pneg %p384
        %p737 = pneg %p381
        %p738 = pneg %p405
        %p739 = pneg %p402
        %p740 = pneg %p426
        %p741 = pneg %p423
        %p742 = pneg %p447
        %p743 = pneg %p444
        %p744 = pneg %p468
        %p745 = pneg %p465
        %p746 = pneg %p489
        %p747 = pneg %p486
        %p748 = pneg %p510
        %p749 = pneg %p507
        %p750 = pneg %p531
        %p751 = pneg %p528
        %p752 = pneg %p552
        %p753 = pneg %p549
        %p754 = pneg %p578
        %p755 = pneg %p575
        %s756 = sand.u32 %s565, 1
        %s757 = scalar_lea.sflag [#allocation3], %s756
        %s758 = sand.u32 %s565, 1
        %s759 = smul.addr %s758, 16
        %s760 = scalar_lea.vmem [#allocation2], %s759
        %p761 = scmp.lt.s32.totalorder %s38, 1
        %s762 = scalar_select %p761, %s38, 1
        %s763 = smul.addr %s762, 2
        %s764 = smul.addr %s763, 8
        %s765 = scalar_lea.vmem %s0, %s764
        %p766 = scmp.lt.s32.totalorder %s38, 1
        %s767 = scalar_select %p766, %s38, 1
        %s768 = smul.addr %s767, 2
        %s769 = smul.addr %s768, 8
        %s770 = scalar_lea.vmem %s1, %s769
        %p771 = scmp.lt.s32.totalorder %s38, 1
        %s772 = scalar_select %p771, %s38, 1
        %s773 = smul.addr %s772, 2
        %s774 = smul.addr %s773, 8
        %s775 = scalar_lea.vmem %s2, %s774
        %v776 = vld [vmem:[%s765] sm:$0xff]
        %v777 = vld [vmem:[%s765 + $0x8] sm:$0xff]
        %v778 = vld [vmem:[%s770] sm:$0xff]
        %v779 = vld [vmem:[%s770 + $0x8] sm:$0xff]
        %781 = vset.pattern.permute.xlu0 0
        %782 = vperm.xlu0 %781, %v778
        %v783 = vpop.permute.xlu0 %782
        %786 = vset.pattern.permute.xlu0 0
        %787 = vperm.xlu0 %786, %v779
        %v788 = vpop.permute.xlu0 %787
        %v790 = vmul.f32 %v776, %v783
        %v791 = vmul.f32 %v777, %v788
        %v792 = vld [vmem:[%s6] sm:$0xff]
        %v793 = vld [vmem:[%s6 + $0x8] sm:$0xff]
        %v794 = vld [vmem:[%s6 + $0x10] sm:$0xff]
        %v795 = vld [vmem:[%s6 + $0x18] sm:$0xff]
        %v796 = vld [vmem:[%s7] sm:$0x1]
        %v798 = vperm.slane %v796, 0
        %vm800 = vcmask 261120
        %v802 = vsel %vm800, %v790, 0
        %v805 = vsel %vm800, %v791, 0
        %807 = vmatpush.msra.mxu0 0.0
        %808 = vmatpush.msra.mxu0 0.0
        %809 = vmatpush.msra.mxu0 0.0
        %810 = vmatpush.msra.mxu0 0.0
        %811 = vmatpush.msra.mxu0 0.0
        %812 = vmatpush.msra.mxu0 0.0
        %813 = vmatpush.msra.mxu0 0.0
        %814 = vmatpush.msra.mxu0 0.0
        %815 = vmatpush.msra.mxu0 0.0
        %816 = vmatpush.msra.mxu0 0.0
        %817 = vmatpush.msra.mxu0 0.0
        %818 = vmatpush.msra.mxu0 0.0
        %819 = vmatpush.msra.mxu0 %v795
        %820 = vmatpush.msra.mxu0 %v794
        %821 = vmatpush.msra.mxu0 %v793
        %822 = vmatpush.msra.mxu0 %v792
        %823 = vmatmul.f32.gmra.mxu0 %v802
        %v824 = vpop.f32.mrf.mxu0
        %v825 = vadd.f32 %v798, %v824
        %826 = vmatmul.f32.gmra.mxu0 %v805
        %v827 = vpop.f32.mrf.mxu0
        %v828 = vadd.f32 %v798, %v827
        %829 = vdwg.mxu0
        %v830 = vld [vmem:[%s8] sm:$0xff]
        %v831 = vld [vmem:[%s8 + $0x8] sm:$0xff]
        %v832 = vld [vmem:[%s8 + $0x10] sm:$0xff]
        %v833 = vld [vmem:[%s8 + $0x18] sm:$0xff]
        %v834 = vld [vmem:[%s9] sm:$0x1]
        %v836 = vperm.slane %v834, 0
        %838 = vmatpush.msra.mxu0 0.0
        %839 = vmatpush.msra.mxu0 0.0
        %840 = vmatpush.msra.mxu0 0.0
        %841 = vmatpush.msra.mxu0 0.0
        %842 = vmatpush.msra.mxu0 0.0
        %843 = vmatpush.msra.mxu0 0.0
        %844 = vmatpush.msra.mxu0 0.0
        %845 = vmatpush.msra.mxu0 0.0
        %846 = vmatpush.msra.mxu0 0.0
        %847 = vmatpush.msra.mxu0 0.0
        %848 = vmatpush.msra.mxu0 0.0
        %849 = vmatpush.msra.mxu0 0.0
        %850 = vmatpush.msra.mxu0 %v833
        %851 = vmatpush.msra.mxu0 %v832
        %852 = vmatpush.msra.mxu0 %v831
        %853 = vmatpush.msra.mxu0 %v830
        %854 = vmatmul.f32.gmra.mxu0 %v802
        %v855 = vpop.f32.mrf.mxu0
        %v856 = vadd.f32 %v836, %v855
        %857 = vmatmul.f32.gmra.mxu0 %v805
        %v858 = vpop.f32.mrf.mxu0
        %v859 = vadd.f32 %v836, %v858
        %860 = vdwg.mxu0
        %v861 = vld [vmem:[%s10] sm:$0xff]
        %v862 = vld [vmem:[%s10 + $0x8] sm:$0xff]
        %v863 = vld [vmem:[%s10 + $0x10] sm:$0xff]
        %v864 = vld [vmem:[%s10 + $0x18] sm:$0xff]
        %v865 = vld [vmem:[%s11] sm:$0x1]
        %v867 = vperm.slane %v865, 0
        %869 = vmatpush.msra.mxu0 0.0
        %870 = vmatpush.msra.mxu0 0.0
        %871 = vmatpush.msra.mxu0 0.0
        %872 = vmatpush.msra.mxu0 0.0
        %873 = vmatpush.msra.mxu0 0.0
        %874 = vmatpush.msra.mxu0 0.0
        %875 = vmatpush.msra.mxu0 0.0
        %876 = vmatpush.msra.mxu0 0.0
        %877 = vmatpush.msra.mxu0 0.0
        %878 = vmatpush.msra.mxu0 0.0
        %879 = vmatpush.msra.mxu0 0.0
        %880 = vmatpush.msra.mxu0 0.0
        %881 = vmatpush.msra.mxu0 %v864
        %882 = vmatpush.msra.mxu0 %v863
        %883 = vmatpush.msra.mxu0 %v862
        %884 = vmatpush.msra.mxu0 %v861
        %885 = vmatmul.f32.gmra.mxu0 %v802
        %v886 = vpop.f32.mrf.mxu0
        %v887 = vadd.f32 %v867, %v886
        %888 = vmatmul.f32.gmra.mxu0 %v805
        %v889 = vpop.f32.mrf.mxu0
        %v890 = vadd.f32 %v867, %v889
        %891 = vdwg.mxu0
        %v892 = vld [vmem:[%s14] sm:$0xff]
        %v893 = vld [vmem:[%s14 + $0x8] sm:$0xff]
        %v894 = vld [vmem:[%s14 + $0x10] sm:$0xff]
        %v895 = vld [vmem:[%s14 + $0x18] sm:$0xff]
        %vm896 = vcmask 130048
        %v898 = vsel %vm896, %v825, 0
        %v901 = vsel %vm896, %v828, 0
        %903 = vmatpush.msra.mxu0 0.0
        %904 = vmatpush.msra.mxu0 0.0
        %905 = vmatpush.msra.mxu0 0.0
        %906 = vmatpush.msra.mxu0 0.0
        %907 = vmatpush.msra.mxu0 0.0
        %908 = vmatpush.msra.mxu0 0.0
        %909 = vmatpush.msra.mxu0 0.0
        %910 = vmatpush.msra.mxu0 0.0
        %911 = vmatpush.msra.mxu0 0.0
        %912 = vmatpush.msra.mxu0 0.0
        %913 = vmatpush.msra.mxu0 0.0
        %914 = vmatpush.msra.mxu0 0.0
        %915 = vmatpush.msra.mxu0 0.0
        %916 = vmatpush.msra.mxu0 0.0
        %917 = vmatpush.msra.mxu0 %v894
        %918 = vmatpush.msra.mxu0 %v892
        %919 = vmatmul.f32.gmra.mxu0 %v898
        %v920 = vpop.f32.mrf.mxu0
        %v921 = vadd.f32 0.0, %v920
        %922 = vmatmul.f32.gmra.mxu0 %v901
        %v923 = vpop.f32.mrf.mxu0
        %v924 = vadd.f32 0.0, %v923
        %925 = vdwg.mxu0
        %926 = vmatpush.msra.mxu0 0.0
        %927 = vmatpush.msra.mxu0 0.0
        %928 = vmatpush.msra.mxu0 0.0
        %929 = vmatpush.msra.mxu0 0.0
        %930 = vmatpush.msra.mxu0 0.0
        %931 = vmatpush.msra.mxu0 0.0
        %932 = vmatpush.msra.mxu0 0.0
        %933 = vmatpush.msra.mxu0 0.0
        %934 = vmatpush.msra.mxu0 0.0
        %935 = vmatpush.msra.mxu0 0.0
        %936 = vmatpush.msra.mxu0 0.0
        %937 = vmatpush.msra.mxu0 0.0
        %938 = vmatpush.msra.mxu0 0.0
        %939 = vmatpush.msra.mxu0 0.0
        %940 = vmatpush.msra.mxu0 %v895
        %941 = vmatpush.msra.mxu0 %v893
        %942 = vmatmul.f32.gmra.mxu0 %v898
        %v943 = vpop.f32.mrf.mxu0
        %v944 = vadd.f32 0.0, %v943
        %945 = vmatmul.f32.gmra.mxu0 %v901
        %v946 = vpop.f32.mrf.mxu0
        %v947 = vadd.f32 0.0, %v946
        %948 = vdwg.mxu0
        %v949 = vld [vmem:[%s3] sm:$0xff]
        %v950 = vld [vmem:[%s3 + $0x8] sm:$0xff]
        %v951 = vld [vmem:[%s3 + $0x10] sm:$0xff]
        %v952 = vld [vmem:[%s3 + $0x18] sm:$0xff]
        %v953 = vmul.f32 %v921, %v949
        %v954 = vmul.f32 %v944, %v950
        %v955 = vmul.f32 %v924, %v951
        %v956 = vmul.f32 %v947, %v952
        %v957 = vld [vmem:[%s4] sm:$0xff]
        %v958 = vld [vmem:[%s4 + $0x8] sm:$0xff]
        %v959 = vld [vmem:[%s4 + $0x10] sm:$0xff]
        %v960 = vld [vmem:[%s4 + $0x18] sm:$0xff]
        %v961 = vld [vmem:[%s4 + $0x20] sm:$0xff]
        %v962 = vld [vmem:[%s4 + $0x28] sm:$0xff]
        %v963 = vld [vmem:[%s4 + $0x30] sm:$0xff]
        %v964 = vld [vmem:[%s4 + $0x38] sm:$0xff]
        %v965 = vld [vmem:[%s4 + $0x40] sm:$0xff]
        %v966 = vld [vmem:[%s4 + $0x48] sm:$0xff]
        %v967 = vld [vmem:[%s4 + $0x50] sm:$0xff]
        %v968 = vld [vmem:[%s4 + $0x58] sm:$0xff]
        %v969 = vld [vmem:[%s4 + $0x60] sm:$0xff]
        %v970 = vld [vmem:[%s4 + $0x68] sm:$0xff]
        %v971 = vld [vmem:[%s4 + $0x70] sm:$0xff]
        %v972 = vld [vmem:[%s4 + $0x78] sm:$0xff]
        %v973 = vld [vmem:[%s4 + $0x80] sm:$0xff]
        %v974 = vld [vmem:[%s4 + $0x88] sm:$0xff]
        %v976 = vsel %vm896, %v954, 0
        %v979 = vsel %vm896, %v956, 0
        %981 = vmatpush.msra.mxu0 %v972
        %982 = vmatpush.msra.mxu0 %v971
        %983 = vmatpush.msra.mxu0 %v970
        %984 = vmatpush.msra.mxu0 %v969
        %985 = vmatpush.msra.mxu0 %v968
        %986 = vmatpush.msra.mxu0 %v967
        %987 = vmatpush.msra.mxu0 %v966
        %988 = vmatpush.msra.mxu0 %v965
        %989 = vmatpush.msra.mxu0 %v964
        %990 = vmatpush.msra.mxu0 %v963
        %991 = vmatpush.msra.mxu0 %v962
        %992 = vmatpush.msra.mxu0 %v961
        %993 = vmatpush.msra.mxu0 %v960
        %994 = vmatpush.msra.mxu0 %v959
        %995 = vmatpush.msra.mxu0 %v958
        %996 = vmatpush.msra.mxu0 %v957
        %997 = vmatmul.f32.gmra.mxu0 %v953
        %v998 = vpop.f32.mrf.mxu0
        %v999 = vadd.f32 0.0, %v998
        %1000 = vmatmul.f32.gmra.mxu0 %v955
        %v1001 = vpop.f32.mrf.mxu0
        %v1002 = vadd.f32 0.0, %v1001
        %1003 = vdwg.mxu0
        %1004 = vmatpush.msra.mxu0 0.0
        %1005 = vmatpush.msra.mxu0 0.0
        %1006 = vmatpush.msra.mxu0 0.0
        %1007 = vmatpush.msra.mxu0 0.0
        %1008 = vmatpush.msra.mxu0 0.0
        %1009 = vmatpush.msra.mxu0 0.0
        %1010 = vmatpush.msra.mxu0 0.0
        %1011 = vmatpush.msra.mxu0 0.0
        %1012 = vmatpush.msra.mxu0 0.0
        %1013 = vmatpush.msra.mxu0 0.0
        %1014 = vmatpush.msra.mxu0 0.0
        %1015 = vmatpush.msra.mxu0 0.0
        %1016 = vmatpush.msra.mxu0 0.0
        %1017 = vmatpush.msra.mxu0 0.0
        %1018 = vmatpush.msra.mxu0 %v974
        %1019 = vmatpush.msra.mxu0 %v973
        %1020 = vmatmul.f32.gmra.mxu0 %v976
        %v1021 = vpop.f32.mrf.mxu0
        %v1022 = vadd.f32 %v999, %v1021
        %1023 = vmatmul.f32.gmra.mxu0 %v979
        %v1024 = vpop.f32.mrf.mxu0
        %v1025 = vadd.f32 %v1002, %v1024
        %1026 = vdwg.mxu0
        %v1028 = vsel %vm896, %v856, 0
        %v1031 = vsel %vm896, %v859, 0
        %1033 = vmatpush.xpose.msra.mxu0 0.0
        %1034 = vmatpush.xpose.msra.mxu0 0.0
        %1035 = vmatpush.xpose.msra.mxu0 0.0
        %1036 = vmatpush.xpose.msra.mxu0 0.0
        %1037 = vmatpush.xpose.msra.mxu0 0.0
        %1038 = vmatpush.xpose.msra.mxu0 0.0
        %1039 = vmatpush.xpose.msra.mxu0 0.0
        %1040 = vmatpush.xpose.msra.mxu0 0.0
        %1041 = vmatpush.xpose.msra.mxu0 0.0
        %1042 = vmatpush.xpose.msra.mxu0 0.0
        %1043 = vmatpush.xpose.msra.mxu0 0.0
        %1044 = vmatpush.xpose.msra.mxu0 0.0
        %1045 = vmatpush.xpose.msra.mxu0 0.0
        %1046 = vmatpush.xpose.msra.mxu0 0.0
        %1047 = vmatpush.xpose.msra.mxu0 %v1031
        %1048 = vmatpush.xpose.msra.mxu0 %v1028
        %1049 = vmatmul.f32.gmra.mxu0 %v898
        %v1050 = vpop.f32.mrf.mxu0
        %v1051 = vadd.f32 %v1022, %v1050
        %1052 = vmatmul.f32.gmra.mxu0 %v901
        %v1053 = vpop.f32.mrf.mxu0
        %v1054 = vadd.f32 %v1025, %v1053
        %1055 = vdwg.mxu0
        %v1056 = vld [vmem:[%s775] sm:$0xff]
        %v1057 = vld [vmem:[%s775 + $0x8] sm:$0xff]
        %v1058 = vadd.f32 %v1051, %v1056
        %v1059 = vadd.f32 %v1054, %v1057
        %v1060 = vsel %vm896, %v1058, -inf
        %1061 = vmax.xlane.f32.xlu0 %v1060
        %v1062 = vpop.xlane.xlu0 %1061
        %v1063 = vsel %vm896, %v1059, -inf
        %1064 = vmax.xlane.f32.xlu0 %v1063
        %v1065 = vpop.xlane.xlu0 %1064
        %v1066 = vsub.f32 %v1058, %v1062
        %v1067 = vsub.f32 %v1059, %v1065
        %v1068 = vmul.f32 %v1066, 1.442695
        %v1069 = vpow.pop %v1068
        %v1070 = vmul.f32 %v1067, 1.442695
        %v1071 = vpow.pop %v1070
        %v1072 = vsel %vm896, %v1069, 0.0
        %1073 = vadd.xlane.f32.xlu0 %v1072
        %v1074 = vpop.xlane.xlu0 %1073
        %v1075 = vsel %vm896, %v1071, 0.0
        %1076 = vadd.xlane.f32.xlu0 %v1075
        %v1077 = vpop.xlane.xlu0 %1076
        %v1078 = vrcp.pop %v1074
        %v1079 = vrcp.pop %v1077
        %v1080 = vmul.f32 %v1069, %v1078
        %v1081 = vmul.f32 %v1071, %v1079
        %v1082 = vld [vmem:[%s5] sm:$0xff]
        %v1083 = vld [vmem:[%s5 + $0x8] sm:$0xff]
        %v1084 = vld [vmem:[%s5 + $0x10] sm:$0xff]
        %v1085 = vld [vmem:[%s5 + $0x18] sm:$0xff]
        %v1087 = vsel %vm896, %v1080, 0
        %v1090 = vsel %vm896, %v1081, 0
        %1092 = vmatpush.msra.mxu0 0.0
        %1093 = vmatpush.msra.mxu0 0.0
        %1094 = vmatpush.msra.mxu0 0.0
        %1095 = vmatpush.msra.mxu0 0.0
        %1096 = vmatpush.msra.mxu0 0.0
        %1097 = vmatpush.msra.mxu0 0.0
        %1098 = vmatpush.msra.mxu0 0.0
        %1099 = vmatpush.msra.mxu0 0.0
        %1100 = vmatpush.msra.mxu0 0.0
        %1101 = vmatpush.msra.mxu0 0.0
        %1102 = vmatpush.msra.mxu0 0.0
        %1103 = vmatpush.msra.mxu0 0.0
        %1104 = vmatpush.msra.mxu0 0.0
        %1105 = vmatpush.msra.mxu0 0.0
        %1106 = vmatpush.msra.mxu0 %v1084
        %1107 = vmatpush.msra.mxu0 %v1082
        %1108 = vmatmul.f32.gmra.mxu0 %v1087
        %v1109 = vpop.f32.mrf.mxu0
        %v1110 = vadd.f32 0.0, %v1109
        %1111 = vmatmul.f32.gmra.mxu0 %v1090
        %v1112 = vpop.f32.mrf.mxu0
        %v1113 = vadd.f32 0.0, %v1112
        %1114 = vdwg.mxu0
        %1115 = vmatpush.msra.mxu0 0.0
        %1116 = vmatpush.msra.mxu0 0.0
        %1117 = vmatpush.msra.mxu0 0.0
        %1118 = vmatpush.msra.mxu0 0.0
        %1119 = vmatpush.msra.mxu0 0.0
        %1120 = vmatpush.msra.mxu0 0.0
        %1121 = vmatpush.msra.mxu0 0.0
        %1122 = vmatpush.msra.mxu0 0.0
        %1123 = vmatpush.msra.mxu0 0.0
        %1124 = vmatpush.msra.mxu0 0.0
        %1125 = vmatpush.msra.mxu0 0.0
        %1126 = vmatpush.msra.mxu0 0.0
        %1127 = vmatpush.msra.mxu0 0.0
        %1128 = vmatpush.msra.mxu0 0.0
        %1129 = vmatpush.msra.mxu0 %v1085
        %1130 = vmatpush.msra.mxu0 %v1083
        %1131 = vmatmul.f32.gmra.mxu0 %v1087
        %v1132 = vpop.f32.mrf.mxu0
        %v1133 = vadd.f32 0.0, %v1132
        %1134 = vmatmul.f32.gmra.mxu0 %v1090
        %v1135 = vpop.f32.mrf.mxu0
        %v1136 = vadd.f32 0.0, %v1135
        %1137 = vdwg.mxu0
        %v1138 = vmul.f32 %v1110, %v949
        %v1139 = vmul.f32 %v1133, %v950
        %v1140 = vmul.f32 %v1113, %v951
        %v1141 = vmul.f32 %v1136, %v952
        %v1142 = vld [vmem:[%s15] sm:$0xff]
        %v1143 = vld [vmem:[%s15 + $0x8] sm:$0xff]
        %v1144 = vld [vmem:[%s15 + $0x10] sm:$0xff]
        %v1145 = vld [vmem:[%s15 + $0x18] sm:$0xff]
        %v1146 = vld [vmem:[%s15 + $0x20] sm:$0xff]
        %v1147 = vld [vmem:[%s15 + $0x28] sm:$0xff]
        %v1148 = vld [vmem:[%s15 + $0x30] sm:$0xff]
        %v1149 = vld [vmem:[%s15 + $0x38] sm:$0xff]
        %v1150 = vld [vmem:[%s15 + $0x40] sm:$0xff]
        %v1151 = vld [vmem:[%s15 + $0x48] sm:$0xff]
        %v1152 = vld [vmem:[%s15 + $0x50] sm:$0xff]
        %v1153 = vld [vmem:[%s15 + $0x58] sm:$0xff]
        %v1154 = vld [vmem:[%s15 + $0x60] sm:$0xff]
        %v1155 = vld [vmem:[%s15 + $0x68] sm:$0xff]
        %v1156 = vld [vmem:[%s15 + $0x70] sm:$0xff]
        %v1157 = vld [vmem:[%s15 + $0x78] sm:$0xff]
        %v1158 = vld [vmem:[%s15 + $0x80] sm:$0xff]
        %v1159 = vld [vmem:[%s15 + $0x88] sm:$0xff]
        %v1161 = vsel %vm896, %v1139, 0
        %v1164 = vsel %vm896, %v1141, 0
        %1166 = vmatpush.msra.mxu0 %v1157
        %1167 = vmatpush.msra.mxu0 %v1156
        %1168 = vmatpush.msra.mxu0 %v1155
        %1169 = vmatpush.msra.mxu0 %v1154
        %1170 = vmatpush.msra.mxu0 %v1153
        %1171 = vmatpush.msra.mxu0 %v1152
        %1172 = vmatpush.msra.mxu0 %v1151
        %1173 = vmatpush.msra.mxu0 %v1150
        %1174 = vmatpush.msra.mxu0 %v1149
        %1175 = vmatpush.msra.mxu0 %v1148
        %1176 = vmatpush.msra.mxu0 %v1147
        %1177 = vmatpush.msra.mxu0 %v1146
        %1178 = vmatpush.msra.mxu0 %v1145
        %1179 = vmatpush.msra.mxu0 %v1144
        %1180 = vmatpush.msra.mxu0 %v1143
        %1181 = vmatpush.msra.mxu0 %v1142
        %1182 = vmatmul.f32.gmra.mxu0 %v1138
        %v1183 = vpop.f32.mrf.mxu0
        %v1184 = vadd.f32 0.0, %v1183
        %1185 = vmatmul.f32.gmra.mxu0 %v1140
        %v1186 = vpop.f32.mrf.mxu0
        %v1187 = vadd.f32 0.0, %v1186
        %1188 = vdwg.mxu0
        %1189 = vmatpush.msra.mxu0 0.0
        %1190 = vmatpush.msra.mxu0 0.0
        %1191 = vmatpush.msra.mxu0 0.0
        %1192 = vmatpush.msra.mxu0 0.0
        %1193 = vmatpush.msra.mxu0 0.0
        %1194 = vmatpush.msra.mxu0 0.0
        %1195 = vmatpush.msra.mxu0 0.0
        %1196 = vmatpush.msra.mxu0 0.0
        %1197 = vmatpush.msra.mxu0 0.0
        %1198 = vmatpush.msra.mxu0 0.0
        %1199 = vmatpush.msra.mxu0 0.0
        %1200 = vmatpush.msra.mxu0 0.0
        %1201 = vmatpush.msra.mxu0 0.0
        %1202 = vmatpush.msra.mxu0 0.0
        %1203 = vmatpush.msra.mxu0 %v1159
        %1204 = vmatpush.msra.mxu0 %v1158
        %1205 = vmatmul.f32.gmra.mxu0 %v1161
        %v1206 = vpop.f32.mrf.mxu0
        %v1207 = vadd.f32 %v1184, %v1206
        %1208 = vmatmul.f32.gmra.mxu0 %v1164
        %v1209 = vpop.f32.mrf.mxu0
        %v1210 = vadd.f32 %v1187, %v1209
        %1211 = vdwg.mxu0
        %1212 = vmatpush.msra.mxu0 0.0
        %1213 = vmatpush.msra.mxu0 0.0
        %1214 = vmatpush.msra.mxu0 0.0
        %1215 = vmatpush.msra.mxu0 0.0
        %1216 = vmatpush.msra.mxu0 0.0
        %1217 = vmatpush.msra.mxu0 0.0
        %1218 = vmatpush.msra.mxu0 0.0
        %1219 = vmatpush.msra.mxu0 0.0
        %1220 = vmatpush.msra.mxu0 0.0
        %1221 = vmatpush.msra.mxu0 0.0
        %1222 = vmatpush.msra.mxu0 0.0
        %1223 = vmatpush.msra.mxu0 0.0
        %1224 = vmatpush.msra.mxu0 0.0
        %1225 = vmatpush.msra.mxu0 0.0
        %1226 = vmatpush.msra.mxu0 %v890
        %1227 = vmatpush.msra.mxu0 %v887
        %1228 = vmatmul.f32.gmra.mxu0 %v1087
        %v1229 = vpop.f32.mrf.mxu0
        %v1230 = vadd.f32 %v1207, %v1229
        %1231 = vmatmul.f32.gmra.mxu0 %v1090
        %v1232 = vpop.f32.mrf.mxu0
        %v1233 = vadd.f32 %v1210, %v1232
        %1234 = vdwg.mxu0
        %v1235 = vld [vmem:[%s12] sm:$0xff]
        %v1236 = vld [vmem:[%s12 + $0x8] sm:$0xff]
        %s1237 = scalar_lea.vmem %s6, 32
        %v1238 = vld [vmem:[%s1237] sm:$0xff]
        %v1239 = vld [vmem:[%s1237 + $0x8] sm:$0xff]
        %v1240 = vld [vmem:[%s1237 + $0x10] sm:$0xff]
        %v1241 = vld [vmem:[%s1237 + $0x18] sm:$0xff]
        %s1242 = scalar_lea.vmem %s7, 1
        %v1243 = vld [vmem:[%s1242] sm:$0x1]
        %v1245 = vperm.slane %v1243, 0
        %1247 = vmatpush.msra.mxu0 0.0
        %1248 = vmatpush.msra.mxu0 0.0
        %1249 = vmatpush.msra.mxu0 0.0
        %1250 = vmatpush.msra.mxu0 0.0
        %1251 = vmatpush.msra.mxu0 0.0
        %1252 = vmatpush.msra.mxu0 0.0
        %1253 = vmatpush.msra.mxu0 0.0
        %1254 = vmatpush.msra.mxu0 0.0
        %1255 = vmatpush.msra.mxu0 0.0
        %1256 = vmatpush.msra.mxu0 0.0
        %1257 = vmatpush.msra.mxu0 0.0
        %1258 = vmatpush.msra.mxu0 0.0
        %1259 = vmatpush.msra.mxu0 %v1241
        %1260 = vmatpush.msra.mxu0 %v1240
        %1261 = vmatpush.msra.mxu0 %v1239
        %1262 = vmatpush.msra.mxu0 %v1238
        %1263 = vmatmul.f32.gmra.mxu0 %v802
        %v1264 = vpop.f32.mrf.mxu0
        %v1265 = vadd.f32 %v1245, %v1264
        %1266 = vmatmul.f32.gmra.mxu0 %v805
        %v1267 = vpop.f32.mrf.mxu0
        %v1268 = vadd.f32 %v1245, %v1267
        %1269 = vdwg.mxu0
        %s1270 = scalar_lea.vmem %s8, 32
        %v1271 = vld [vmem:[%s1270] sm:$0xff]
        %v1272 = vld [vmem:[%s1270 + $0x8] sm:$0xff]
        %v1273 = vld [vmem:[%s1270 + $0x10] sm:$0xff]
        %v1274 = vld [vmem:[%s1270 + $0x18] sm:$0xff]
        %s1275 = scalar_lea.vmem %s9, 1
        %v1276 = vld [vmem:[%s1275] sm:$0x1]
        %v1278 = vperm.slane %v1276, 0
        %1280 = vmatpush.msra.mxu0 0.0
        %1281 = vmatpush.msra.mxu0 0.0
        %1282 = vmatpush.msra.mxu0 0.0
        %1283 = vmatpush.msra.mxu0 0.0
        %1284 = vmatpush.msra.mxu0 0.0
        %1285 = vmatpush.msra.mxu0 0.0
        %1286 = vmatpush.msra.mxu0 0.0
        %1287 = vmatpush.msra.mxu0 0.0
        %1288 = vmatpush.msra.mxu0 0.0
        %1289 = vmatpush.msra.mxu0 0.0
        %1290 = vmatpush.msra.mxu0 0.0
        %1291 = vmatpush.msra.mxu0 0.0
        %1292 = vmatpush.msra.mxu0 %v1274
        %1293 = vmatpush.msra.mxu0 %v1273
        %1294 = vmatpush.msra.mxu0 %v1272
        %1295 = vmatpush.msra.mxu0 %v1271
        %1296 = vmatmul.f32.gmra.mxu0 %v802
        %v1297 = vpop.f32.mrf.mxu0
        %v1298 = vadd.f32 %v1278, %v1297
        %1299 = vmatmul.f32.gmra.mxu0 %v805
        %v1300 = vpop.f32.mrf.mxu0
        %v1301 = vadd.f32 %v1278, %v1300
        %1302 = vdwg.mxu0
        %s1303 = scalar_lea.vmem %s10, 32
        %v1304 = vld [vmem:[%s1303] sm:$0xff]
        %v1305 = vld [vmem:[%s1303 + $0x8] sm:$0xff]
        %v1306 = vld [vmem:[%s1303 + $0x10] sm:$0xff]
        %v1307 = vld [vmem:[%s1303 + $0x18] sm:$0xff]
        %s1308 = scalar_lea.vmem %s11, 1
        %v1309 = vld [vmem:[%s1308] sm:$0x1]
        %v1311 = vperm.slane %v1309, 0
        %1313 = vmatpush.msra.mxu0 0.0
        %1314 = vmatpush.msra.mxu0 0.0
        %1315 = vmatpush.msra.mxu0 0.0
        %1316 = vmatpush.msra.mxu0 0.0
        %1317 = vmatpush.msra.mxu0 0.0
        %1318 = vmatpush.msra.mxu0 0.0
        %1319 = vmatpush.msra.mxu0 0.0
        %1320 = vmatpush.msra.mxu0 0.0
        %1321 = vmatpush.msra.mxu0 0.0
        %1322 = vmatpush.msra.mxu0 0.0
        %1323 = vmatpush.msra.mxu0 0.0
        %1324 = vmatpush.msra.mxu0 0.0
        %1325 = vmatpush.msra.mxu0 %v1307
        %1326 = vmatpush.msra.mxu0 %v1306
        %1327 = vmatpush.msra.mxu0 %v1305
        %1328 = vmatpush.msra.mxu0 %v1304
        %1329 = vmatmul.f32.gmra.mxu0 %v802
        %v1330 = vpop.f32.mrf.mxu0
        %v1331 = vadd.f32 %v1311, %v1330
        %1332 = vmatmul.f32.gmra.mxu0 %v805
        %v1333 = vpop.f32.mrf.mxu0
        %v1334 = vadd.f32 %v1311, %v1333
        %1335 = vdwg.mxu0
        %v1337 = vsel %vm896, %v1265, 0
        %v1340 = vsel %vm896, %v1268, 0
        %1342 = vmatpush.msra.mxu0 0.0
        %1343 = vmatpush.msra.mxu0 0.0
        %1344 = vmatpush.msra.mxu0 0.0
        %1345 = vmatpush.msra.mxu0 0.0
        %1346 = vmatpush.msra.mxu0 0.0
        %1347 = vmatpush.msra.mxu0 0.0
        %1348 = vmatpush.msra.mxu0 0.0
        %1349 = vmatpush.msra.mxu0 0.0
        %1350 = vmatpush.msra.mxu0 0.0
        %1351 = vmatpush.msra.mxu0 0.0
        %1352 = vmatpush.msra.mxu0 0.0
        %1353 = vmatpush.msra.mxu0 0.0
        %1354 = vmatpush.msra.mxu0 0.0
        %1355 = vmatpush.msra.mxu0 0.0
        %1356 = vmatpush.msra.mxu0 %v894
        %1357 = vmatpush.msra.mxu0 %v892
        %1358 = vmatmul.f32.gmra.mxu0 %v1337
        %v1359 = vpop.f32.mrf.mxu0
        %v1360 = vadd.f32 0.0, %v1359
        %1361 = vmatmul.f32.gmra.mxu0 %v1340
        %v1362 = vpop.f32.mrf.mxu0
        %v1363 = vadd.f32 0.0, %v1362
        %1364 = vdwg.mxu0
        %1365 = vmatpush.msra.mxu0 0.0
        %1366 = vmatpush.msra.mxu0 0.0
        %1367 = vmatpush.msra.mxu0 0.0
        %1368 = vmatpush.msra.mxu0 0.0
        %1369 = vmatpush.msra.mxu0 0.0
        %1370 = vmatpush.msra.mxu0 0.0
        %1371 = vmatpush.msra.mxu0 0.0
        %1372 = vmatpush.msra.mxu0 0.0
        %1373 = vmatpush.msra.mxu0 0.0
        %1374 = vmatpush.msra.mxu0 0.0
        %1375 = vmatpush.msra.mxu0 0.0
        %1376 = vmatpush.msra.mxu0 0.0
        %1377 = vmatpush.msra.mxu0 0.0
        %1378 = vmatpush.msra.mxu0 0.0
        %1379 = vmatpush.msra.mxu0 %v895
        %1380 = vmatpush.msra.mxu0 %v893
        %1381 = vmatmul.f32.gmra.mxu0 %v1337
        %v1382 = vpop.f32.mrf.mxu0
        %v1383 = vadd.f32 0.0, %v1382
        %1384 = vmatmul.f32.gmra.mxu0 %v1340
        %v1385 = vpop.f32.mrf.mxu0
        %v1386 = vadd.f32 0.0, %v1385
        %1387 = vdwg.mxu0
        %v1388 = vmul.f32 %v1360, %v949
        %v1389 = vmul.f32 %v1383, %v950
        %v1390 = vmul.f32 %v1363, %v951
        %v1391 = vmul.f32 %v1386, %v952
        %v1393 = vsel %vm896, %v1389, 0
        %v1396 = vsel %vm896, %v1391, 0
        %1398 = vmatpush.msra.mxu0 %v972
        %1399 = vmatpush.msra.mxu0 %v971
        %1400 = vmatpush.msra.mxu0 %v970
        %1401 = vmatpush.msra.mxu0 %v969
        %1402 = vmatpush.msra.mxu0 %v968
        %1403 = vmatpush.msra.mxu0 %v967
        %1404 = vmatpush.msra.mxu0 %v966
        %1405 = vmatpush.msra.mxu0 %v965
        %1406 = vmatpush.msra.mxu0 %v964
        %1407 = vmatpush.msra.mxu0 %v963
        %1408 = vmatpush.msra.mxu0 %v962
        %1409 = vmatpush.msra.mxu0 %v961
        %1410 = vmatpush.msra.mxu0 %v960
        %1411 = vmatpush.msra.mxu0 %v959
        %1412 = vmatpush.msra.mxu0 %v958
        %1413 = vmatpush.msra.mxu0 %v957
        %1414 = vmatmul.f32.gmra.mxu0 %v1388
        %v1415 = vpop.f32.mrf.mxu0
        %v1416 = vadd.f32 0.0, %v1415
        %1417 = vmatmul.f32.gmra.mxu0 %v1390
        %v1418 = vpop.f32.mrf.mxu0
        %v1419 = vadd.f32 0.0, %v1418
        %1420 = vdwg.mxu0
        %1421 = vmatpush.msra.mxu0 0.0
        %1422 = vmatpush.msra.mxu0 0.0
        %1423 = vmatpush.msra.mxu0 0.0
        %1424 = vmatpush.msra.mxu0 0.0
        %1425 = vmatpush.msra.mxu0 0.0
        %1426 = vmatpush.msra.mxu0 0.0
        %1427 = vmatpush.msra.mxu0 0.0
        %1428 = vmatpush.msra.mxu0 0.0
        %1429 = vmatpush.msra.mxu0 0.0
        %1430 = vmatpush.msra.mxu0 0.0
        %1431 = vmatpush.msra.mxu0 0.0
        %1432 = vmatpush.msra.mxu0 0.0
        %1433 = vmatpush.msra.mxu0 0.0
        %1434 = vmatpush.msra.mxu0 0.0
        %1435 = vmatpush.msra.mxu0 %v974
        %1436 = vmatpush.msra.mxu0 %v973
        %1437 = vmatmul.f32.gmra.mxu0 %v1393
        %v1438 = vpop.f32.mrf.mxu0
        %v1439 = vadd.f32 %v1416, %v1438
        %1440 = vmatmul.f32.gmra.mxu0 %v1396
        %v1441 = vpop.f32.mrf.mxu0
        %v1442 = vadd.f32 %v1419, %v1441
        %1443 = vdwg.mxu0
        %v1445 = vsel %vm896, %v1298, 0
        %v1448 = vsel %vm896, %v1301, 0
        %1450 = vmatpush.xpose.msra.mxu0 0.0
        %1451 = vmatpush.xpose.msra.mxu0 0.0
        %1452 = vmatpush.xpose.msra.mxu0 0.0
        %1453 = vmatpush.xpose.msra.mxu0 0.0
        %1454 = vmatpush.xpose.msra.mxu0 0.0
        %1455 = vmatpush.xpose.msra.mxu0 0.0
        %1456 = vmatpush.xpose.msra.mxu0 0.0
        %1457 = vmatpush.xpose.msra.mxu0 0.0
        %1458 = vmatpush.xpose.msra.mxu0 0.0
        %1459 = vmatpush.xpose.msra.mxu0 0.0
        %1460 = vmatpush.xpose.msra.mxu0 0.0
        %1461 = vmatpush.xpose.msra.mxu0 0.0
        %1462 = vmatpush.xpose.msra.mxu0 0.0
        %1463 = vmatpush.xpose.msra.mxu0 0.0
        %1464 = vmatpush.xpose.msra.mxu0 %v1448
        %1465 = vmatpush.xpose.msra.mxu0 %v1445
        %1466 = vmatmul.f32.gmra.mxu0 %v1337
        %v1467 = vpop.f32.mrf.mxu0
        %v1468 = vadd.f32 %v1439, %v1467
        %1469 = vmatmul.f32.gmra.mxu0 %v1340
        %v1470 = vpop.f32.mrf.mxu0
        %v1471 = vadd.f32 %v1442, %v1470
        %1472 = vdwg.mxu0
        %v1473 = vadd.f32 %v1468, %v1056
        %v1474 = vadd.f32 %v1471, %v1057
        %v1475 = vsel %vm896, %v1473, -inf
        %1476 = vmax.xlane.f32.xlu0 %v1475
        %v1477 = vpop.xlane.xlu0 %1476
        %v1478 = vsel %vm896, %v1474, -inf
        %1479 = vmax.xlane.f32.xlu0 %v1478
        %v1480 = vpop.xlane.xlu0 %1479
        %v1481 = vsub.f32 %v1473, %v1477
        %v1482 = vsub.f32 %v1474, %v1480
        %v1483 = vmul.f32 %v1481, 1.442695
        %v1484 = vpow.pop %v1483
        %v1485 = vmul.f32 %v1482, 1.442695
        %v1486 = vpow.pop %v1485
        %v1487 = vsel %vm896, %v1484, 0.0
        %1488 = vadd.xlane.f32.xlu0 %v1487
        %v1489 = vpop.xlane.xlu0 %1488
        %v1490 = vsel %vm896, %v1486, 0.0
        %1491 = vadd.xlane.f32.xlu0 %v1490
        %v1492 = vpop.xlane.xlu0 %1491
        %v1493 = vrcp.pop %v1489
        %v1494 = vrcp.pop %v1492
        %v1495 = vmul.f32 %v1484, %v1493
        %v1496 = vmul.f32 %v1486, %v1494
        %v1498 = vsel %vm896, %v1495, 0
        %v1501 = vsel %vm896, %v1496, 0
        %1503 = vmatpush.msra.mxu0 0.0
        %1504 = vmatpush.msra.mxu0 0.0
        %1505 = vmatpush.msra.mxu0 0.0
        %1506 = vmatpush.msra.mxu0 0.0
        %1507 = vmatpush.msra.mxu0 0.0
        %1508 = vmatpush.msra.mxu0 0.0
        %1509 = vmatpush.msra.mxu0 0.0
        %1510 = vmatpush.msra.mxu0 0.0
        %1511 = vmatpush.msra.mxu0 0.0
        %1512 = vmatpush.msra.mxu0 0.0
        %1513 = vmatpush.msra.mxu0 0.0
        %1514 = vmatpush.msra.mxu0 0.0
        %1515 = vmatpush.msra.mxu0 0.0
        %1516 = vmatpush.msra.mxu0 0.0
        %1517 = vmatpush.msra.mxu0 %v1084
        %1518 = vmatpush.msra.mxu0 %v1082
        %1519 = vmatmul.f32.gmra.mxu0 %v1498
        %v1520 = vpop.f32.mrf.mxu0
        %v1521 = vadd.f32 0.0, %v1520
        %1522 = vmatmul.f32.gmra.mxu0 %v1501
        %v1523 = vpop.f32.mrf.mxu0
        %v1524 = vadd.f32 0.0, %v1523
        %1525 = vdwg.mxu0
        %1526 = vmatpush.msra.mxu0 0.0
        %1527 = vmatpush.msra.mxu0 0.0
        %1528 = vmatpush.msra.mxu0 0.0
        %1529 = vmatpush.msra.mxu0 0.0
        %1530 = vmatpush.msra.mxu0 0.0
        %1531 = vmatpush.msra.mxu0 0.0
        %1532 = vmatpush.msra.mxu0 0.0
        %1533 = vmatpush.msra.mxu0 0.0
        %1534 = vmatpush.msra.mxu0 0.0
        %1535 = vmatpush.msra.mxu0 0.0
        %1536 = vmatpush.msra.mxu0 0.0
        %1537 = vmatpush.msra.mxu0 0.0
        %1538 = vmatpush.msra.mxu0 0.0
        %1539 = vmatpush.msra.mxu0 0.0
        %1540 = vmatpush.msra.mxu0 %v1085
        %1541 = vmatpush.msra.mxu0 %v1083
        %1542 = vmatmul.f32.gmra.mxu0 %v1498
        %v1543 = vpop.f32.mrf.mxu0
        %v1544 = vadd.f32 0.0, %v1543
        %1545 = vmatmul.f32.gmra.mxu0 %v1501
        %v1546 = vpop.f32.mrf.mxu0
        %v1547 = vadd.f32 0.0, %v1546
        %1548 = vdwg.mxu0
        %v1549 = vmul.f32 %v1521, %v949
        %v1550 = vmul.f32 %v1544, %v950
        %v1551 = vmul.f32 %v1524, %v951
        %v1552 = vmul.f32 %v1547, %v952
        %v1554 = vsel %vm896, %v1550, 0
        %v1557 = vsel %vm896, %v1552, 0
        %1559 = vmatpush.msra.mxu0 %v1157
        %1560 = vmatpush.msra.mxu0 %v1156
        %1561 = vmatpush.msra.mxu0 %v1155
        %1562 = vmatpush.msra.mxu0 %v1154
        %1563 = vmatpush.msra.mxu0 %v1153
        %1564 = vmatpush.msra.mxu0 %v1152
        %1565 = vmatpush.msra.mxu0 %v1151
        %1566 = vmatpush.msra.mxu0 %v1150
        %1567 = vmatpush.msra.mxu0 %v1149
        %1568 = vmatpush.msra.mxu0 %v1148
        %1569 = vmatpush.msra.mxu0 %v1147
        %1570 = vmatpush.msra.mxu0 %v1146
        %1571 = vmatpush.msra.mxu0 %v1145
        %1572 = vmatpush.msra.mxu0 %v1144
        %1573 = vmatpush.msra.mxu0 %v1143
        %1574 = vmatpush.msra.mxu0 %v1142
        %1575 = vmatmul.f32.gmra.mxu0 %v1549
        %v1576 = vpop.f32.mrf.mxu0
        %v1577 = vadd.f32 0.0, %v1576
        %1578 = vmatmul.f32.gmra.mxu0 %v1551
        %v1579 = vpop.f32.mrf.mxu0
        %v1580 = vadd.f32 0.0, %v1579
        %1581 = vdwg.mxu0
        %1582 = vmatpush.msra.mxu0 0.0
        %1583 = vmatpush.msra.mxu0 0.0
        %1584 = vmatpush.msra.mxu0 0.0
        %1585 = vmatpush.msra.mxu0 0.0
        %1586 = vmatpush.msra.mxu0 0.0
        %1587 = vmatpush.msra.mxu0 0.0
        %1588 = vmatpush.msra.mxu0 0.0
        %1589 = vmatpush.msra.mxu0 0.0
        %1590 = vmatpush.msra.mxu0 0.0
        %1591 = vmatpush.msra.mxu0 0.0
        %1592 = vmatpush.msra.mxu0 0.0
        %1593 = vmatpush.msra.mxu0 0.0
        %1594 = vmatpush.msra.mxu0 0.0
        %1595 = vmatpush.msra.mxu0 0.0
        %1596 = vmatpush.msra.mxu0 %v1159
        %1597 = vmatpush.msra.mxu0 %v1158
        %1598 = vmatmul.f32.gmra.mxu0 %v1554
        %v1599 = vpop.f32.mrf.mxu0
        %v1600 = vadd.f32 %v1577, %v1599
        %1601 = vmatmul.f32.gmra.mxu0 %v1557
        %v1602 = vpop.f32.mrf.mxu0
        %v1603 = vadd.f32 %v1580, %v1602
        %1604 = vdwg.mxu0
        %1605 = vmatpush.msra.mxu0 0.0
        %1606 = vmatpush.msra.mxu0 0.0
        %1607 = vmatpush.msra.mxu0 0.0
        %1608 = vmatpush.msra.mxu0 0.0
        %1609 = vmatpush.msra.mxu0 0.0
        %1610 = vmatpush.msra.mxu0 0.0
        %1611 = vmatpush.msra.mxu0 0.0
        %1612 = vmatpush.msra.mxu0 0.0
        %1613 = vmatpush.msra.mxu0 0.0
        %1614 = vmatpush.msra.mxu0 0.0
        %1615 = vmatpush.msra.mxu0 0.0
        %1616 = vmatpush.msra.mxu0 0.0
        %1617 = vmatpush.msra.mxu0 0.0
        %1618 = vmatpush.msra.mxu0 0.0
        %1619 = vmatpush.msra.mxu0 %v1334
        %1620 = vmatpush.msra.mxu0 %v1331
        %1621 = vmatmul.f32.gmra.mxu0 %v1498
        %v1622 = vpop.f32.mrf.mxu0
        %v1623 = vadd.f32 %v1600, %v1622
        %1624 = vmatmul.f32.gmra.mxu0 %v1501
        %v1625 = vpop.f32.mrf.mxu0
        %v1626 = vadd.f32 %v1603, %v1625
        %1627 = vdwg.mxu0
        %s1628 = scalar_lea.vmem %s12, 16
        %v1629 = vld [vmem:[%s1628] sm:$0xff]
        %v1630 = vld [vmem:[%s1628 + $0x8] sm:$0xff]
        %v1632 = vsel %vm896, %v1623, 0
        %v1635 = vsel %vm896, %v1626, 0
        %1637 = vmatpush.msra.mxu0 0.0
        %1638 = vmatpush.msra.mxu0 0.0
        %1639 = vmatpush.msra.mxu0 0.0
        %1640 = vmatpush.msra.mxu0 0.0
        %1641 = vmatpush.msra.mxu0 0.0
        %1642 = vmatpush.msra.mxu0 0.0
        %1643 = vmatpush.msra.mxu0 0.0
        %1644 = vmatpush.msra.mxu0 0.0
        %1645 = vmatpush.msra.mxu0 0.0
        %1646 = vmatpush.msra.mxu0 0.0
        %1647 = vmatpush.msra.mxu0 0.0
        %1648 = vmatpush.msra.mxu0 0.0
        %1649 = vmatpush.msra.mxu0 0.0
        %1650 = vmatpush.msra.mxu0 0.0
        %1651 = vmatpush.msra.mxu0 %v1630
        %1652 = vmatpush.msra.mxu0 %v1629
        %1653 = vmatmul.f32.gmra.mxu0 %v1632
        %v1654 = vpop.f32.mrf.mxu0
        %v1655 = vadd.f32 0.0, %v1654
        %1656 = vmatmul.f32.gmra.mxu0 %v1635
        %v1657 = vpop.f32.mrf.mxu0
        %v1658 = vadd.f32 0.0, %v1657
        %1659 = vdwg.mxu0
        %v1661 = vsel %vm896, %v1230, 0
        %v1664 = vsel %vm896, %v1233, 0
        %1666 = vmatpush.msra.mxu0 0.0
        %1667 = vmatpush.msra.mxu0 0.0
        %1668 = vmatpush.msra.mxu0 0.0
        %1669 = vmatpush.msra.mxu0 0.0
        %1670 = vmatpush.msra.mxu0 0.0
        %1671 = vmatpush.msra.mxu0 0.0
        %1672 = vmatpush.msra.mxu0 0.0
        %1673 = vmatpush.msra.mxu0 0.0
        %1674 = vmatpush.msra.mxu0 0.0
        %1675 = vmatpush.msra.mxu0 0.0
        %1676 = vmatpush.msra.mxu0 0.0
        %1677 = vmatpush.msra.mxu0 0.0
        %1678 = vmatpush.msra.mxu0 0.0
        %1679 = vmatpush.msra.mxu0 0.0
        %1680 = vmatpush.msra.mxu0 %v1236
        %1681 = vmatpush.msra.mxu0 %v1235
        %1682 = vmatmul.f32.gmra.mxu0 %v1661
        %v1683 = vpop.f32.mrf.mxu0
        %v1684 = vadd.f32 %v1655, %v1683
        %1685 = vmatmul.f32.gmra.mxu0 %v1664
        %v1686 = vpop.f32.mrf.mxu0
        %v1687 = vadd.f32 %v1658, %v1686
        %1688 = vdwg.mxu0
        %v1689 = vld [vmem:[%s13] sm:$0x1]
        %v1691 = vperm.slane %v1689, 0
        %v1693 = vadd.f32 %v1684, %v1691
        %v1694 = vadd.f32 %v1687, %v1691
        %v1695 = vadd.f32 %v790, %v1693
        %v1696 = vadd.f32 %v791, %v1694
        %v1697 = vld [vmem:[%s16] sm:$0x1]
        %v1698 = vld [vmem:[%s17] sm:$0x1]
        %v1699 = vsel %vm800, %v1695, 0.0
        %1700 = vadd.xlane.f32.xlu0 %v1699
        %v1701 = vpop.xlane.xlu0 %1700
        %v1702 = vsel %vm800, %v1696, 0.0
        %1703 = vadd.xlane.f32.xlu0 %v1702
        %v1704 = vpop.xlane.xlu0 %1703
        %v1705 = vrcp.pop 32.0
        %v1706 = vmul.f32 32.0, %v1705
        %v1707 = vsub.f32 1.0, %v1706
        %v1708 = vmul.f32 %v1705, %v1707
        %v1709 = vadd.f32 %v1705, %v1708
        %vm1710 = vweird.f32 %v1705
        %v1711 = vsel %vm1710, %v1705, %v1709
        %v1712 = vmul.f32 %v1701, %v1711
        %v1713 = vmul.f32 %v1704, %v1711
        %v1714 = vsub.f32 %v1695, %v1712
        %v1715 = vsub.f32 %v1696, %v1713
        %v1716 = vmul.f32 %v1714, %v1714
        %v1717 = vmul.f32 %v1715, %v1715
        %v1718 = vsel %vm800, %v1716, 0.0
        %1719 = vadd.xlane.f32.xlu0 %v1718
        %v1720 = vpop.xlane.xlu0 %1719
        %v1721 = vsel %vm800, %v1717, 0.0
        %1722 = vadd.xlane.f32.xlu0 %v1721
        %v1723 = vpop.xlane.xlu0 %1722
        %v1724 = vmul.f32 %v1720, %v1711
        %v1725 = vmul.f32 %v1723, %v1711
        %v1726 = vadd.f32 %v1724, 1e-05
        %v1727 = vadd.f32 %v1725, 1e-05
        %v1728 = vrsqrt.pop %v1726
        %v1729 = vmul.f32 %v1728, %v1726
        %v1730 = vmul.f32 %v1729, %v1728
        %v1731 = vmul.f32 0.5, %v1730
        %v1732 = vsub.f32 1.5, %v1731
        %v1733 = vmul.f32 %v1728, %v1732
        %vm1734 = vweird.f32 %v1726
        %vm1735 = vweird.f32 %v1728
        %vm1736 = vmor %vm1734, %vm1735
        %v1737 = vsel %vm1736, %v1728, %v1733
        %v1738 = vrsqrt.pop %v1727
        %v1739 = vmul.f32 %v1738, %v1727
        %v1740 = vmul.f32 %v1739, %v1738
        %v1741 = vmul.f32 0.5, %v1740
        %v1742 = vsub.f32 1.5, %v1741
        %v1743 = vmul.f32 %v1738, %v1742
        %vm1744 = vweird.f32 %v1727
        %vm1745 = vweird.f32 %v1738
        %vm1746 = vmor %vm1744, %vm1745
        %v1747 = vsel %vm1746, %v1738, %v1743
        %v1748 = vmul.f32 %v1714, %v1737
        %v1749 = vmul.f32 %v1715, %v1747
        %v1751 = vperm.slane %v1697, 0
        %v1753 = vmul.f32 %v1748, %v1751
        %v1754 = vmul.f32 %v1749, %v1751
        %v1756 = vperm.slane %v1698, 0
        %v1758 = vadd.f32 %v1753, %v1756
        %v1759 = vadd.f32 %v1754, %v1756
        %v1760 = vmul.f32 %v1758, %v783
        %v1761 = vmul.f32 %v1759, %v788
        %v1762 = vld [vmem:[%s18] sm:$0xff]
        %v1763 = vld [vmem:[%s18 + $0x8] sm:$0xff]
        %v1764 = vld [vmem:[%s18 + $0x10] sm:$0xff]
        %v1765 = vld [vmem:[%s18 + $0x18] sm:$0xff]
        %v1766 = vld [vmem:[%s19] sm:$0x1]
        %v1768 = vperm.slane %v1766, 0
        %v1771 = vsel %vm800, %v1760, 0
        %v1774 = vsel %vm800, %v1761, 0
        %1776 = vmatpush.msra.mxu0 0.0
        %1777 = vmatpush.msra.mxu0 0.0
        %1778 = vmatpush.msra.mxu0 0.0
        %1779 = vmatpush.msra.mxu0 0.0
        %1780 = vmatpush.msra.mxu0 0.0
        %1781 = vmatpush.msra.mxu0 0.0
        %1782 = vmatpush.msra.mxu0 0.0
        %1783 = vmatpush.msra.mxu0 0.0
        %1784 = vmatpush.msra.mxu0 0.0
        %1785 = vmatpush.msra.mxu0 0.0
        %1786 = vmatpush.msra.mxu0 0.0
        %1787 = vmatpush.msra.mxu0 0.0
        %1788 = vmatpush.msra.mxu0 %v1765
        %1789 = vmatpush.msra.mxu0 %v1764
        %1790 = vmatpush.msra.mxu0 %v1763
        %1791 = vmatpush.msra.mxu0 %v1762
        %1792 = vmatmul.f32.gmra.mxu0 %v1771
        %v1793 = vpop.f32.mrf.mxu0
        %v1794 = vadd.f32 %v1768, %v1793
        %1795 = vmatmul.f32.gmra.mxu0 %v1774
        %v1796 = vpop.f32.mrf.mxu0
        %v1797 = vadd.f32 %v1768, %v1796
        %1798 = vdwg.mxu0
        %v1799 = vmax.f32 %v1794, 0.0
        %v1800 = vmax.f32 %v1797, 0.0
        %v1801 = vmul.f32 %v1799, %v783
        %v1802 = vmul.f32 %v1800, %v788
        %v1803 = vld [vmem:[%s20] sm:$0xff]
        %v1804 = vld [vmem:[%s20 + $0x8] sm:$0xff]
        %v1805 = vld [vmem:[%s20 + $0x10] sm:$0xff]
        %v1806 = vld [vmem:[%s20 + $0x18] sm:$0xff]
        %v1807 = vld [vmem:[%s20 + $0x20] sm:$0xff]
        %v1808 = vld [vmem:[%s20 + $0x28] sm:$0xff]
        %v1809 = vld [vmem:[%s20 + $0x30] sm:$0xff]
        %v1810 = vld [vmem:[%s20 + $0x38] sm:$0xff]
        %v1811 = vld [vmem:[%s21] sm:$0x1]
        %v1813 = vperm.slane %v1811, 0
        %vm1815 = vcmask 523264
        %v1817 = vsel %vm1815, %v1801, 0
        %v1820 = vsel %vm1815, %v1802, 0
        %1822 = vmatpush.msra.mxu0 0.0
        %1823 = vmatpush.msra.mxu0 0.0
        %1824 = vmatpush.msra.mxu0 0.0
        %1825 = vmatpush.msra.mxu0 0.0
        %1826 = vmatpush.msra.mxu0 0.0
        %1827 = vmatpush.msra.mxu0 0.0
        %1828 = vmatpush.msra.mxu0 0.0
        %1829 = vmatpush.msra.mxu0 0.0
        %1830 = vmatpush.msra.mxu0 %v1810
        %1831 = vmatpush.msra.mxu0 %v1809
        %1832 = vmatpush.msra.mxu0 %v1808
        %1833 = vmatpush.msra.mxu0 %v1807
        %1834 = vmatpush.msra.mxu0 %v1806
        %1835 = vmatpush.msra.mxu0 %v1805
        %1836 = vmatpush.msra.mxu0 %v1804
        %1837 = vmatpush.msra.mxu0 %v1803
        %1838 = vmatmul.f32.gmra.mxu0 %v1817
        %v1839 = vpop.f32.mrf.mxu0
        %v1840 = vadd.f32 %v1813, %v1839
        %1841 = vmatmul.f32.gmra.mxu0 %v1820
        %v1842 = vpop.f32.mrf.mxu0
        %v1843 = vadd.f32 %v1813, %v1842
        %1844 = vdwg.mxu0
        %v1845 = vmul.f32 %v1840, %v783
        %v1846 = vmul.f32 %v1843, %v788
        %v1847 = vadd.f32 %v1758, %v1845
        %v1848 = vadd.f32 %v1759, %v1846
        %v1849 = vld [vmem:[%s22] sm:$0x1]
        %v1850 = vld [vmem:[%s23] sm:$0x1]
        %v1851 = vsel %vm800, %v1847, 0.0
        %1852 = vadd.xlane.f32.xlu0 %v1851
        %v1853 = vpop.xlane.xlu0 %1852
        %v1854 = vsel %vm800, %v1848, 0.0
        %1855 = vadd.xlane.f32.xlu0 %v1854
        %v1856 = vpop.xlane.xlu0 %1855
        %v1857 = vmul.f32 %v1853, %v1711
        %v1858 = vmul.f32 %v1856, %v1711
        %v1859 = vsub.f32 %v1847, %v1857
        %v1860 = vsub.f32 %v1848, %v1858
        %v1861 = vmul.f32 %v1859, %v1859
        %v1862 = vmul.f32 %v1860, %v1860
        %v1863 = vsel %vm800, %v1861, 0.0
        %1864 = vadd.xlane.f32.xlu0 %v1863
        %v1865 = vpop.xlane.xlu0 %1864
        %v1866 = vsel %vm800, %v1862, 0.0
        %1867 = vadd.xlane.f32.xlu0 %v1866
        %v1868 = vpop.xlane.xlu0 %1867
        %v1869 = vmul.f32 %v1865, %v1711
        %v1870 = vmul.f32 %v1868, %v1711
        %v1871 = vadd.f32 %v1869, 1e-05
        %v1872 = vadd.f32 %v1870, 1e-05
        %v1873 = vrsqrt.pop %v1871
        %v1874 = vmul.f32 %v1873, %v1871
        %v1875 = vmul.f32 %v1874, %v1873
        %v1876 = vmul.f32 0.5, %v1875
        %v1877 = vsub.f32 1.5, %v1876
        %v1878 = vmul.f32 %v1873, %v1877
        %vm1879 = vweird.f32 %v1871
        %vm1880 = vweird.f32 %v1873
        %vm1881 = vmor %vm1879, %vm1880
        %v1882 = vsel %vm1881, %v1873, %v1878
        %v1883 = vrsqrt.pop %v1872
        %v1884 = vmul.f32 %v1883, %v1872
        %v1885 = vmul.f32 %v1884, %v1883
        %v1886 = vmul.f32 0.5, %v1885
        %v1887 = vsub.f32 1.5, %v1886
        %v1888 = vmul.f32 %v1883, %v1887
        %vm1889 = vweird.f32 %v1872
        %vm1890 = vweird.f32 %v1883
        %vm1891 = vmor %vm1889, %vm1890
        %v1892 = vsel %vm1891, %v1883, %v1888
        %v1893 = vmul.f32 %v1859, %v1882
        %v1894 = vmul.f32 %v1860, %v1892
        %v1896 = vperm.slane %v1849, 0
        %v1898 = vmul.f32 %v1893, %v1896
        %v1899 = vmul.f32 %v1894, %v1896
        %v1901 = vperm.slane %v1850, 0
        %v1903 = vadd.f32 %v1898, %v1901
        %v1904 = vadd.f32 %v1899, %v1901
        %s1905 = scalar_lea.vmem %s6, 64
        %v1906 = vld [vmem:[%s1905] sm:$0xff]
        %v1907 = vld [vmem:[%s1905 + $0x8] sm:$0xff]
        %v1908 = vld [vmem:[%s1905 + $0x10] sm:$0xff]
        %v1909 = vld [vmem:[%s1905 + $0x18] sm:$0xff]
        %s1910 = scalar_lea.vmem %s7, 2
        %v1911 = vld [vmem:[%s1910] sm:$0x1]
        %v1913 = vperm.slane %v1911, 0
        %v1916 = vsel %vm800, %v1903, 0
        %v1919 = vsel %vm800, %v1904, 0
        %1921 = vmatpush.msra.mxu0 0.0
        %1922 = vmatpush.msra.mxu0 0.0
        %1923 = vmatpush.msra.mxu0 0.0
        %1924 = vmatpush.msra.mxu0 0.0
        %1925 = vmatpush.msra.mxu0 0.0
        %1926 = vmatpush.msra.mxu0 0.0
        %1927 = vmatpush.msra.mxu0 0.0
        %1928 = vmatpush.msra.mxu0 0.0
        %1929 = vmatpush.msra.mxu0 0.0
        %1930 = vmatpush.msra.mxu0 0.0
        %1931 = vmatpush.msra.mxu0 0.0
        %1932 = vmatpush.msra.mxu0 0.0
        %1933 = vmatpush.msra.mxu0 %v1909
        %1934 = vmatpush.msra.mxu0 %v1908
        %1935 = vmatpush.msra.mxu0 %v1907
        %1936 = vmatpush.msra.mxu0 %v1906
        %1937 = vmatmul.f32.gmra.mxu0 %v1916
        %v1938 = vpop.f32.mrf.mxu0
        %v1939 = vadd.f32 %v1913, %v1938
        %1940 = vmatmul.f32.gmra.mxu0 %v1919
        %v1941 = vpop.f32.mrf.mxu0
        %v1942 = vadd.f32 %v1913, %v1941
        %1943 = vdwg.mxu0
        %s1944 = scalar_lea.vmem %s8, 64
        %v1945 = vld [vmem:[%s1944] sm:$0xff]
        %v1946 = vld [vmem:[%s1944 + $0x8] sm:$0xff]
        %v1947 = vld [vmem:[%s1944 + $0x10] sm:$0xff]
        %v1948 = vld [vmem:[%s1944 + $0x18] sm:$0xff]
        %s1949 = scalar_lea.vmem %s9, 2
        %v1950 = vld [vmem:[%s1949] sm:$0x1]
        %v1952 = vperm.slane %v1950, 0
        %1954 = vmatpush.msra.mxu0 0.0
        %1955 = vmatpush.msra.mxu0 0.0
        %1956 = vmatpush.msra.mxu0 0.0
        %1957 = vmatpush.msra.mxu0 0.0
        %1958 = vmatpush.msra.mxu0 0.0
        %1959 = vmatpush.msra.mxu0 0.0
        %1960 = vmatpush.msra.mxu0 0.0
        %1961 = vmatpush.msra.mxu0 0.0
        %1962 = vmatpush.msra.mxu0 0.0
        %1963 = vmatpush.msra.mxu0 0.0
        %1964 = vmatpush.msra.mxu0 0.0
        %1965 = vmatpush.msra.mxu0 0.0
        %1966 = vmatpush.msra.mxu0 %v1948
        %1967 = vmatpush.msra.mxu0 %v1947
        %1968 = vmatpush.msra.mxu0 %v1946
        %1969 = vmatpush.msra.mxu0 %v1945
        %1970 = vmatmul.f32.gmra.mxu0 %v1916
        %v1971 = vpop.f32.mrf.mxu0
        %v1972 = vadd.f32 %v1952, %v1971
        %1973 = vmatmul.f32.gmra.mxu0 %v1919
        %v1974 = vpop.f32.mrf.mxu0
        %v1975 = vadd.f32 %v1952, %v1974
        %1976 = vdwg.mxu0
        %s1977 = scalar_lea.vmem %s10, 64
        %v1978 = vld [vmem:[%s1977] sm:$0xff]
        %v1979 = vld [vmem:[%s1977 + $0x8] sm:$0xff]
        %v1980 = vld [vmem:[%s1977 + $0x10] sm:$0xff]
        %v1981 = vld [vmem:[%s1977 + $0x18] sm:$0xff]
        %s1982 = scalar_lea.vmem %s11, 2
        %v1983 = vld [vmem:[%s1982] sm:$0x1]
        %v1985 = vperm.slane %v1983, 0
        %1987 = vmatpush.msra.mxu0 0.0
        %1988 = vmatpush.msra.mxu0 0.0
        %1989 = vmatpush.msra.mxu0 0.0
        %1990 = vmatpush.msra.mxu0 0.0
        %1991 = vmatpush.msra.mxu0 0.0
        %1992 = vmatpush.msra.mxu0 0.0
        %1993 = vmatpush.msra.mxu0 0.0
        %1994 = vmatpush.msra.mxu0 0.0
        %1995 = vmatpush.msra.mxu0 0.0
        %1996 = vmatpush.msra.mxu0 0.0
        %1997 = vmatpush.msra.mxu0 0.0
        %1998 = vmatpush.msra.mxu0 0.0
        %1999 = vmatpush.msra.mxu0 %v1981
        %2000 = vmatpush.msra.mxu0 %v1980
        %2001 = vmatpush.msra.mxu0 %v1979
        %2002 = vmatpush.msra.mxu0 %v1978
        %2003 = vmatmul.f32.gmra.mxu0 %v1916
        %v2004 = vpop.f32.mrf.mxu0
        %v2005 = vadd.f32 %v1985, %v2004
        %2006 = vmatmul.f32.gmra.mxu0 %v1919
        %v2007 = vpop.f32.mrf.mxu0
        %v2008 = vadd.f32 %v1985, %v2007
        %2009 = vdwg.mxu0
        %s2010 = scalar_lea.vmem %s14, 32
        %v2011 = vld [vmem:[%s2010] sm:$0xff]
        %v2012 = vld [vmem:[%s2010 + $0x8] sm:$0xff]
        %v2013 = vld [vmem:[%s2010 + $0x10] sm:$0xff]
        %v2014 = vld [vmem:[%s2010 + $0x18] sm:$0xff]
        %v2016 = vsel %vm896, %v1939, 0
        %v2019 = vsel %vm896, %v1942, 0
        %2021 = vmatpush.msra.mxu0 0.0
        %2022 = vmatpush.msra.mxu0 0.0
        %2023 = vmatpush.msra.mxu0 0.0
        %2024 = vmatpush.msra.mxu0 0.0
        %2025 = vmatpush.msra.mxu0 0.0
        %2026 = vmatpush.msra.mxu0 0.0
        %2027 = vmatpush.msra.mxu0 0.0
        %2028 = vmatpush.msra.mxu0 0.0
        %2029 = vmatpush.msra.mxu0 0.0
        %2030 = vmatpush.msra.mxu0 0.0
        %2031 = vmatpush.msra.mxu0 0.0
        %2032 = vmatpush.msra.mxu0 0.0
        %2033 = vmatpush.msra.mxu0 0.0
        %2034 = vmatpush.msra.mxu0 0.0
        %2035 = vmatpush.msra.mxu0 %v2013
        %2036 = vmatpush.msra.mxu0 %v2011
        %2037 = vmatmul.f32.gmra.mxu0 %v2016
        %v2038 = vpop.f32.mrf.mxu0
        %v2039 = vadd.f32 0.0, %v2038
        %2040 = vmatmul.f32.gmra.mxu0 %v2019
        %v2041 = vpop.f32.mrf.mxu0
        %v2042 = vadd.f32 0.0, %v2041
        %2043 = vdwg.mxu0
        %2044 = vmatpush.msra.mxu0 0.0
        %2045 = vmatpush.msra.mxu0 0.0
        %2046 = vmatpush.msra.mxu0 0.0
        %2047 = vmatpush.msra.mxu0 0.0
        %2048 = vmatpush.msra.mxu0 0.0
        %2049 = vmatpush.msra.mxu0 0.0
        %2050 = vmatpush.msra.mxu0 0.0
        %2051 = vmatpush.msra.mxu0 0.0
        %2052 = vmatpush.msra.mxu0 0.0
        %2053 = vmatpush.msra.mxu0 0.0
        %2054 = vmatpush.msra.mxu0 0.0
        %2055 = vmatpush.msra.mxu0 0.0
        %2056 = vmatpush.msra.mxu0 0.0
        %2057 = vmatpush.msra.mxu0 0.0
        %2058 = vmatpush.msra.mxu0 %v2014
        %2059 = vmatpush.msra.mxu0 %v2012
        %2060 = vmatmul.f32.gmra.mxu0 %v2016
        %v2061 = vpop.f32.mrf.mxu0
        %v2062 = vadd.f32 0.0, %v2061
        %2063 = vmatmul.f32.gmra.mxu0 %v2019
        %v2064 = vpop.f32.mrf.mxu0
        %v2065 = vadd.f32 0.0, %v2064
        %2066 = vdwg.mxu0
        %v2067 = vmul.f32 %v2039, %v949
        %v2068 = vmul.f32 %v2062, %v950
        %v2069 = vmul.f32 %v2042, %v951
        %v2070 = vmul.f32 %v2065, %v952
        %v2072 = vsel %vm896, %v2068, 0
        %v2075 = vsel %vm896, %v2070, 0
        %2077 = vmatpush.msra.mxu0 %v972
        %2078 = vmatpush.msra.mxu0 %v971
        %2079 = vmatpush.msra.mxu0 %v970
        %2080 = vmatpush.msra.mxu0 %v969
        %2081 = vmatpush.msra.mxu0 %v968
        %2082 = vmatpush.msra.mxu0 %v967
        %2083 = vmatpush.msra.mxu0 %v966
        %2084 = vmatpush.msra.mxu0 %v965
        %2085 = vmatpush.msra.mxu0 %v964
        %2086 = vmatpush.msra.mxu0 %v963
        %2087 = vmatpush.msra.mxu0 %v962
        %2088 = vmatpush.msra.mxu0 %v961
        %2089 = vmatpush.msra.mxu0 %v960
        %2090 = vmatpush.msra.mxu0 %v959
        %2091 = vmatpush.msra.mxu0 %v958
        %2092 = vmatpush.msra.mxu0 %v957
        %2093 = vmatmul.f32.gmra.mxu0 %v2067
        %v2094 = vpop.f32.mrf.mxu0
        %v2095 = vadd.f32 0.0, %v2094
        %2096 = vmatmul.f32.gmra.mxu0 %v2069
        %v2097 = vpop.f32.mrf.mxu0
        %v2098 = vadd.f32 0.0, %v2097
        %2099 = vdwg.mxu0
        %2100 = vmatpush.msra.mxu0 0.0
        %2101 = vmatpush.msra.mxu0 0.0
        %2102 = vmatpush.msra.mxu0 0.0
        %2103 = vmatpush.msra.mxu0 0.0
        %2104 = vmatpush.msra.mxu0 0.0
        %2105 = vmatpush.msra.mxu0 0.0
        %2106 = vmatpush.msra.mxu0 0.0
        %2107 = vmatpush.msra.mxu0 0.0
        %2108 = vmatpush.msra.mxu0 0.0
        %2109 = vmatpush.msra.mxu0 0.0
        %2110 = vmatpush.msra.mxu0 0.0
        %2111 = vmatpush.msra.mxu0 0.0
        %2112 = vmatpush.msra.mxu0 0.0
        %2113 = vmatpush.msra.mxu0 0.0
        %2114 = vmatpush.msra.mxu0 %v974
        %2115 = vmatpush.msra.mxu0 %v973
        %2116 = vmatmul.f32.gmra.mxu0 %v2072
        %v2117 = vpop.f32.mrf.mxu0
        %v2118 = vadd.f32 %v2095, %v2117
        %2119 = vmatmul.f32.gmra.mxu0 %v2075
        %v2120 = vpop.f32.mrf.mxu0
        %v2121 = vadd.f32 %v2098, %v2120
        %2122 = vdwg.mxu0
        %v2124 = vsel %vm896, %v1972, 0
        %v2127 = vsel %vm896, %v1975, 0
        %2129 = vmatpush.xpose.msra.mxu0 0.0
        %2130 = vmatpush.xpose.msra.mxu0 0.0
        %2131 = vmatpush.xpose.msra.mxu0 0.0
        %2132 = vmatpush.xpose.msra.mxu0 0.0
        %2133 = vmatpush.xpose.msra.mxu0 0.0
        %2134 = vmatpush.xpose.msra.mxu0 0.0
        %2135 = vmatpush.xpose.msra.mxu0 0.0
        %2136 = vmatpush.xpose.msra.mxu0 0.0
        %2137 = vmatpush.xpose.msra.mxu0 0.0
        %2138 = vmatpush.xpose.msra.mxu0 0.0
        %2139 = vmatpush.xpose.msra.mxu0 0.0
        %2140 = vmatpush.xpose.msra.mxu0 0.0
        %2141 = vmatpush.xpose.msra.mxu0 0.0
        %2142 = vmatpush.xpose.msra.mxu0 0.0
        %2143 = vmatpush.xpose.msra.mxu0 %v2127
        %2144 = vmatpush.xpose.msra.mxu0 %v2124
        %2145 = vmatmul.f32.gmra.mxu0 %v2016
        %v2146 = vpop.f32.mrf.mxu0
        %v2147 = vadd.f32 %v2118, %v2146
        %2148 = vmatmul.f32.gmra.mxu0 %v2019
        %v2149 = vpop.f32.mrf.mxu0
        %v2150 = vadd.f32 %v2121, %v2149
        %2151 = vdwg.mxu0
        %v2152 = vadd.f32 %v2147, %v1056
        %v2153 = vadd.f32 %v2150, %v1057
        %v2154 = vsel %vm896, %v2152, -inf
        %2155 = vmax.xlane.f32.xlu0 %v2154
        %v2156 = vpop.xlane.xlu0 %2155
        %v2157 = vsel %vm896, %v2153, -inf
        %2158 = vmax.xlane.f32.xlu0 %v2157
        %v2159 = vpop.xlane.xlu0 %2158
        %v2160 = vsub.f32 %v2152, %v2156
        %v2161 = vsub.f32 %v2153, %v2159
        %v2162 = vmul.f32 %v2160, 1.442695
        %v2163 = vpow.pop %v2162
        %v2164 = vmul.f32 %v2161, 1.442695
        %v2165 = vpow.pop %v2164
        %v2166 = vsel %vm896, %v2163, 0.0
        %2167 = vadd.xlane.f32.xlu0 %v2166
        %v2168 = vpop.xlane.xlu0 %2167
        %v2169 = vsel %vm896, %v2165, 0.0
        %2170 = vadd.xlane.f32.xlu0 %v2169
        %v2171 = vpop.xlane.xlu0 %2170
        %v2172 = vrcp.pop %v2168
        %v2173 = vrcp.pop %v2171
        %v2174 = vmul.f32 %v2163, %v2172
        %v2175 = vmul.f32 %v2165, %v2173
        %v2177 = vsel %vm896, %v2174, 0
        %v2180 = vsel %vm896, %v2175, 0
        %2182 = vmatpush.msra.mxu0 0.0
        %2183 = vmatpush.msra.mxu0 0.0
        %2184 = vmatpush.msra.mxu0 0.0
        %2185 = vmatpush.msra.mxu0 0.0
        %2186 = vmatpush.msra.mxu0 0.0
        %2187 = vmatpush.msra.mxu0 0.0
        %2188 = vmatpush.msra.mxu0 0.0
        %2189 = vmatpush.msra.mxu0 0.0
        %2190 = vmatpush.msra.mxu0 0.0
        %2191 = vmatpush.msra.mxu0 0.0
        %2192 = vmatpush.msra.mxu0 0.0
        %2193 = vmatpush.msra.mxu0 0.0
        %2194 = vmatpush.msra.mxu0 0.0
        %2195 = vmatpush.msra.mxu0 0.0
        %2196 = vmatpush.msra.mxu0 %v1084
        %2197 = vmatpush.msra.mxu0 %v1082
        %2198 = vmatmul.f32.gmra.mxu0 %v2177
        %v2199 = vpop.f32.mrf.mxu0
        %v2200 = vadd.f32 0.0, %v2199
        %2201 = vmatmul.f32.gmra.mxu0 %v2180
        %v2202 = vpop.f32.mrf.mxu0
        %v2203 = vadd.f32 0.0, %v2202
        %2204 = vdwg.mxu0
        %2205 = vmatpush.msra.mxu0 0.0
        %2206 = vmatpush.msra.mxu0 0.0
        %2207 = vmatpush.msra.mxu0 0.0
        %2208 = vmatpush.msra.mxu0 0.0
        %2209 = vmatpush.msra.mxu0 0.0
        %2210 = vmatpush.msra.mxu0 0.0
        %2211 = vmatpush.msra.mxu0 0.0
        %2212 = vmatpush.msra.mxu0 0.0
        %2213 = vmatpush.msra.mxu0 0.0
        %2214 = vmatpush.msra.mxu0 0.0
        %2215 = vmatpush.msra.mxu0 0.0
        %2216 = vmatpush.msra.mxu0 0.0
        %2217 = vmatpush.msra.mxu0 0.0
        %2218 = vmatpush.msra.mxu0 0.0
        %2219 = vmatpush.msra.mxu0 %v1085
        %2220 = vmatpush.msra.mxu0 %v1083
        %2221 = vmatmul.f32.gmra.mxu0 %v2177
        %v2222 = vpop.f32.mrf.mxu0
        %v2223 = vadd.f32 0.0, %v2222
        %2224 = vmatmul.f32.gmra.mxu0 %v2180
        %v2225 = vpop.f32.mrf.mxu0
        %v2226 = vadd.f32 0.0, %v2225
        %2227 = vdwg.mxu0
        %v2228 = vmul.f32 %v2200, %v949
        %v2229 = vmul.f32 %v2223, %v950
        %v2230 = vmul.f32 %v2203, %v951
        %v2231 = vmul.f32 %v2226, %v952
        %s2232 = scalar_lea.vmem %s15, 144
        %v2233 = vld [vmem:[%s2232] sm:$0xff]
        %v2234 = vld [vmem:[%s2232 + $0x8] sm:$0xff]
        %v2235 = vld [vmem:[%s2232 + $0x10] sm:$0xff]
        %v2236 = vld [vmem:[%s2232 + $0x18] sm:$0xff]
        %v2237 = vld [vmem:[%s2232 + $0x20] sm:$0xff]
        %v2238 = vld [vmem:[%s2232 + $0x28] sm:$0xff]
        %v2239 = vld [vmem:[%s2232 + $0x30] sm:$0xff]
        %v2240 = vld [vmem:[%s2232 + $0x38] sm:$0xff]
        %v2241 = vld [vmem:[%s2232 + $0x40] sm:$0xff]
        %v2242 = vld [vmem:[%s2232 + $0x48] sm:$0xff]
        %v2243 = vld [vmem:[%s2232 + $0x50] sm:$0xff]
        %v2244 = vld [vmem:[%s2232 + $0x58] sm:$0xff]
        %v2245 = vld [vmem:[%s2232 + $0x60] sm:$0xff]
        %v2246 = vld [vmem:[%s2232 + $0x68] sm:$0xff]
        %v2247 = vld [vmem:[%s2232 + $0x70] sm:$0xff]
        %v2248 = vld [vmem:[%s2232 + $0x78] sm:$0xff]
        %v2249 = vld [vmem:[%s2232 + $0x80] sm:$0xff]
        %v2250 = vld [vmem:[%s2232 + $0x88] sm:$0xff]
        %v2252 = vsel %vm896, %v2229, 0
        %v2255 = vsel %vm896, %v2231, 0
        %2257 = vmatpush.msra.mxu0 %v2248
        %2258 = vmatpush.msra.mxu0 %v2247
        %2259 = vmatpush.msra.mxu0 %v2246
        %2260 = vmatpush.msra.mxu0 %v2245
        %2261 = vmatpush.msra.mxu0 %v2244
        %2262 = vmatpush.msra.mxu0 %v2243
        %2263 = vmatpush.msra.mxu0 %v2242
        %2264 = vmatpush.msra.mxu0 %v2241
        %2265 = vmatpush.msra.mxu0 %v2240
        %2266 = vmatpush.msra.mxu0 %v2239
        %2267 = vmatpush.msra.mxu0 %v2238
        %2268 = vmatpush.msra.mxu0 %v2237
        %2269 = vmatpush.msra.mxu0 %v2236
        %2270 = vmatpush.msra.mxu0 %v2235
        %2271 = vmatpush.msra.mxu0 %v2234
        %2272 = vmatpush.msra.mxu0 %v2233
        %2273 = vmatmul.f32.gmra.mxu0 %v2228
        %v2274 = vpop.f32.mrf.mxu0
        %v2275 = vadd.f32 0.0, %v2274
        %2276 = vmatmul.f32.gmra.mxu0 %v2230
        %v2277 = vpop.f32.mrf.mxu0
        %v2278 = vadd.f32 0.0, %v2277
        %2279 = vdwg.mxu0
        %2280 = vmatpush.msra.mxu0 0.0
        %2281 = vmatpush.msra.mxu0 0.0
        %2282 = vmatpush.msra.mxu0 0.0
        %2283 = vmatpush.msra.mxu0 0.0
        %2284 = vmatpush.msra.mxu0 0.0
        %2285 = vmatpush.msra.mxu0 0.0
        %2286 = vmatpush.msra.mxu0 0.0
        %2287 = vmatpush.msra.mxu0 0.0
        %2288 = vmatpush.msra.mxu0 0.0
        %2289 = vmatpush.msra.mxu0 0.0
        %2290 = vmatpush.msra.mxu0 0.0
        %2291 = vmatpush.msra.mxu0 0.0
        %2292 = vmatpush.msra.mxu0 0.0
        %2293 = vmatpush.msra.mxu0 0.0
        %2294 = vmatpush.msra.mxu0 %v2250
        %2295 = vmatpush.msra.mxu0 %v2249
        %2296 = vmatmul.f32.gmra.mxu0 %v2252
        %v2297 = vpop.f32.mrf.mxu0
        %v2298 = vadd.f32 %v2275, %v2297
        %2299 = vmatmul.f32.gmra.mxu0 %v2255
        %v2300 = vpop.f32.mrf.mxu0
        %v2301 = vadd.f32 %v2278, %v2300
        %2302 = vdwg.mxu0
        %2303 = vmatpush.msra.mxu0 0.0
        %2304 = vmatpush.msra.mxu0 0.0
        %2305 = vmatpush.msra.mxu0 0.0
        %2306 = vmatpush.msra.mxu0 0.0
        %2307 = vmatpush.msra.mxu0 0.0
        %2308 = vmatpush.msra.mxu0 0.0
        %2309 = vmatpush.msra.mxu0 0.0
        %2310 = vmatpush.msra.mxu0 0.0
        %2311 = vmatpush.msra.mxu0 0.0
        %2312 = vmatpush.msra.mxu0 0.0
        %2313 = vmatpush.msra.mxu0 0.0
        %2314 = vmatpush.msra.mxu0 0.0
        %2315 = vmatpush.msra.mxu0 0.0
        %2316 = vmatpush.msra.mxu0 0.0
        %2317 = vmatpush.msra.mxu0 %v2008
        %2318 = vmatpush.msra.mxu0 %v2005
        %2319 = vmatmul.f32.gmra.mxu0 %v2177
        %v2320 = vpop.f32.mrf.mxu0
        %v2321 = vadd.f32 %v2298, %v2320
        %2322 = vmatmul.f32.gmra.mxu0 %v2180
        %v2323 = vpop.f32.mrf.mxu0
        %v2324 = vadd.f32 %v2301, %v2323
        %2325 = vdwg.mxu0
        %s2326 = scalar_lea.vmem %s12, 32
        %v2327 = vld [vmem:[%s2326] sm:$0xff]
        %v2328 = vld [vmem:[%s2326 + $0x8] sm:$0xff]
        %s2329 = scalar_lea.vmem %s6, 96
        %v2330 = vld [vmem:[%s2329] sm:$0xff]
        %v2331 = vld [vmem:[%s2329 + $0x8] sm:$0xff]
        %v2332 = vld [vmem:[%s2329 + $0x10] sm:$0xff]
        %v2333 = vld [vmem:[%s2329 + $0x18] sm:$0xff]
        %s2334 = scalar_lea.vmem %s7, 3
        %v2335 = vld [vmem:[%s2334] sm:$0x1]
        %v2337 = vperm.slane %v2335, 0
        %2339 = vmatpush.msra.mxu0 0.0
        %2340 = vmatpush.msra.mxu0 0.0
        %2341 = vmatpush.msra.mxu0 0.0
        %2342 = vmatpush.msra.mxu0 0.0
        %2343 = vmatpush.msra.mxu0 0.0
        %2344 = vmatpush.msra.mxu0 0.0
        %2345 = vmatpush.msra.mxu0 0.0
        %2346 = vmatpush.msra.mxu0 0.0
        %2347 = vmatpush.msra.mxu0 0.0
        %2348 = vmatpush.msra.mxu0 0.0
        %2349 = vmatpush.msra.mxu0 0.0
        %2350 = vmatpush.msra.mxu0 0.0
        %2351 = vmatpush.msra.mxu0 %v2333
        %2352 = vmatpush.msra.mxu0 %v2332
        %2353 = vmatpush.msra.mxu0 %v2331
        %2354 = vmatpush.msra.mxu0 %v2330
        %2355 = vmatmul.f32.gmra.mxu0 %v1916
        %v2356 = vpop.f32.mrf.mxu0
        %v2357 = vadd.f32 %v2337, %v2356
        %2358 = vmatmul.f32.gmra.mxu0 %v1919
        %v2359 = vpop.f32.mrf.mxu0
        %v2360 = vadd.f32 %v2337, %v2359
        %2361 = vdwg.mxu0
        %s2362 = scalar_lea.vmem %s8, 96
        %v2363 = vld [vmem:[%s2362] sm:$0xff]
        %v2364 = vld [vmem:[%s2362 + $0x8] sm:$0xff]
        %v2365 = vld [vmem:[%s2362 + $0x10] sm:$0xff]
        %v2366 = vld [vmem:[%s2362 + $0x18] sm:$0xff]
        %s2367 = scalar_lea.vmem %s9, 3
        %v2368 = vld [vmem:[%s2367] sm:$0x1]
        %v2370 = vperm.slane %v2368, 0
        %2372 = vmatpush.msra.mxu0 0.0
        %2373 = vmatpush.msra.mxu0 0.0
        %2374 = vmatpush.msra.mxu0 0.0
        %2375 = vmatpush.msra.mxu0 0.0
        %2376 = vmatpush.msra.mxu0 0.0
        %2377 = vmatpush.msra.mxu0 0.0
        %2378 = vmatpush.msra.mxu0 0.0
        %2379 = vmatpush.msra.mxu0 0.0
        %2380 = vmatpush.msra.mxu0 0.0
        %2381 = vmatpush.msra.mxu0 0.0
        %2382 = vmatpush.msra.mxu0 0.0
        %2383 = vmatpush.msra.mxu0 0.0
        %2384 = vmatpush.msra.mxu0 %v2366
        %2385 = vmatpush.msra.mxu0 %v2365
        %2386 = vmatpush.msra.mxu0 %v2364
        %2387 = vmatpush.msra.mxu0 %v2363
        %2388 = vmatmul.f32.gmra.mxu0 %v1916
        %v2389 = vpop.f32.mrf.mxu0
        %v2390 = vadd.f32 %v2370, %v2389
        %2391 = vmatmul.f32.gmra.mxu0 %v1919
        %v2392 = vpop.f32.mrf.mxu0
        %v2393 = vadd.f32 %v2370, %v2392
        %2394 = vdwg.mxu0
        %s2395 = scalar_lea.vmem %s10, 96
        %v2396 = vld [vmem:[%s2395] sm:$0xff]
        %v2397 = vld [vmem:[%s2395 + $0x8] sm:$0xff]
        %v2398 = vld [vmem:[%s2395 + $0x10] sm:$0xff]
        %v2399 = vld [vmem:[%s2395 + $0x18] sm:$0xff]
        %s2400 = scalar_lea.vmem %s11, 3
        %v2401 = vld [vmem:[%s2400] sm:$0x1]
        %v2403 = vperm.slane %v2401, 0
        %2405 = vmatpush.msra.mxu0 0.0
        %2406 = vmatpush.msra.mxu0 0.0
        %2407 = vmatpush.msra.mxu0 0.0
        %2408 = vmatpush.msra.mxu0 0.0
        %2409 = vmatpush.msra.mxu0 0.0
        %2410 = vmatpush.msra.mxu0 0.0
        %2411 = vmatpush.msra.mxu0 0.0
        %2412 = vmatpush.msra.mxu0 0.0
        %2413 = vmatpush.msra.mxu0 0.0
        %2414 = vmatpush.msra.mxu0 0.0
        %2415 = vmatpush.msra.mxu0 0.0
        %2416 = vmatpush.msra.mxu0 0.0
        %2417 = vmatpush.msra.mxu0 %v2399
        %2418 = vmatpush.msra.mxu0 %v2398
        %2419 = vmatpush.msra.mxu0 %v2397
        %2420 = vmatpush.msra.mxu0 %v2396
        %2421 = vmatmul.f32.gmra.mxu0 %v1916
        %v2422 = vpop.f32.mrf.mxu0
        %v2423 = vadd.f32 %v2403, %v2422
        %2424 = vmatmul.f32.gmra.mxu0 %v1919
        %v2425 = vpop.f32.mrf.mxu0
        %v2426 = vadd.f32 %v2403, %v2425
        %2427 = vdwg.mxu0
        %v2429 = vsel %vm896, %v2357, 0
        %v2432 = vsel %vm896, %v2360, 0
        %2434 = vmatpush.msra.mxu0 0.0
        %2435 = vmatpush.msra.mxu0 0.0
        %2436 = vmatpush.msra.mxu0 0.0
        %2437 = vmatpush.msra.mxu0 0.0
        %2438 = vmatpush.msra.mxu0 0.0
        %2439 = vmatpush.msra.mxu0 0.0
        %2440 = vmatpush.msra.mxu0 0.0
        %2441 = vmatpush.msra.mxu0 0.0
        %2442 = vmatpush.msra.mxu0 0.0
        %2443 = vmatpush.msra.mxu0 0.0
        %2444 = vmatpush.msra.mxu0 0.0
        %2445 = vmatpush.msra.mxu0 0.0
        %2446 = vmatpush.msra.mxu0 0.0
        %2447 = vmatpush.msra.mxu0 0.0
        %2448 = vmatpush.msra.mxu0 %v2013
        %2449 = vmatpush.msra.mxu0 %v2011
        %2450 = vmatmul.f32.gmra.mxu0 %v2429
        %v2451 = vpop.f32.mrf.mxu0
        %v2452 = vadd.f32 0.0, %v2451
        %2453 = vmatmul.f32.gmra.mxu0 %v2432
        %v2454 = vpop.f32.mrf.mxu0
        %v2455 = vadd.f32 0.0, %v2454
        %2456 = vdwg.mxu0
        %2457 = vmatpush.msra.mxu0 0.0
        %2458 = vmatpush.msra.mxu0 0.0
        %2459 = vmatpush.msra.mxu0 0.0
        %2460 = vmatpush.msra.mxu0 0.0
        %2461 = vmatpush.msra.mxu0 0.0
        %2462 = vmatpush.msra.mxu0 0.0
        %2463 = vmatpush.msra.mxu0 0.0
        %2464 = vmatpush.msra.mxu0 0.0
        %2465 = vmatpush.msra.mxu0 0.0
        %2466 = vmatpush.msra.mxu0 0.0
        %2467 = vmatpush.msra.mxu0 0.0
        %2468 = vmatpush.msra.mxu0 0.0
        %2469 = vmatpush.msra.mxu0 0.0
        %2470 = vmatpush.msra.mxu0 0.0
        %2471 = vmatpush.msra.mxu0 %v2014
        %2472 = vmatpush.msra.mxu0 %v2012
        %2473 = vmatmul.f32.gmra.mxu0 %v2429
        %v2474 = vpop.f32.mrf.mxu0
        %v2475 = vadd.f32 0.0, %v2474
        %2476 = vmatmul.f32.gmra.mxu0 %v2432
        %v2477 = vpop.f32.mrf.mxu0
        %v2478 = vadd.f32 0.0, %v2477
        %2479 = vdwg.mxu0
        %v2480 = vmul.f32 %v2452, %v949
        %v2481 = vmul.f32 %v2475, %v950
        %v2482 = vmul.f32 %v2455, %v951
        %v2483 = vmul.f32 %v2478, %v952
        %v2485 = vsel %vm896, %v2481, 0
        %v2488 = vsel %vm896, %v2483, 0
        %2490 = vmatpush.msra.mxu0 %v972
        %2491 = vmatpush.msra.mxu0 %v971
        %2492 = vmatpush.msra.mxu0 %v970
        %2493 = vmatpush.msra.mxu0 %v969
        %2494 = vmatpush.msra.mxu0 %v968
        %2495 = vmatpush.msra.mxu0 %v967
        %2496 = vmatpush.msra.mxu0 %v966
        %2497 = vmatpush.msra.mxu0 %v965
        %2498 = vmatpush.msra.mxu0 %v964
        %2499 = vmatpush.msra.mxu0 %v963
        %2500 = vmatpush.msra.mxu0 %v962
        %2501 = vmatpush.msra.mxu0 %v961
        %2502 = vmatpush.msra.mxu0 %v960
        %2503 = vmatpush.msra.mxu0 %v959
        %2504 = vmatpush.msra.mxu0 %v958
        %2505 = vmatpush.msra.mxu0 %v957
        %2506 = vmatmul.f32.gmra.mxu0 %v2480
        %v2507 = vpop.f32.mrf.mxu0
        %v2508 = vadd.f32 0.0, %v2507
        %2509 = vmatmul.f32.gmra.mxu0 %v2482
        %v2510 = vpop.f32.mrf.mxu0
        %v2511 = vadd.f32 0.0, %v2510
        %2512 = vdwg.mxu0
        %2513 = vmatpush.msra.mxu0 0.0
        %2514 = vmatpush.msra.mxu0 0.0
        %2515 = vmatpush.msra.mxu0 0.0
        %2516 = vmatpush.msra.mxu0 0.0
        %2517 = vmatpush.msra.mxu0 0.0
        %2518 = vmatpush.msra.mxu0 0.0
        %2519 = vmatpush.msra.mxu0 0.0
        %2520 = vmatpush.msra.mxu0 0.0
        %2521 = vmatpush.msra.mxu0 0.0
        %2522 = vmatpush.msra.mxu0 0.0
        %2523 = vmatpush.msra.mxu0 0.0
        %2524 = vmatpush.msra.mxu0 0.0
        %2525 = vmatpush.msra.mxu0 0.0
        %2526 = vmatpush.msra.mxu0 0.0
        %2527 = vmatpush.msra.mxu0 %v974
        %2528 = vmatpush.msra.mxu0 %v973
        %2529 = vmatmul.f32.gmra.mxu0 %v2485
        %v2530 = vpop.f32.mrf.mxu0
        %v2531 = vadd.f32 %v2508, %v2530
        %2532 = vmatmul.f32.gmra.mxu0 %v2488
        %v2533 = vpop.f32.mrf.mxu0
        %v2534 = vadd.f32 %v2511, %v2533
        %2535 = vdwg.mxu0
        %v2537 = vsel %vm896, %v2390, 0
        %v2540 = vsel %vm896, %v2393, 0
        %2542 = vmatpush.xpose.msra.mxu0 0.0
        %2543 = vmatpush.xpose.msra.mxu0 0.0
        %2544 = vmatpush.xpose.msra.mxu0 0.0
        %2545 = vmatpush.xpose.msra.mxu0 0.0
        %2546 = vmatpush.xpose.msra.mxu0 0.0
        %2547 = vmatpush.xpose.msra.mxu0 0.0
        %2548 = vmatpush.xpose.msra.mxu0 0.0
        %2549 = vmatpush.xpose.msra.mxu0 0.0
        %2550 = vmatpush.xpose.msra.mxu0 0.0
        %2551 = vmatpush.xpose.msra.mxu0 0.0
        %2552 = vmatpush.xpose.msra.mxu0 0.0
        %2553 = vmatpush.xpose.msra.mxu0 0.0
        %2554 = vmatpush.xpose.msra.mxu0 0.0
        %2555 = vmatpush.xpose.msra.mxu0 0.0
        %2556 = vmatpush.xpose.msra.mxu0 %v2540
        %2557 = vmatpush.xpose.msra.mxu0 %v2537
        %2558 = vmatmul.f32.gmra.mxu0 %v2429
        %v2559 = vpop.f32.mrf.mxu0
        %v2560 = vadd.f32 %v2531, %v2559
        %2561 = vmatmul.f32.gmra.mxu0 %v2432
        %v2562 = vpop.f32.mrf.mxu0
        %v2563 = vadd.f32 %v2534, %v2562
        %2564 = vdwg.mxu0
        %v2565 = vadd.f32 %v2560, %v1056
        %v2566 = vadd.f32 %v2563, %v1057
        %v2567 = vsel %vm896, %v2565, -inf
        %2568 = vmax.xlane.f32.xlu0 %v2567
        %v2569 = vpop.xlane.xlu0 %2568
        %v2570 = vsel %vm896, %v2566, -inf
        %2571 = vmax.xlane.f32.xlu0 %v2570
        %v2572 = vpop.xlane.xlu0 %2571
        %v2573 = vsub.f32 %v2565, %v2569
        %v2574 = vsub.f32 %v2566, %v2572
        %v2575 = vmul.f32 %v2573, 1.442695
        %v2576 = vpow.pop %v2575
        %v2577 = vmul.f32 %v2574, 1.442695
        %v2578 = vpow.pop %v2577
        %v2579 = vsel %vm896, %v2576, 0.0
        %2580 = vadd.xlane.f32.xlu0 %v2579
        %v2581 = vpop.xlane.xlu0 %2580
        %v2582 = vsel %vm896, %v2578, 0.0
        %2583 = vadd.xlane.f32.xlu0 %v2582
        %v2584 = vpop.xlane.xlu0 %2583
        %v2585 = vrcp.pop %v2581
        %v2586 = vrcp.pop %v2584
        %v2587 = vmul.f32 %v2576, %v2585
        %v2588 = vmul.f32 %v2578, %v2586
        %v2590 = vsel %vm896, %v2587, 0
        %v2593 = vsel %vm896, %v2588, 0
        %2595 = vmatpush.msra.mxu0 0.0
        %2596 = vmatpush.msra.mxu0 0.0
        %2597 = vmatpush.msra.mxu0 0.0
        %2598 = vmatpush.msra.mxu0 0.0
        %2599 = vmatpush.msra.mxu0 0.0
        %2600 = vmatpush.msra.mxu0 0.0
        %2601 = vmatpush.msra.mxu0 0.0
        %2602 = vmatpush.msra.mxu0 0.0
        %2603 = vmatpush.msra.mxu0 0.0
        %2604 = vmatpush.msra.mxu0 0.0
        %2605 = vmatpush.msra.mxu0 0.0
        %2606 = vmatpush.msra.mxu0 0.0
        %2607 = vmatpush.msra.mxu0 0.0
        %2608 = vmatpush.msra.mxu0 0.0
        %2609 = vmatpush.msra.mxu0 %v1084
        %2610 = vmatpush.msra.mxu0 %v1082
        %2611 = vmatmul.f32.gmra.mxu0 %v2590
        %v2612 = vpop.f32.mrf.mxu0
        %v2613 = vadd.f32 0.0, %v2612
        %2614 = vmatmul.f32.gmra.mxu0 %v2593
        %v2615 = vpop.f32.mrf.mxu0
        %v2616 = vadd.f32 0.0, %v2615
        %2617 = vdwg.mxu0
        %2618 = vmatpush.msra.mxu0 0.0
        %2619 = vmatpush.msra.mxu0 0.0
        %2620 = vmatpush.msra.mxu0 0.0
        %2621 = vmatpush.msra.mxu0 0.0
        %2622 = vmatpush.msra.mxu0 0.0
        %2623 = vmatpush.msra.mxu0 0.0
        %2624 = vmatpush.msra.mxu0 0.0
        %2625 = vmatpush.msra.mxu0 0.0
        %2626 = vmatpush.msra.mxu0 0.0
        %2627 = vmatpush.msra.mxu0 0.0
        %2628 = vmatpush.msra.mxu0 0.0
        %2629 = vmatpush.msra.mxu0 0.0
        %2630 = vmatpush.msra.mxu0 0.0
        %2631 = vmatpush.msra.mxu0 0.0
        %2632 = vmatpush.msra.mxu0 %v1085
        %2633 = vmatpush.msra.mxu0 %v1083
        %2634 = vmatmul.f32.gmra.mxu0 %v2590
        %v2635 = vpop.f32.mrf.mxu0
        %v2636 = vadd.f32 0.0, %v2635
        %2637 = vmatmul.f32.gmra.mxu0 %v2593
        %v2638 = vpop.f32.mrf.mxu0
        %v2639 = vadd.f32 0.0, %v2638
        %2640 = vdwg.mxu0
        %v2641 = vmul.f32 %v2613, %v949
        %v2642 = vmul.f32 %v2636, %v950
        %v2643 = vmul.f32 %v2616, %v951
        %v2644 = vmul.f32 %v2639, %v952
        %v2646 = vsel %vm896, %v2642, 0
        %v2649 = vsel %vm896, %v2644, 0
        %2651 = vmatpush.msra.mxu0 %v2248
        %2652 = vmatpush.msra.mxu0 %v2247
        %2653 = vmatpush.msra.mxu0 %v2246
        %2654 = vmatpush.msra.mxu0 %v2245
        %2655 = vmatpush.msra.mxu0 %v2244
        %2656 = vmatpush.msra.mxu0 %v2243
        %2657 = vmatpush.msra.mxu0 %v2242
        %2658 = vmatpush.msra.mxu0 %v2241
        %2659 = vmatpush.msra.mxu0 %v2240
        %2660 = vmatpush.msra.mxu0 %v2239
        %2661 = vmatpush.msra.mxu0 %v2238
        %2662 = vmatpush.msra.mxu0 %v2237
        %2663 = vmatpush.msra.mxu0 %v2236
        %2664 = vmatpush.msra.mxu0 %v2235
        %2665 = vmatpush.msra.mxu0 %v2234
        %2666 = vmatpush.msra.mxu0 %v2233
        %2667 = vmatmul.f32.gmra.mxu0 %v2641
        %v2668 = vpop.f32.mrf.mxu0
        %v2669 = vadd.f32 0.0, %v2668
        %2670 = vmatmul.f32.gmra.mxu0 %v2643
        %v2671 = vpop.f32.mrf.mxu0
        %v2672 = vadd.f32 0.0, %v2671
        %2673 = vdwg.mxu0
        %2674 = vmatpush.msra.mxu0 0.0
        %2675 = vmatpush.msra.mxu0 0.0
        %2676 = vmatpush.msra.mxu0 0.0
        %2677 = vmatpush.msra.mxu0 0.0
        %2678 = vmatpush.msra.mxu0 0.0
        %2679 = vmatpush.msra.mxu0 0.0
        %2680 = vmatpush.msra.mxu0 0.0
        %2681 = vmatpush.msra.mxu0 0.0
        %2682 = vmatpush.msra.mxu0 0.0
        %2683 = vmatpush.msra.mxu0 0.0
        %2684 = vmatpush.msra.mxu0 0.0
        %2685 = vmatpush.msra.mxu0 0.0
        %2686 = vmatpush.msra.mxu0 0.0
        %2687 = vmatpush.msra.mxu0 0.0
        %2688 = vmatpush.msra.mxu0 %v2250
        %2689 = vmatpush.msra.mxu0 %v2249
        %2690 = vmatmul.f32.gmra.mxu0 %v2646
        %v2691 = vpop.f32.mrf.mxu0
        %v2692 = vadd.f32 %v2669, %v2691
        %2693 = vmatmul.f32.gmra.mxu0 %v2649
        %v2694 = vpop.f32.mrf.mxu0
        %v2695 = vadd.f32 %v2672, %v2694
        %2696 = vdwg.mxu0
        %2697 = vmatpush.msra.mxu0 0.0
        %2698 = vmatpush.msra.mxu0 0.0
        %2699 = vmatpush.msra.mxu0 0.0
        %2700 = vmatpush.msra.mxu0 0.0
        %2701 = vmatpush.msra.mxu0 0.0
        %2702 = vmatpush.msra.mxu0 0.0
        %2703 = vmatpush.msra.mxu0 0.0
        %2704 = vmatpush.msra.mxu0 0.0
        %2705 = vmatpush.msra.mxu0 0.0
        %2706 = vmatpush.msra.mxu0 0.0
        %2707 = vmatpush.msra.mxu0 0.0
        %2708 = vmatpush.msra.mxu0 0.0
        %2709 = vmatpush.msra.mxu0 0.0
        %2710 = vmatpush.msra.mxu0 0.0
        %2711 = vmatpush.msra.mxu0 %v2426
        %2712 = vmatpush.msra.mxu0 %v2423
        %2713 = vmatmul.f32.gmra.mxu0 %v2590
        %v2714 = vpop.f32.mrf.mxu0
        %v2715 = vadd.f32 %v2692, %v2714
        %2716 = vmatmul.f32.gmra.mxu0 %v2593
        %v2717 = vpop.f32.mrf.mxu0
        %v2718 = vadd.f32 %v2695, %v2717
        %2719 = vdwg.mxu0
        %s2720 = scalar_lea.vmem %s12, 48
        %v2721 = vld [vmem:[%s2720] sm:$0xff]
        %v2722 = vld [vmem:[%s2720 + $0x8] sm:$0xff]
        %v2724 = vsel %vm896, %v2715, 0
        %v2727 = vsel %vm896, %v2718, 0
        %2729 = vmatpush.msra.mxu0 0.0
        %2730 = vmatpush.msra.mxu0 0.0
        %2731 = vmatpush.msra.mxu0 0.0
        %2732 = vmatpush.msra.mxu0 0.0
        %2733 = vmatpush.msra.mxu0 0.0
        %2734 = vmatpush.msra.mxu0 0.0
        %2735 = vmatpush.msra.mxu0 0.0
        %2736 = vmatpush.msra.mxu0 0.0
        %2737 = vmatpush.msra.mxu0 0.0
        %2738 = vmatpush.msra.mxu0 0.0
        %2739 = vmatpush.msra.mxu0 0.0
        %2740 = vmatpush.msra.mxu0 0.0
        %2741 = vmatpush.msra.mxu0 0.0
        %2742 = vmatpush.msra.mxu0 0.0
        %2743 = vmatpush.msra.mxu0 %v2722
        %2744 = vmatpush.msra.mxu0 %v2721
        %2745 = vmatmul.f32.gmra.mxu0 %v2724
        %v2746 = vpop.f32.mrf.mxu0
        %v2747 = vadd.f32 0.0, %v2746
        %2748 = vmatmul.f32.gmra.mxu0 %v2727
        %v2749 = vpop.f32.mrf.mxu0
        %v2750 = vadd.f32 0.0, %v2749
        %2751 = vdwg.mxu0
        %v2753 = vsel %vm896, %v2321, 0
        %v2756 = vsel %vm896, %v2324, 0
        %2758 = vmatpush.msra.mxu0 0.0
        %2759 = vmatpush.msra.mxu0 0.0
        %2760 = vmatpush.msra.mxu0 0.0
        %2761 = vmatpush.msra.mxu0 0.0
        %2762 = vmatpush.msra.mxu0 0.0
        %2763 = vmatpush.msra.mxu0 0.0
        %2764 = vmatpush.msra.mxu0 0.0
        %2765 = vmatpush.msra.mxu0 0.0
        %2766 = vmatpush.msra.mxu0 0.0
        %2767 = vmatpush.msra.mxu0 0.0
        %2768 = vmatpush.msra.mxu0 0.0
        %2769 = vmatpush.msra.mxu0 0.0
        %2770 = vmatpush.msra.mxu0 0.0
        %2771 = vmatpush.msra.mxu0 0.0
        %2772 = vmatpush.msra.mxu0 %v2328
        %2773 = vmatpush.msra.mxu0 %v2327
        %2774 = vmatmul.f32.gmra.mxu0 %v2753
        %v2775 = vpop.f32.mrf.mxu0
        %v2776 = vadd.f32 %v2747, %v2775
        %2777 = vmatmul.f32.gmra.mxu0 %v2756
        %v2778 = vpop.f32.mrf.mxu0
        %v2779 = vadd.f32 %v2750, %v2778
        %2780 = vdwg.mxu0
        %s2781 = scalar_lea.vmem %s13, 1
        %v2782 = vld [vmem:[%s2781] sm:$0x1]
        %v2784 = vperm.slane %v2782, 0
        %v2786 = vadd.f32 %v2776, %v2784
        %v2787 = vadd.f32 %v2779, %v2784
        %v2788 = vadd.f32 %v1903, %v2786
        %v2789 = vadd.f32 %v1904, %v2787
        %s2790 = scalar_lea.vmem %s16, 1
        %v2791 = vld [vmem:[%s2790] sm:$0x1]
        %s2792 = scalar_lea.vmem %s17, 1
        %v2793 = vld [vmem:[%s2792] sm:$0x1]
        %v2794 = vsel %vm800, %v2788, 0.0
        %2795 = vadd.xlane.f32.xlu0 %v2794
        %v2796 = vpop.xlane.xlu0 %2795
        %v2797 = vsel %vm800, %v2789, 0.0
        %2798 = vadd.xlane.f32.xlu0 %v2797
        %v2799 = vpop.xlane.xlu0 %2798
        %v2800 = vmul.f32 %v2796, %v1711
        %v2801 = vmul.f32 %v2799, %v1711
        %v2802 = vsub.f32 %v2788, %v2800
        %v2803 = vsub.f32 %v2789, %v2801
        %v2804 = vmul.f32 %v2802, %v2802
        %v2805 = vmul.f32 %v2803, %v2803
        %v2806 = vsel %vm800, %v2804, 0.0
        %2807 = vadd.xlane.f32.xlu0 %v2806
        %v2808 = vpop.xlane.xlu0 %2807
        %v2809 = vsel %vm800, %v2805, 0.0
        %2810 = vadd.xlane.f32.xlu0 %v2809
        %v2811 = vpop.xlane.xlu0 %2810
        %v2812 = vmul.f32 %v2808, %v1711
        %v2813 = vmul.f32 %v2811, %v1711
        %v2814 = vadd.f32 %v2812, 1e-05
        %v2815 = vadd.f32 %v2813, 1e-05
        %v2816 = vrsqrt.pop %v2814
        %v2817 = vmul.f32 %v2816, %v2814
        %v2818 = vmul.f32 %v2817, %v2816
        %v2819 = vmul.f32 0.5, %v2818
        %v2820 = vsub.f32 1.5, %v2819
        %v2821 = vmul.f32 %v2816, %v2820
        %vm2822 = vweird.f32 %v2814
        %vm2823 = vweird.f32 %v2816
        %vm2824 = vmor %vm2822, %vm2823
        %v2825 = vsel %vm2824, %v2816, %v2821
        %v2826 = vrsqrt.pop %v2815
        %v2827 = vmul.f32 %v2826, %v2815
        %v2828 = vmul.f32 %v2827, %v2826
        %v2829 = vmul.f32 0.5, %v2828
        %v2830 = vsub.f32 1.5, %v2829
        %v2831 = vmul.f32 %v2826, %v2830
        %vm2832 = vweird.f32 %v2815
        %vm2833 = vweird.f32 %v2826
        %vm2834 = vmor %vm2832, %vm2833
        %v2835 = vsel %vm2834, %v2826, %v2831
        %v2836 = vmul.f32 %v2802, %v2825
        %v2837 = vmul.f32 %v2803, %v2835
        %v2839 = vperm.slane %v2791, 0
        %v2841 = vmul.f32 %v2836, %v2839
        %v2842 = vmul.f32 %v2837, %v2839
        %v2844 = vperm.slane %v2793, 0
        %v2846 = vadd.f32 %v2841, %v2844
        %v2847 = vadd.f32 %v2842, %v2844
        %v2848 = vmul.f32 %v2846, %v783
        %v2849 = vmul.f32 %v2847, %v788
        %s2850 = scalar_lea.vmem %s18, 32
        %v2851 = vld [vmem:[%s2850] sm:$0xff]
        %v2852 = vld [vmem:[%s2850 + $0x8] sm:$0xff]
        %v2853 = vld [vmem:[%s2850 + $0x10] sm:$0xff]
        %v2854 = vld [vmem:[%s2850 + $0x18] sm:$0xff]
        %s2855 = scalar_lea.vmem %s19, 1
        %v2856 = vld [vmem:[%s2855] sm:$0x1]
        %v2858 = vperm.slane %v2856, 0
        %v2861 = vsel %vm800, %v2848, 0
        %v2864 = vsel %vm800, %v2849, 0
        %2866 = vmatpush.msra.mxu0 0.0
        %2867 = vmatpush.msra.mxu0 0.0
        %2868 = vmatpush.msra.mxu0 0.0
        %2869 = vmatpush.msra.mxu0 0.0
        %2870 = vmatpush.msra.mxu0 0.0
        %2871 = vmatpush.msra.mxu0 0.0
        %2872 = vmatpush.msra.mxu0 0.0
        %2873 = vmatpush.msra.mxu0 0.0
        %2874 = vmatpush.msra.mxu0 0.0
        %2875 = vmatpush.msra.mxu0 0.0
        %2876 = vmatpush.msra.mxu0 0.0
        %2877 = vmatpush.msra.mxu0 0.0
        %2878 = vmatpush.msra.mxu0 %v2854
        %2879 = vmatpush.msra.mxu0 %v2853
        %2880 = vmatpush.msra.mxu0 %v2852
        %2881 = vmatpush.msra.mxu0 %v2851
        %2882 = vmatmul.f32.gmra.mxu0 %v2861
        %v2883 = vpop.f32.mrf.mxu0
        %v2884 = vadd.f32 %v2858, %v2883
        %2885 = vmatmul.f32.gmra.mxu0 %v2864
        %v2886 = vpop.f32.mrf.mxu0
        %v2887 = vadd.f32 %v2858, %v2886
        %2888 = vdwg.mxu0
        %v2889 = vmax.f32 %v2884, 0.0
        %v2890 = vmax.f32 %v2887, 0.0
        %v2891 = vmul.f32 %v2889, %v783
        %v2892 = vmul.f32 %v2890, %v788
        %s2893 = scalar_lea.vmem %s20, 64
        %v2894 = vld [vmem:[%s2893] sm:$0xff]
        %v2895 = vld [vmem:[%s2893 + $0x8] sm:$0xff]
        %v2896 = vld [vmem:[%s2893 + $0x10] sm:$0xff]
        %v2897 = vld [vmem:[%s2893 + $0x18] sm:$0xff]
        %v2898 = vld [vmem:[%s2893 + $0x20] sm:$0xff]
        %v2899 = vld [vmem:[%s2893 + $0x28] sm:$0xff]
        %v2900 = vld [vmem:[%s2893 + $0x30] sm:$0xff]
        %v2901 = vld [vmem:[%s2893 + $0x38] sm:$0xff]
        %s2902 = scalar_lea.vmem %s21, 1
        %v2903 = vld [vmem:[%s2902] sm:$0x1]
        %v2905 = vperm.slane %v2903, 0
        %v2908 = vsel %vm1815, %v2891, 0
        %v2911 = vsel %vm1815, %v2892, 0
        %2913 = vmatpush.msra.mxu0 0.0
        %2914 = vmatpush.msra.mxu0 0.0
        %2915 = vmatpush.msra.mxu0 0.0
        %2916 = vmatpush.msra.mxu0 0.0
        %2917 = vmatpush.msra.mxu0 0.0
        %2918 = vmatpush.msra.mxu0 0.0
        %2919 = vmatpush.msra.mxu0 0.0
        %2920 = vmatpush.msra.mxu0 0.0
        %2921 = vmatpush.msra.mxu0 %v2901
        %2922 = vmatpush.msra.mxu0 %v2900
        %2923 = vmatpush.msra.mxu0 %v2899
        %2924 = vmatpush.msra.mxu0 %v2898
        %2925 = vmatpush.msra.mxu0 %v2897
        %2926 = vmatpush.msra.mxu0 %v2896
        %2927 = vmatpush.msra.mxu0 %v2895
        %2928 = vmatpush.msra.mxu0 %v2894
        %2929 = vmatmul.f32.gmra.mxu0 %v2908
        %v2930 = vpop.f32.mrf.mxu0
        %v2931 = vadd.f32 %v2905, %v2930
        %2932 = vmatmul.f32.gmra.mxu0 %v2911
        %v2933 = vpop.f32.mrf.mxu0
        %v2934 = vadd.f32 %v2905, %v2933
        %2935 = vdwg.mxu0
        %v2936 = vmul.f32 %v2931, %v783
        %v2937 = vmul.f32 %v2934, %v788
        %v2938 = vadd.f32 %v2846, %v2936
        %v2939 = vadd.f32 %v2847, %v2937
        %s2940 = scalar_lea.vmem %s22, 1
        %v2941 = vld [vmem:[%s2940] sm:$0x1]
        %s2942 = scalar_lea.vmem %s23, 1
        %v2943 = vld [vmem:[%s2942] sm:$0x1]
        %v2944 = vsel %vm800, %v2938, 0.0
        %2945 = vadd.xlane.f32.xlu0 %v2944
        %v2946 = vpop.xlane.xlu0 %2945
        %v2947 = vsel %vm800, %v2939, 0.0
        %2948 = vadd.xlane.f32.xlu0 %v2947
        %v2949 = vpop.xlane.xlu0 %2948
        %v2950 = vmul.f32 %v2946, %v1711
        %v2951 = vmul.f32 %v2949, %v1711
        %v2952 = vsub.f32 %v2938, %v2950
        %v2953 = vsub.f32 %v2939, %v2951
        %v2954 = vmul.f32 %v2952, %v2952
        %v2955 = vmul.f32 %v2953, %v2953
        %v2956 = vsel %vm800, %v2954, 0.0
        %2957 = vadd.xlane.f32.xlu0 %v2956
        %v2958 = vpop.xlane.xlu0 %2957
        %v2959 = vsel %vm800, %v2955, 0.0
        %2960 = vadd.xlane.f32.xlu0 %v2959
        %v2961 = vpop.xlane.xlu0 %2960
        %v2962 = vmul.f32 %v2958, %v1711
        %v2963 = vmul.f32 %v2961, %v1711
        %v2964 = vadd.f32 %v2962, 1e-05
        %v2965 = vadd.f32 %v2963, 1e-05
        %v2966 = vrsqrt.pop %v2964
        %v2967 = vmul.f32 %v2966, %v2964
        %v2968 = vmul.f32 %v2967, %v2966
        %v2969 = vmul.f32 0.5, %v2968
        %v2970 = vsub.f32 1.5, %v2969
        %v2971 = vmul.f32 %v2966, %v2970
        %vm2972 = vweird.f32 %v2964
        %vm2973 = vweird.f32 %v2966
        %vm2974 = vmor %vm2972, %vm2973
        %v2975 = vsel %vm2974, %v2966, %v2971
        %v2976 = vrsqrt.pop %v2965
        %v2977 = vmul.f32 %v2976, %v2965
        %v2978 = vmul.f32 %v2977, %v2976
        %v2979 = vmul.f32 0.5, %v2978
        %v2980 = vsub.f32 1.5, %v2979
        %v2981 = vmul.f32 %v2976, %v2980
        %vm2982 = vweird.f32 %v2965
        %vm2983 = vweird.f32 %v2976
        %vm2984 = vmor %vm2982, %vm2983
        %v2985 = vsel %vm2984, %v2976, %v2981
        %v2986 = vmul.f32 %v2952, %v2975
        %v2987 = vmul.f32 %v2953, %v2985
        %v2989 = vperm.slane %v2941, 0
        %v2991 = vmul.f32 %v2986, %v2989
        %v2992 = vmul.f32 %v2987, %v2989
        %v2994 = vperm.slane %v2943, 0
        %v2996 = vadd.f32 %v2991, %v2994
        %v2997 = vadd.f32 %v2992, %v2994
        %v2998 = vmul.f32 %v2996, %v783
        %v2999 = vmul.f32 %v2997, %v788
        %3000 = vst.msk [vmem:[%s760] sm:$0xff] %vm800, %v2998
        %3001 = vst.msk [vmem:[%s760 + $0x8] sm:$0xff] %vm800, %v2999
        %s3002 = sand.u32 %s565, 1
        %s3003 = scalar_lea.sflag [#allocation3], %s3002
        %s3004 = sand.u32 %s565, 1
        %s3005 = smul.addr %s3004, 16
        %s3006 = scalar_lea.vmem [#allocation2], %s3005
        // Predicated region
        $region117: #{tpu_custom_call.1} parent=115 // pred_check
          %p3007 = pneg %p575
        $region118: #{tpu_custom_call.1} parent=115 // pred_check_branch
          %3009 = sbr.rel (%p3007) target = $region120
        $region119: #{tpu_custom_call.1} parent=115 // pred_region
          %3011 = vsyncadd %s3003, 0
          %s3012 = smul.addr %s38, 2
          %s3013 = smul.addr %s3012, 8
          %s3014 = scalar_lea.hbm %s24, %s3013
          %s3015 = sshll.u32 %s3006, 4
          %s3016 = int_to_ptr.vmem [resolvable:$true] %s3015
          %s3017 = sshll.u32 %s3014, 4
          %s3018 = int_to_ptr.hbm [resolvable:$true] %s3017
          %3023 = dma.vmem_to_hbm [thread:$0]  %s3016, 256, %s3018, %s3003, 128, 128, 8
        $region120: #{tpu_custom_call.1} parent=115 // pred_fallthru
          _
      $region116: #{tpu_custom_call.1} parent=5 // pred_fallthru
        _
      %p3024 = scmp.le.s32.totalorder 2, %s33
      // Predicated region
      $region121: #{tpu_custom_call.1} parent=5 // pred_check
        %p3025 = pneg %p3024
      $region122: #{tpu_custom_call.1} parent=5 // pred_check_branch
        %3027 = sbr.rel (%p3025) target = $region124
      $region123: #{tpu_custom_call.1} parent=5 // pred_region
        %s3028 = ssub.s32 %s33, 2
        // Predicated region
        $region125: #{tpu_custom_call.1} parent=123 // pred_check
          %p3029 = pneg %p581
        $region126: #{tpu_custom_call.1} parent=123 // pred_check_branch
          %3031 = sbr.rel (%p3029) target = $region128
        $region127: #{tpu_custom_call.1} parent=123 // pred_region
          %s3032 = sand.u32 %s566, 1
          %s3033 = scalar_lea.sflag [#allocation3], %s3032
          %s3034 = sand.u32 %s566, 1
          %s3035 = smul.addr %s3034, 16
          %s3036 = scalar_lea.vmem [#allocation2], %s3035
          %3038 = dma.done %s3033, 256
        $region128: #{tpu_custom_call.1} parent=123 // pred_fallthru
          _
      $region124: #{tpu_custom_call.1} parent=5 // pred_fallthru
        _
    $region6: #{tpu_custom_call.1} parent=1 // loop_footer
      %s37 = sadd.s32 1, %s33
    $region7: #{tpu_custom_call.1} parent=1 // loop_footer_branch
      %32 = sbr.rel target = $region3
    $region8: #{tpu_custom_call.1} parent=1 // loop_exit
      _
    %3039 = vsyncpa [#allocation3], 1
    %s3040 = scalar_lea.sflag [#allocation3], 1
    %3041 = vsyncpa %s3040, 1

</llo_original>
